<compile_context>
chip_gen: v5e
topology: v5e:2x2
jax: 0.10.0
libtpu: 0.0.40
codegen_flags: <defaults>
</compile_context>

<pallas_src>
import math

import jax
import jax.numpy as jnp
from jax import lax
from jax.experimental import pallas as pl
from jax.experimental.pallas import tpu as pltpu


# ----------------------------- in-kernel helpers -----------------------------
def _gelu(x):
    # TODO(synk): torch.nn.GELU() default is the exact erf form; tanh approximation used here
    # (abs diff < ~1e-3) to stay on well-supported Mosaic EUP/VPU ops.
    c = 0.7978845608028654  # sqrt(2/pi)
    return 0.5 * x * (1.0 + jnp.tanh(c * (x + 0.044715 * x * x * x)))


def _masked_readout(x, x_m, m):
    """[global_max_pool | global_mean_pool] over live nodes. x:(N,F), x_m=x*m, m:(N,1) -> (1,2F)."""
    neg = jnp.float32(-1e30)  # safe: TopK always keeps >=1 live node per graph
    xmax = jnp.max(jnp.where(m > 0.0, x, neg), axis=0, keepdims=True)        # (1, F)
    inv_cnt = 1.0 / jnp.maximum(jnp.sum(m), 1.0)
    xmean = jnp.sum(x_m, axis=0, keepdims=True) * inv_cnt                    # (1, F)
    return jnp.concatenate([xmax, xmean], axis=-1)                           # (1, 2F)


def _sage_agg(x_ref, m_ref, adj_ref):
    """Mean aggregation over live neighbours; degree computed on the MXU (no XLU reduce)."""
    x = x_ref[0]                                   # (N, Fin)
    m = m_ref[0]                                   # (N, 1)  live-node mask (column)
    adj = adj_ref[0]                               # (N, N)  original adjacency (never masked in HBM)
    x_m = x * m                                    # dead sources -> 0 (masks adj columns implicitly)
    agg = jnp.dot(adj, x_m, preferred_element_type=jnp.float32)   # (N, Fin) sum of live messages
    deg = jnp.dot(adj, m, preferred_element_type=jnp.float32)     # (N, 1)   live in-degree (MXU)
    agg = agg * pl.reciprocal(jnp.maximum(deg, 1.0), approx=True) # mean; 0 msgs -> 0 (EUP divide)
    return x, x_m, m, agg


def _sage_tail(h, pc_ref, pr_ref, xout_ref, s_ref):
    """GELU, TopK score, y*score output and lane-dense score row."""
    y = _gelu(h)                                                             # (N, 64)
    z_col = jnp.dot(y, pc_ref[...], preferred_element_type=jnp.float32)      # (N, 1)
    xout_ref[0] = y * jnp.tanh(z_col)              # pooled features y*score (mask applied downstream)
    # lane-dense (1, N) score row for the host-side top-k threshold: A @ B^T contraction on the MXU
    z_row = lax.dot_general(pr_ref[...], y, (((1,), (1,)), ((), ())),
                            preferred_element_type=jnp.float32)              # (1, N)
    s_ref[0] = jnp.tanh(z_row)


# ------------------------------ layer kernels ---------------------------------
def sage_first_kernel(x_ref, m_ref, adj_ref, wl_ref, wr_ref, b_ref, pc_ref, pr_ref,
                      xout_ref, s_ref):
    x, x_m, m, agg = _sage_agg(x_ref, m_ref, adj_ref)
    # K is tiny here (Fin=6): keep two small matmuls; a width-6 lane concat would only add a
    # relayout for no MXU benefit. Layers 2-4 use the fused single-matmul form below.
    h = (jnp.dot(agg, wl_ref[...], preferred_element_type=jnp.float32)
         + jnp.dot(x_m, wr_ref[...], preferred_element_type=jnp.float32)
         + b_ref[...])
    _sage_tail(h, pc_ref, pr_ref, xout_ref, s_ref)


def sage_fused_kernel(x_ref, m_ref, adj_ref, w_ref, b_ref, pc_ref, pr_ref,
                      xout_ref, s_ref, ro_ref):
    x, x_m, m, agg = _sage_agg(x_ref, m_ref, adj_ref)
    # fused readout (gmp|gap) of the *previous* layer's pooled output, which is this kernel's input
    ro_ref[0] = _masked_readout(x, x_m, m)                                   # (1, 2*Fin)
    # single fused matmul: [agg | x] @ [Wl ; Wr] + b  (one MXU pass instead of two K=64 matmuls)
    xin = jnp.concatenate([agg, x_m], axis=-1)                               # (N, 2*Fin)
    h = jnp.dot(xin, w_ref[...], preferred_element_type=jnp.float32) + b_ref[...]
    _sage_tail(h, pc_ref, pr_ref, xout_ref, s_ref)


def sage_layer(x, mask, adj, wl, wr, b, p_norm, *, first):
    """One SAGEConv + GELU + TopK-score layer. Layers > 1 also emit the readout of their input."""
    B, N, Fin = x.shape
    Fout = wl.shape[1]
    m = mask.reshape(B, N, 1)
    p_col = p_norm.reshape(Fout, 1)
    p_row = p_norm.reshape(1, Fout)

    common_in = [
        pl.BlockSpec((1, N, Fin), lambda i: (i, 0, 0)),     # x (pooled output of previous layer)
        pl.BlockSpec((1, N, 1), lambda i: (i, 0, 0)),       # live-node mask (column)
        pl.BlockSpec((1, N, N), lambda i: (i, 0, 0)),       # original adjacency
    ]
    tail_in = [
        pl.BlockSpec((1, Fout), lambda i: (0, 0)),          # bias (lin_l bias; lin_r has none)
        pl.BlockSpec((Fout, 1), lambda i: (0, 0)),          # normalized p, column
        pl.BlockSpec((1, Fout), lambda i: (0, 0)),          # normalized p, row
    ]
    out_specs = [
        pl.BlockSpec((1, N, Fout), lambda i: (i, 0, 0)),    # y * score
        pl.BlockSpec((1, 1, N), lambda i: (i, 0, 0)),       # lane-dense score row
    ]
    out_shape = [
        jax.ShapeDtypeStruct((B, N, Fout), jnp.float32),
        jax.ShapeDtypeStruct((B, 1, N), jnp.float32),
    ]
    flops = 2 * B * N * (N * (Fin + 1) + 2 * Fin * Fout + 2 * Fout)
    trans = B * N * (Fout + 3)
    byts = 4 * (B * (N * Fin + N + N * N + N * Fout + N) + 2 * Fin * Fout + 3 * Fout)
    cparams = pltpu.CompilerParams(dimension_semantics=("parallel",))

    if first:
        in_specs = common_in + [
            pl.BlockSpec((Fin, Fout), lambda i: (0, 0)),    # Wl (neighbour/aggregate weight)
            pl.BlockSpec((Fin, Fout), lambda i: (0, 0)),    # Wr (root weight)
        ] + tail_in
        return pl.pallas_call(
            sage_first_kernel,
            grid=(B,),
            in_specs=in_specs,
            out_specs=out_specs,
            out_shape=out_shape,
            compiler_params=cparams,
            cost_estimate=pl.CostEstimate(flops=flops, transcendentals=trans, bytes_accessed=byts),
        )(x, m, adj, wl, wr, b, p_col, p_row)

    w_cat = jnp.concatenate([wl, wr], axis=0)               # [Wl ; Wr] -> single (2*Fin, Fout) weight
    in_specs = common_in + [pl.BlockSpec((2 * Fin, Fout), lambda i: (0, 0))] + tail_in
    out_specs = out_specs + [pl.BlockSpec((1, 1, 2 * Fin), lambda i: (i, 0, 0))]
    out_shape = out_shape + [jax.ShapeDtypeStruct((B, 1, 2 * Fin), jnp.float32)]
    byts += 4 * B * 2 * Fin
    return pl.pallas_call(
        sage_fused_kernel,
        grid=(B,),
        in_specs=in_specs,
        out_specs=out_specs,
        out_shape=out_shape,
        compiler_params=cparams,
        cost_estimate=pl.CostEstimate(flops=flops, transcendentals=trans, bytes_accessed=byts),
    )(x, m, adj, w_cat, b, p_col, p_row)


# ------------------------- head kernel (readout4 + sum + MLP) ------------------
def head_kernel(x_ref, m_ref, r1_ref, r2_ref, r3_ref,
                w1_ref, b1_ref, w2_ref, b2_ref, w3_ref, b3_ref, o_ref):
    x = x_ref[0]                                   # (N, 64) pooled output of layer 4
    m = m_ref[0]                                   # (N, 1)  mask after pool4
    r4 = _masked_readout(x, x * m, m)              # (1, 128)
    xs = r1_ref[0] + r2_ref[0] + r3_ref[0] + r4    # (1, 128) sum of the four readouts
    h = _gelu(jnp.dot(xs, w1_ref[...], preferred_element_type=jnp.float32) + b1_ref[...])
    h = _gelu(jnp.dot(h, w2_ref[...], preferred_element_type=jnp.float32) + b2_ref[...])
    o_ref[0] = jnp.dot(h, w3_ref[...], preferred_element_type=jnp.float32) + b3_ref[...]


def head(x, mask, r1, r2, r3, w1, b1, w2, b2, w3, b3):
    B, N, F = x.shape
    C = w3.shape[1]
    m = mask.reshape(B, N, 1)
    flops = 2 * B * (N * F + 2 * F * 64 + 64 * 64 + 64 * C)
    out = pl.pallas_call(
        head_kernel,
        grid=(B,),
        in_specs=[
            pl.BlockSpec((1, N, F), lambda i: (i, 0, 0)),
            pl.BlockSpec((1, N, 1), lambda i: (i, 0, 0)),
            pl.BlockSpec((1, 1, 2 * F), lambda i: (i, 0, 0)),
            pl.BlockSpec((1, 1, 2 * F), lambda i: (i, 0, 0)),
            pl.BlockSpec((1, 1, 2 * F), lambda i: (i, 0, 0)),
            pl.BlockSpec((2 * F, 64), lambda i: (0, 0)),
            pl.BlockSpec((1, 64), lambda i: (0, 0)),
            pl.BlockSpec((64, 64), lambda i: (0, 0)),
            pl.BlockSpec((1, 64), lambda i: (0, 0)),
            pl.BlockSpec((64, C), lambda i: (0, 0)),
            pl.BlockSpec((1, C), lambda i: (0, 0)),
        ],
        out_specs=pl.BlockSpec((1, 1, C), lambda i: (i, 0, 0)),
        out_shape=jax.ShapeDtypeStruct((B, 1, C), jnp.float32),
        compiler_params=pltpu.CompilerParams(dimension_semantics=("parallel",)),
        cost_estimate=pl.CostEstimate(
            flops=flops, transcendentals=B * 130,
            bytes_accessed=4 * (B * (N * F + N + 6 * F + C)
                                + 2 * F * 64 + 64 * 64 + 64 * C + 64 + 64 + C)),
    )(x, m, r1, r2, r3, w1, b1, w2, b2, w3, b3)
    return out[:, 0, :]


# --------------------------- TopK selection (JAX glue) -------------------------
def topk_refine_mask(scores, mask, n_live, ratio=0.8):
    """Keep the ceil(ratio*n_live) highest-scoring live nodes. scores, mask: (B, N)."""
    # TODO(synk): top-k node selection (sort) has no clean Pallas TPU primitive; done in plain JAX.
    k = int(math.ceil(ratio * n_live))
    s_m = jnp.where(mask > 0.0, scores, -jnp.inf)
    kth = lax.top_k(s_m, k)[0][:, k - 1]                    # (B,) k-th largest live score
    # scatter-free mask update (threshold compare); exact top-k barring exact score ties
    new_mask = jnp.where((s_m >= kth[:, None]) & (mask > 0.0), 1.0, 0.0).astype(jnp.float32)
    return new_mask, k


# ------------------------------- full forward ----------------------------------
def recognizer_sage_forward(params, x_nodes, fields, adj):
    B, N, _ = x_nodes.shape
    x = jnp.concatenate([x_nodes[..., :3], fields], axis=-1)       # (B, N, planes[0])
    mask = jnp.ones((B, N), jnp.float32)
    n_live = N
    readouts = []
    for i in range(1, 5):
        p = params[f"pool{i}_p"]
        p = p / jnp.sqrt(jnp.sum(p * p))
        outs = sage_layer(x, mask, adj,
                          params[f"conv{i}_wl"], params[f"conv{i}_wr"], params[f"conv{i}_bl"],
                          p, first=(i == 1))
        if i == 1:
            x, s = outs
        else:
            x, s, ro = outs
            readouts.append(ro)                                    # readout of layer i-1
        mask, n_live = topk_refine_mask(s[:, 0, :], mask, n_live)
    return head(x, mask, readouts[0], readouts[1], readouts[2],
                params["lin1_w"], params["lin1_b"],
                params["lin2_w"], params["lin2_b"],
                params["lin3_w"], params["lin3_b"])


# ------------------------------- parameter init --------------------------------
def init_params(key, planes):
    keys = jax.random.split(key, 32)
    dims = [planes[0], 64, 64, 64]
    p = {}
    ki = 0
    for i in range(1, 5):
        p[f"conv{i}_wl"] = 0.1 * jax.random.normal(keys[ki], (dims[i - 1], 64), jnp.float32); ki += 1
        p[f"conv{i}_bl"] = 0.01 * jax.random.normal(keys[ki], (1, 64), jnp.float32); ki += 1
        p[f"conv{i}_wr"] = 0.1 * jax.random.normal(keys[ki], (dims[i - 1], 64), jnp.float32); ki += 1
        p[f"pool{i}_p"] = jax.random.normal(keys[ki], (64,), jnp.float32); ki += 1
    p["lin1_w"] = 0.1 * jax.random.normal(keys[ki], (128, 64), jnp.float32); ki += 1
    p["lin1_b"] = 0.01 * jax.random.normal(keys[ki], (1, 64), jnp.float32); ki += 1
    p["lin2_w"] = 0.1 * jax.random.normal(keys[ki], (64, 64), jnp.float32); ki += 1
    p["lin2_b"] = 0.01 * jax.random.normal(keys[ki], (1, 64), jnp.float32); ki += 1
    p["lin3_w"] = 0.1 * jax.random.normal(keys[ki], (64, planes[-1]), jnp.float32); ki += 1
    p["lin3_b"] = 0.01 * jax.random.normal(keys[ki], (1, planes[-1]), jnp.float32); ki += 1
    return p


if __name__ == "__main__":
    planes = [6, 3]          # node features after cat(x[:, :3], fields) = 3 + 3; 3 output classes
    B, N = 2, 32             # 2 graphs, 32 nodes each

    key = jax.random.PRNGKey(0)
    k_par, k_x, k_f, k_a = jax.random.split(key, 4)
    params = init_params(k_par, planes)

    x_nodes = jax.random.normal(k_x, (B, N, 5), jnp.float32)       # data.x (only first 3 cols used)
    fields = jax.random.normal(k_f, (B, N, 3), jnp.float32)        # extra fields -> 6 input feats
    adj = (jax.random.uniform(k_a, (B, N, N)) < 0.2).astype(jnp.float32)   # dense edge_index

    fwd = jax.jit(recognizer_sage_forward)
    out = fwd(params, x_nodes, fields, adj)
    out = jax.block_until_ready(out)
    assert out.shape == (B, planes[-1])
    print("KERNEL_OK")
</pallas_src>

<mosaic_0001>
module attributes {stable_mosaic.version = 11 : i64} {
  func.func @sage_first_kernel(%arg0: i32, %arg1: memref<1x32x6xf32, #tpu.memory_space<vmem>>, %arg2: memref<1x32x1xf32, #tpu.memory_space<vmem>>, %arg3: memref<1x32x32xf32, #tpu.memory_space<vmem>>, %arg4: memref<6x64xf32, #tpu.memory_space<vmem>>, %arg5: memref<6x64xf32, #tpu.memory_space<vmem>>, %arg6: memref<1x64xf32, #tpu.memory_space<vmem>>, %arg7: memref<64x1xf32, #tpu.memory_space<vmem>>, %arg8: memref<1x64xf32, #tpu.memory_space<vmem>>, %arg9: memref<1x32x64xf32, #tpu.memory_space<vmem>>, %arg10: memref<1x1x32xf32, #tpu.memory_space<vmem>>) attributes {dimension_semantics = [#tpu.dimension_semantics<parallel>], iteration_bounds = array<i64: 2>, scalar_prefetch = 0 : i64, scratch_operands = 0 : i64, tpu.core_type = #tpu.core_type<tc>, window_params = [{transform_indices = @transform_0, window_bounds = array<i64: 1, 32, 6>}, {transform_indices = @transform_1, window_bounds = array<i64: 1, 32, 1>}, {transform_indices = @transform_2, window_bounds = array<i64: 1, 32, 32>}, {pipeline_mode = #tpu.pipeline_mode<synchronous>, transform_indices = @transform_3, window_bounds = array<i64: 6, 64>}, {pipeline_mode = #tpu.pipeline_mode<synchronous>, transform_indices = @transform_4, window_bounds = array<i64: 6, 64>}, {pipeline_mode = #tpu.pipeline_mode<synchronous>, transform_indices = @transform_5, window_bounds = array<i64: 1, 64>}, {pipeline_mode = #tpu.pipeline_mode<synchronous>, transform_indices = @transform_6, window_bounds = array<i64: 64, 1>}, {pipeline_mode = #tpu.pipeline_mode<synchronous>, transform_indices = @transform_7, window_bounds = array<i64: 1, 64>}, {transform_indices = @transform_8, window_bounds = array<i64: 1, 32, 64>}, {transform_indices = @transform_9, window_bounds = array<i64: 1, 1, 32>}]} {
    %c0 = arith.constant 0 : index
    %c0_0 = arith.constant 0 : index
    %c0_1 = arith.constant 0 : index
    %0 = vector.load %arg1[%c0, %c0_0, %c0_1] : memref<1x32x6xf32, #tpu.memory_space<vmem>>, vector<1x32x6xf32>
    %1 = vector.shape_cast %0 : vector<1x32x6xf32> to vector<32x6xf32>
    %c0_2 = arith.constant 0 : index
    %c0_3 = arith.constant 0 : index
    %c0_4 = arith.constant 0 : index
    %2 = vector.load %arg2[%c0_2, %c0_3, %c0_4] : memref<1x32x1xf32, #tpu.memory_space<vmem>>, vector<1x32x1xf32>
    %3 = vector.shape_cast %2 : vector<1x32x1xf32> to vector<32x1xf32>
    %c0_5 = arith.constant 0 : index
    %c0_6 = arith.constant 0 : index
    %c0_7 = arith.constant 0 : index
    %4 = vector.load %arg3[%c0_5, %c0_6, %c0_7] : memref<1x32x32xf32, #tpu.memory_space<vmem>>, vector<1x32x32xf32>
    %5 = vector.shape_cast %4 : vector<1x32x32xf32> to vector<32x32xf32>
    %6 = vector.broadcast %3 : vector<32x1xf32> to vector<32x6xf32>
    %7 = arith.mulf %1, %6 : vector<32x6xf32>
    %cst = arith.constant dense<0.000000e+00> : vector<32x6xf32>
    %8 = tpu.matmul %5, %7, %cst {dimension_numbers = #tpu.dot_dimension_numbers<[1], [0], [0], [1], [0, 0, 1, 1], [], []>} : vector<32x32xf32>, vector<32x6xf32>, vector<32x6xf32> -> vector<32x6xf32>
    %cst_8 = arith.constant dense<0.000000e+00> : vector<32x1xf32>
    %9 = tpu.matmul %5, %3, %cst_8 {dimension_numbers = #tpu.dot_dimension_numbers<[1], [0], [0], [1], [0, 0, 1, 1], [], []>} : vector<32x32xf32>, vector<32x1xf32>, vector<32x1xf32> -> vector<32x1xf32>
    %cst_9 = arith.constant 1.000000e+00 : f32
    %10 = vector.broadcast %cst_9 : f32 to vector<32x1xf32>
    %11 = arith.maximumf %9, %10 : vector<32x1xf32>
    %12 = tpu.reciprocal %11 {approx = true} : vector<32x1xf32> -> vector<32x1xf32>
    %13 = vector.broadcast %12 : vector<32x1xf32> to vector<32x6xf32>
    %14 = arith.mulf %8, %13 : vector<32x6xf32>
    %c0_10 = arith.constant 0 : index
    %c0_11 = arith.constant 0 : index
    %15 = vector.load %arg4[%c0_10, %c0_11] : memref<6x64xf32, #tpu.memory_space<vmem>>, vector<6x64xf32>
    %cst_12 = arith.constant dense<0.000000e+00> : vector<32x64xf32>
    %16 = tpu.matmul %14, %15, %cst_12 {dimension_numbers = #tpu.dot_dimension_numbers<[1], [0], [0], [1], [0, 0, 1, 1], [], []>} : vector<32x6xf32>, vector<6x64xf32>, vector<32x64xf32> -> vector<32x64xf32>
    %c0_13 = arith.constant 0 : index
    %c0_14 = arith.constant 0 : index
    %17 = vector.load %arg5[%c0_13, %c0_14] : memref<6x64xf32, #tpu.memory_space<vmem>>, vector<6x64xf32>
    %cst_15 = arith.constant dense<0.000000e+00> : vector<32x64xf32>
    %18 = tpu.matmul %7, %17, %cst_15 {dimension_numbers = #tpu.dot_dimension_numbers<[1], [0], [0], [1], [0, 0, 1, 1], [], []>} : vector<32x6xf32>, vector<6x64xf32>, vector<32x64xf32> -> vector<32x64xf32>
    %19 = arith.addf %16, %18 : vector<32x64xf32>
    %c0_16 = arith.constant 0 : index
    %c0_17 = arith.constant 0 : index
    %20 = vector.load %arg6[%c0_16, %c0_17] : memref<1x64xf32, #tpu.memory_space<vmem>>, vector<1x64xf32>
    %21 = vector.broadcast %20 : vector<1x64xf32> to vector<32x64xf32>
    %22 = arith.addf %19, %21 : vector<32x64xf32>
    %cst_18 = arith.constant 5.000000e-01 : f32
    %23 = vector.broadcast %cst_18 : f32 to vector<32x64xf32>
    %24 = arith.mulf %23, %22 : vector<32x64xf32>
    %cst_19 = arith.constant 4.471500e-02 : f32
    %25 = vector.broadcast %cst_19 : f32 to vector<32x64xf32>
    %26 = arith.mulf %25, %22 : vector<32x64xf32>
    %27 = arith.mulf %26, %22 : vector<32x64xf32>
    %28 = arith.mulf %27, %22 : vector<32x64xf32>
    %29 = arith.addf %22, %28 : vector<32x64xf32>
    %cst_20 = arith.constant 0.797884583 : f32
    %30 = vector.broadcast %cst_20 : f32 to vector<32x64xf32>
    %31 = arith.mulf %30, %29 : vector<32x64xf32>
    %32 = math.tanh %31 : vector<32x64xf32>
    %cst_21 = arith.constant 1.000000e+00 : f32
    %33 = vector.broadcast %cst_21 : f32 to vector<32x64xf32>
    %34 = arith.addf %33, %32 : vector<32x64xf32>
    %35 = arith.mulf %24, %34 : vector<32x64xf32>
    %c0_22 = arith.constant 0 : index
    %c0_23 = arith.constant 0 : index
    %36 = vector.load %arg7[%c0_22, %c0_23] : memref<64x1xf32, #tpu.memory_space<vmem>>, vector<64x1xf32>
    %cst_24 = arith.constant dense<0.000000e+00> : vector<32x1xf32>
    %37 = tpu.matmul %35, %36, %cst_24 {dimension_numbers = #tpu.dot_dimension_numbers<[1], [0], [0], [1], [0, 0, 1, 1], [], []>} : vector<32x64xf32>, vector<64x1xf32>, vector<32x1xf32> -> vector<32x1xf32>
    %38 = math.tanh %37 : vector<32x1xf32>
    %39 = vector.broadcast %38 : vector<32x1xf32> to vector<32x64xf32>
    %40 = arith.mulf %35, %39 : vector<32x64xf32>
    %c0_25 = arith.constant 0 : index
    %c0_26 = arith.constant 0 : index
    %c0_27 = arith.constant 0 : index
    %41 = vector.load %arg9[%c0_25, %c0_26, %c0_27] : memref<1x32x64xf32, #tpu.memory_space<vmem>>, vector<1x32x64xf32>
    %42 = vector.shape_cast %41 : vector<1x32x64xf32> to vector<32x64xf32>
    %43 = vector.shape_cast %40 : vector<32x64xf32> to vector<1x32x64xf32>
    tpu.vector_store %arg9[%c0_25, %c0_26, %c0_27], %43 {strides = array<i32>} : memref<1x32x64xf32, #tpu.memory_space<vmem>>, vector<1x32x64xf32>,
    %c0_28 = arith.constant 0 : index
    %c0_29 = arith.constant 0 : index
    %44 = vector.load %arg8[%c0_28, %c0_29] : memref<1x64xf32, #tpu.memory_space<vmem>>, vector<1x64xf32>
    %cst_30 = arith.constant dense<0.000000e+00> : vector<1x32xf32>
    %45 = tpu.matmul %44, %35, %cst_30 {dimension_numbers = #tpu.dot_dimension_numbers<[1], [1], [0], [0], [0, 0, 1, 0], [], []>} : vector<1x64xf32>, vector<32x64xf32>, vector<1x32xf32> -> vector<1x32xf32>
    %46 = math.tanh %45 : vector<1x32xf32>
    %c0_31 = arith.constant 0 : index
    %c0_32 = arith.constant 0 : index
    %c0_33 = arith.constant 0 : index
    %47 = vector.load %arg10[%c0_31, %c0_32, %c0_33] : memref<1x1x32xf32, #tpu.memory_space<vmem>>, vector<1x1x32xf32>
    %48 = vector.shape_cast %47 : vector<1x1x32xf32> to vector<1x32xf32>
    %49 = vector.shape_cast %46 : vector<1x32xf32> to vector<1x1x32xf32>
    tpu.vector_store %arg10[%c0_31, %c0_32, %c0_33], %49 {strides = array<i32>} : memref<1x1x32xf32, #tpu.memory_space<vmem>>, vector<1x1x32xf32>,
    return
  }
  func.func @transform_0(%arg0: i32) -> (i32, i32, i32) {
    %c0_i32 = arith.constant 0 : i32
    %c0_i32_0 = arith.constant 0 : i32
    %c0_i32_1 = arith.constant 0 : i32
    return %arg0, %c0_i32, %c0_i32_0 : i32, i32, i32
  }
  func.func @transform_1(%arg0: i32) -> (i32, i32, i32) {
    %c0_i32 = arith.constant 0 : i32
    %c0_i32_0 = arith.constant 0 : i32
    %c0_i32_1 = arith.constant 0 : i32
    return %arg0, %c0_i32, %c0_i32_0 : i32, i32, i32
  }
  func.func @transform_2(%arg0: i32) -> (i32, i32, i32) {
    %c0_i32 = arith.constant 0 : i32
    %c0_i32_0 = arith.constant 0 : i32
    %c0_i32_1 = arith.constant 0 : i32
    return %arg0, %c0_i32, %c0_i32_0 : i32, i32, i32
  }
  func.func @transform_3(%arg0: i32) -> (i32, i32) {
    %c0_i32 = arith.constant 0 : i32
    %c0_i32_0 = arith.constant 0 : i32
    %c0_i32_1 = arith.constant 0 : i32
    return %c0_i32, %c0_i32_0 : i32, i32
  }
  func.func @transform_4(%arg0: i32) -> (i32, i32) {
    %c0_i32 = arith.constant 0 : i32
    %c0_i32_0 = arith.constant 0 : i32
    %c0_i32_1 = arith.constant 0 : i32
    return %c0_i32, %c0_i32_0 : i32, i32
  }
  func.func @transform_5(%arg0: i32) -> (i32, i32) {
    %c0_i32 = arith.constant 0 : i32
    %c0_i32_0 = arith.constant 0 : i32
    %c0_i32_1 = arith.constant 0 : i32
    return %c0_i32, %c0_i32_0 : i32, i32
  }
  func.func @transform_6(%arg0: i32) -> (i32, i32) {
    %c0_i32 = arith.constant 0 : i32
    %c0_i32_0 = arith.constant 0 : i32
    %c0_i32_1 = arith.constant 0 : i32
    return %c0_i32, %c0_i32_0 : i32, i32
  }
  func.func @transform_7(%arg0: i32) -> (i32, i32) {
    %c0_i32 = arith.constant 0 : i32
    %c0_i32_0 = arith.constant 0 : i32
    %c0_i32_1 = arith.constant 0 : i32
    return %c0_i32, %c0_i32_0 : i32, i32
  }
  func.func @transform_8(%arg0: i32) -> (i32, i32, i32) {
    %c0_i32 = arith.constant 0 : i32
    %c0_i32_0 = arith.constant 0 : i32
    %c0_i32_1 = arith.constant 0 : i32
    return %arg0, %c0_i32, %c0_i32_0 : i32, i32, i32
  }
  func.func @transform_9(%arg0: i32) -> (i32, i32, i32) {
    %c0_i32 = arith.constant 0 : i32
    %c0_i32_0 = arith.constant 0 : i32
    %c0_i32_1 = arith.constant 0 : i32
    return %arg0, %c0_i32, %c0_i32_0 : i32, i32, i32
  }
}

module attributes {stable_mosaic.version = 11 : i64} {
  func.func @sage_fused_kernel(%arg0: i32, %arg1: memref<1x32x64xf32, #tpu.memory_space<vmem>>, %arg2: memref<1x32x1xf32, #tpu.memory_space<vmem>>, %arg3: memref<1x32x32xf32, #tpu.memory_space<vmem>>, %arg4: memref<128x64xf32, #tpu.memory_space<vmem>>, %arg5: memref<1x64xf32, #tpu.memory_space<vmem>>, %arg6: memref<64x1xf32, #tpu.memory_space<vmem>>, %arg7: memref<1x64xf32, #tpu.memory_space<vmem>>, %arg8: memref<1x32x64xf32, #tpu.memory_space<vmem>>, %arg9: memref<1x1x32xf32, #tpu.memory_space<vmem>>, %arg10: memref<1x1x128xf32, #tpu.memory_space<vmem>>) attributes {dimension_semantics = [#tpu.dimension_semantics<parallel>], iteration_bounds = array<i64: 2>, scalar_prefetch = 0 : i64, scratch_operands = 0 : i64, tpu.core_type = #tpu.core_type<tc>, window_params = [{transform_indices = @transform_0, window_bounds = array<i64: 1, 32, 64>}, {transform_indices = @transform_1, window_bounds = array<i64: 1, 32, 1>}, {transform_indices = @transform_2, window_bounds = array<i64: 1, 32, 32>}, {pipeline_mode = #tpu.pipeline_mode<synchronous>, transform_indices = @transform_3, window_bounds = array<i64: 128, 64>}, {pipeline_mode = #tpu.pipeline_mode<synchronous>, transform_indices = @transform_4, window_bounds = array<i64: 1, 64>}, {pipeline_mode = #tpu.pipeline_mode<synchronous>, transform_indices = @transform_5, window_bounds = array<i64: 64, 1>}, {pipeline_mode = #tpu.pipeline_mode<synchronous>, transform_indices = @transform_6, window_bounds = array<i64: 1, 64>}, {transform_indices = @transform_7, window_bounds = array<i64: 1, 32, 64>}, {transform_indices = @transform_8, window_bounds = array<i64: 1, 1, 32>}, {transform_indices = @transform_9, window_bounds = array<i64: 1, 1, 128>}]} {
    %c0 = arith.constant 0 : index
    %c0_0 = arith.constant 0 : index
    %c0_1 = arith.constant 0 : index
    %0 = vector.load %arg1[%c0, %c0_0, %c0_1] : memref<1x32x64xf32, #tpu.memory_space<vmem>>, vector<1x32x64xf32>
    %1 = vector.shape_cast %0 : vector<1x32x64xf32> to vector<32x64xf32>
    %c0_2 = arith.constant 0 : index
    %c0_3 = arith.constant 0 : index
    %c0_4 = arith.constant 0 : index
    %2 = vector.load %arg2[%c0_2, %c0_3, %c0_4] : memref<1x32x1xf32, #tpu.memory_space<vmem>>, vector<1x32x1xf32>
    %3 = vector.shape_cast %2 : vector<1x32x1xf32> to vector<32x1xf32>
    %c0_5 = arith.constant 0 : index
    %c0_6 = arith.constant 0 : index
    %c0_7 = arith.constant 0 : index
    %4 = vector.load %arg3[%c0_5, %c0_6, %c0_7] : memref<1x32x32xf32, #tpu.memory_space<vmem>>, vector<1x32x32xf32>
    %5 = vector.shape_cast %4 : vector<1x32x32xf32> to vector<32x32xf32>
    %6 = vector.broadcast %3 : vector<32x1xf32> to vector<32x64xf32>
    %7 = arith.mulf %1, %6 : vector<32x64xf32>
    %cst = arith.constant dense<0.000000e+00> : vector<32x64xf32>
    %8 = tpu.matmul %5, %7, %cst {dimension_numbers = #tpu.dot_dimension_numbers<[1], [0], [0], [1], [0, 0, 1, 1], [], []>} : vector<32x32xf32>, vector<32x64xf32>, vector<32x64xf32> -> vector<32x64xf32>
    %cst_8 = arith.constant dense<0.000000e+00> : vector<32x1xf32>
    %9 = tpu.matmul %5, %3, %cst_8 {dimension_numbers = #tpu.dot_dimension_numbers<[1], [0], [0], [1], [0, 0, 1, 1], [], []>} : vector<32x32xf32>, vector<32x1xf32>, vector<32x1xf32> -> vector<32x1xf32>
    %cst_9 = arith.constant 1.000000e+00 : f32
    %10 = vector.broadcast %cst_9 : f32 to vector<32x1xf32>
    %11 = arith.maximumf %9, %10 : vector<32x1xf32>
    %12 = tpu.reciprocal %11 {approx = true} : vector<32x1xf32> -> vector<32x1xf32>
    %13 = vector.broadcast %12 : vector<32x1xf32> to vector<32x64xf32>
    %14 = arith.mulf %8, %13 : vector<32x64xf32>
    %cst_10 = arith.constant 0.000000e+00 : f32
    %15 = vector.broadcast %cst_10 : f32 to vector<32x1xf32>
    %16 = arith.cmpf ogt, %3, %15 : vector<32x1xf32>
    %cst_11 = arith.constant -1.000000e+30 : f32
    %17 = vector.shape_cast %16 : vector<32x1xi1> to vector<32x1xi1>
    %18 = vector.broadcast %17 : vector<32x1xi1> to vector<32x64xi1>
    %19 = vector.broadcast %cst_11 : f32 to vector<32x64xf32>
    %20 = arith.select %18, %1, %19 : vector<32x64xi1>, vector<32x64xf32>
    %cst_12 = arith.constant dense<0xFF800000> : vector<64xf32>
    %21 = vector.multi_reduction <maximumf>, %20, %cst_12 [0] : vector<32x64xf32> to vector<64xf32>
    %22 = vector.shape_cast %21 : vector<64xf32> to vector<1x64xf32>
    %23 = vector.shape_cast %3 : vector<32x1xf32> to vector<1x32x1xf32>
    %cst_13 = arith.constant dense<0.000000e+00> : vector<1xf32>
    %24 = vector.multi_reduction <add>, %23, %cst_13 [1, 2] : vector<1x32x1xf32> to vector<1xf32>
    %25 = vector.shape_cast %24 : vector<1xf32> to vector<1x1x1xf32>
    %26 = vector.extract %25[0, 0, 0] : f32 from vector<1x1x1xf32>
    %cst_14 = arith.constant 1.000000e+00 : f32
    %27 = arith.maximumf %26, %cst_14 : f32
    %cst_15 = arith.constant 1.000000e+00 : f32
    %28 = arith.divf %cst_15, %27 : f32
    %cst_16 = arith.constant dense<0.000000e+00> : vector<64xf32>
    %29 = vector.multi_reduction <add>, %7, %cst_16 [0] : vector<32x64xf32> to vector<64xf32>
    %30 = vector.shape_cast %29 : vector<64xf32> to vector<1x64xf32>
    %31 = vector.broadcast %28 : f32 to vector<1x64xf32>
    %32 = arith.mulf %30, %31 : vector<1x64xf32>
    %33 = tpu.concatenate %22, %32 in 1 : vector<1x64xf32>, vector<1x64xf32> -> vector<1x128xf32>
    %c0_17 = arith.constant 0 : index
    %c0_18 = arith.constant 0 : index
    %c0_19 = arith.constant 0 : index
    %34 = vector.load %arg10[%c0_17, %c0_18, %c0_19] : memref<1x1x128xf32, #tpu.memory_space<vmem>>, vector<1x1x128xf32>
    %35 = vector.shape_cast %34 : vector<1x1x128xf32> to vector<1x128xf32>
    %36 = vector.shape_cast %33 : vector<1x128xf32> to vector<1x1x128xf32>
    tpu.vector_store %arg10[%c0_17, %c0_18, %c0_19], %36 {strides = array<i32>} : memref<1x1x128xf32, #tpu.memory_space<vmem>>, vector<1x1x128xf32>,
    %37 = tpu.concatenate %14, %7 in 1 : vector<32x64xf32>, vector<32x64xf32> -> vector<32x128xf32>
    %c0_20 = arith.constant 0 : index
    %c0_21 = arith.constant 0 : index
    %38 = vector.load %arg4[%c0_20, %c0_21] : memref<128x64xf32, #tpu.memory_space<vmem>>, vector<128x64xf32>
    %cst_22 = arith.constant dense<0.000000e+00> : vector<32x64xf32>
    %39 = tpu.matmul %37, %38, %cst_22 {dimension_numbers = #tpu.dot_dimension_numbers<[1], [0], [0], [1], [0, 0, 1, 1], [], []>} : vector<32x128xf32>, vector<128x64xf32>, vector<32x64xf32> -> vector<32x64xf32>
    %c0_23 = arith.constant 0 : index
    %c0_24 = arith.constant 0 : index
    %40 = vector.load %arg5[%c0_23, %c0_24] : memref<1x64xf32, #tpu.memory_space<vmem>>, vector<1x64xf32>
    %41 = vector.broadcast %40 : vector<1x64xf32> to vector<32x64xf32>
    %42 = arith.addf %39, %41 : vector<32x64xf32>
    %cst_25 = arith.constant 5.000000e-01 : f32
    %43 = vector.broadcast %cst_25 : f32 to vector<32x64xf32>
    %44 = arith.mulf %43, %42 : vector<32x64xf32>
    %cst_26 = arith.constant 4.471500e-02 : f32
    %45 = vector.broadcast %cst_26 : f32 to vector<32x64xf32>
    %46 = arith.mulf %45, %42 : vector<32x64xf32>
    %47 = arith.mulf %46, %42 : vector<32x64xf32>
    %48 = arith.mulf %47, %42 : vector<32x64xf32>
    %49 = arith.addf %42, %48 : vector<32x64xf32>
    %cst_27 = arith.constant 0.797884583 : f32
    %50 = vector.broadcast %cst_27 : f32 to vector<32x64xf32>
    %51 = arith.mulf %50, %49 : vector<32x64xf32>
    %52 = math.tanh %51 : vector<32x64xf32>
    %cst_28 = arith.constant 1.000000e+00 : f32
    %53 = vector.broadcast %cst_28 : f32 to vector<32x64xf32>
    %54 = arith.addf %53, %52 : vector<32x64xf32>
    %55 = arith.mulf %44, %54 : vector<32x64xf32>
    %c0_29 = arith.constant 0 : index
    %c0_30 = arith.constant 0 : index
    %56 = vector.load %arg6[%c0_29, %c0_30] : memref<64x1xf32, #tpu.memory_space<vmem>>, vector<64x1xf32>
    %cst_31 = arith.constant dense<0.000000e+00> : vector<32x1xf32>
    %57 = tpu.matmul %55, %56, %cst_31 {dimension_numbers = #tpu.dot_dimension_numbers<[1], [0], [0], [1], [0, 0, 1, 1], [], []>} : vector<32x64xf32>, vector<64x1xf32>, vector<32x1xf32> -> vector<32x1xf32>
    %58 = math.tanh %57 : vector<32x1xf32>
    %59 = vector.broadcast %58 : vector<32x1xf32> to vector<32x64xf32>
    %60 = arith.mulf %55, %59 : vector<32x64xf32>
    %c0_32 = arith.constant 0 : index
    %c0_33 = arith.constant 0 : index
    %c0_34 = arith.constant 0 : index
    %61 = vector.load %arg8[%c0_32, %c0_33, %c0_34] : memref<1x32x64xf32, #tpu.memory_space<vmem>>, vector<1x32x64xf32>
    %62 = vector.shape_cast %61 : vector<1x32x64xf32> to vector<32x64xf32>
    %63 = vector.shape_cast %60 : vector<32x64xf32> to vector<1x32x64xf32>
    tpu.vector_store %arg8[%c0_32, %c0_33, %c0_34], %63 {strides = array<i32>} : memref<1x32x64xf32, #tpu.memory_space<vmem>>, vector<1x32x64xf32>,
    %c0_35 = arith.constant 0 : index
    %c0_36 = arith.constant 0 : index
    %64 = vector.load %arg7[%c0_35, %c0_36] : memref<1x64xf32, #tpu.memory_space<vmem>>, vector<1x64xf32>
    %cst_37 = arith.constant dense<0.000000e+00> : vector<1x32xf32>
    %65 = tpu.matmul %64, %55, %cst_37 {dimension_numbers = #tpu.dot_dimension_numbers<[1], [1], [0], [0], [0, 0, 1, 0], [], []>} : vector<1x64xf32>, vector<32x64xf32>, vector<1x32xf32> -> vector<1x32xf32>
    %66 = math.tanh %65 : vector<1x32xf32>
    %c0_38 = arith.constant 0 : index
    %c0_39 = arith.constant 0 : index
    %c0_40 = arith.constant 0 : index
    %67 = vector.load %arg9[%c0_38, %c0_39, %c0_40] : memref<1x1x32xf32, #tpu.memory_space<vmem>>, vector<1x1x32xf32>
    %68 = vector.shape_cast %67 : vector<1x1x32xf32> to vector<1x32xf32>
    %69 = vector.shape_cast %66 : vector<1x32xf32> to vector<1x1x32xf32>
    tpu.vector_store %arg9[%c0_38, %c0_39, %c0_40], %69 {strides = array<i32>} : memref<1x1x32xf32, #tpu.memory_space<vmem>>, vector<1x1x32xf32>,
    return
  }
  func.func @transform_0(%arg0: i32) -> (i32, i32, i32) {
    %c0_i32 = arith.constant 0 : i32
    %c0_i32_0 = arith.constant 0 : i32
    %c0_i32_1 = arith.constant 0 : i32
    return %arg0, %c0_i32, %c0_i32_0 : i32, i32, i32
  }
  func.func @transform_1(%arg0: i32) -> (i32, i32, i32) {
    %c0_i32 = arith.constant 0 : i32
    %c0_i32_0 = arith.constant 0 : i32
    %c0_i32_1 = arith.constant 0 : i32
    return %arg0, %c0_i32, %c0_i32_0 : i32, i32, i32
  }
  func.func @transform_2(%arg0: i32) -> (i32, i32, i32) {
    %c0_i32 = arith.constant 0 : i32
    %c0_i32_0 = arith.constant 0 : i32
    %c0_i32_1 = arith.constant 0 : i32
    return %arg0, %c0_i32, %c0_i32_0 : i32, i32, i32
  }
  func.func @transform_3(%arg0: i32) -> (i32, i32) {
    %c0_i32 = arith.constant 0 : i32
    %c0_i32_0 = arith.constant 0 : i32
    %c0_i32_1 = arith.constant 0 : i32
    return %c0_i32, %c0_i32_0 : i32, i32
  }
  func.func @transform_4(%arg0: i32) -> (i32, i32) {
    %c0_i32 = arith.constant 0 : i32
    %c0_i32_0 = arith.constant 0 : i32
    %c0_i32_1 = arith.constant 0 : i32
    return %c0_i32, %c0_i32_0 : i32, i32
  }
  func.func @transform_5(%arg0: i32) -> (i32, i32) {
    %c0_i32 = arith.constant 0 : i32
    %c0_i32_0 = arith.constant 0 : i32
    %c0_i32_1 = arith.constant 0 : i32
    return %c0_i32, %c0_i32_0 : i32, i32
  }
  func.func @transform_6(%arg0: i32) -> (i32, i32) {
    %c0_i32 = arith.constant 0 : i32
    %c0_i32_0 = arith.constant 0 : i32
    %c0_i32_1 = arith.constant 0 : i32
    return %c0_i32, %c0_i32_0 : i32, i32
  }
  func.func @transform_7(%arg0: i32) -> (i32, i32, i32) {
    %c0_i32 = arith.constant 0 : i32
    %c0_i32_0 = arith.constant 0 : i32
    %c0_i32_1 = arith.constant 0 : i32
    return %arg0, %c0_i32, %c0_i32_0 : i32, i32, i32
  }
  func.func @transform_8(%arg0: i32) -> (i32, i32, i32) {
    %c0_i32 = arith.constant 0 : i32
    %c0_i32_0 = arith.constant 0 : i32
    %c0_i32_1 = arith.constant 0 : i32
    return %arg0, %c0_i32, %c0_i32_0 : i32, i32, i32
  }
  func.func @transform_9(%arg0: i32) -> (i32, i32, i32) {
    %c0_i32 = arith.constant 0 : i32
    %c0_i32_0 = arith.constant 0 : i32
    %c0_i32_1 = arith.constant 0 : i32
    return %arg0, %c0_i32, %c0_i32_0 : i32, i32, i32
  }
}

module attributes {stable_mosaic.version = 11 : i64} {
  func.func @head_kernel(%arg0: i32, %arg1: memref<1x32x64xf32, #tpu.memory_space<vmem>>, %arg2: memref<1x32x1xf32, #tpu.memory_space<vmem>>, %arg3: memref<1x1x128xf32, #tpu.memory_space<vmem>>, %arg4: memref<1x1x128xf32, #tpu.memory_space<vmem>>, %arg5: memref<1x1x128xf32, #tpu.memory_space<vmem>>, %arg6: memref<128x64xf32, #tpu.memory_space<vmem>>, %arg7: memref<1x64xf32, #tpu.memory_space<vmem>>, %arg8: memref<64x64xf32, #tpu.memory_space<vmem>>, %arg9: memref<1x64xf32, #tpu.memory_space<vmem>>, %arg10: memref<64x3xf32, #tpu.memory_space<vmem>>, %arg11: memref<1x3xf32, #tpu.memory_space<vmem>>, %arg12: memref<1x1x3xf32, #tpu.memory_space<vmem>>) attributes {dimension_semantics = [#tpu.dimension_semantics<parallel>], iteration_bounds = array<i64: 2>, scalar_prefetch = 0 : i64, scratch_operands = 0 : i64, tpu.core_type = #tpu.core_type<tc>, window_params = [{transform_indices = @transform_0, window_bounds = array<i64: 1, 32, 64>}, {transform_indices = @transform_1, window_bounds = array<i64: 1, 32, 1>}, {transform_indices = @transform_2, window_bounds = array<i64: 1, 1, 128>}, {transform_indices = @transform_3, window_bounds = array<i64: 1, 1, 128>}, {transform_indices = @transform_4, window_bounds = array<i64: 1, 1, 128>}, {pipeline_mode = #tpu.pipeline_mode<synchronous>, transform_indices = @transform_5, window_bounds = array<i64: 128, 64>}, {pipeline_mode = #tpu.pipeline_mode<synchronous>, transform_indices = @transform_6, window_bounds = array<i64: 1, 64>}, {pipeline_mode = #tpu.pipeline_mode<synchronous>, transform_indices = @transform_7, window_bounds = array<i64: 64, 64>}, {pipeline_mode = #tpu.pipeline_mode<synchronous>, transform_indices = @transform_8, window_bounds = array<i64: 1, 64>}, {pipeline_mode = #tpu.pipeline_mode<synchronous>, transform_indices = @transform_9, window_bounds = array<i64: 64, 3>}, {pipeline_mode = #tpu.pipeline_mode<synchronous>, transform_indices = @transform_10, window_bounds = array<i64: 1, 3>}, {transform_indices = @transform_11, window_bounds = array<i64: 1, 1, 3>}]} {
    %c0 = arith.constant 0 : index
    %c0_0 = arith.constant 0 : index
    %c0_1 = arith.constant 0 : index
    %0 = vector.load %arg1[%c0, %c0_0, %c0_1] : memref<1x32x64xf32, #tpu.memory_space<vmem>>, vector<1x32x64xf32>
    %1 = vector.shape_cast %0 : vector<1x32x64xf32> to vector<32x64xf32>
    %c0_2 = arith.constant 0 : index
    %c0_3 = arith.constant 0 : index
    %c0_4 = arith.constant 0 : index
    %2 = vector.load %arg2[%c0_2, %c0_3, %c0_4] : memref<1x32x1xf32, #tpu.memory_space<vmem>>, vector<1x32x1xf32>
    %3 = vector.shape_cast %2 : vector<1x32x1xf32> to vector<32x1xf32>
    %4 = vector.broadcast %3 : vector<32x1xf32> to vector<32x64xf32>
    %5 = arith.mulf %1, %4 : vector<32x64xf32>
    %cst = arith.constant 0.000000e+00 : f32
    %6 = vector.broadcast %cst : f32 to vector<32x1xf32>
    %7 = arith.cmpf ogt, %3, %6 : vector<32x1xf32>
    %cst_5 = arith.constant -1.000000e+30 : f32
    %8 = vector.shape_cast %7 : vector<32x1xi1> to vector<32x1xi1>
    %9 = vector.broadcast %8 : vector<32x1xi1> to vector<32x64xi1>
    %10 = vector.broadcast %cst_5 : f32 to vector<32x64xf32>
    %11 = arith.select %9, %1, %10 : vector<32x64xi1>, vector<32x64xf32>
    %cst_6 = arith.constant dense<0xFF800000> : vector<64xf32>
    %12 = vector.multi_reduction <maximumf>, %11, %cst_6 [0] : vector<32x64xf32> to vector<64xf32>
    %13 = vector.shape_cast %12 : vector<64xf32> to vector<1x64xf32>
    %14 = vector.shape_cast %3 : vector<32x1xf32> to vector<1x32x1xf32>
    %cst_7 = arith.constant dense<0.000000e+00> : vector<1xf32>
    %15 = vector.multi_reduction <add>, %14, %cst_7 [1, 2] : vector<1x32x1xf32> to vector<1xf32>
    %16 = vector.shape_cast %15 : vector<1xf32> to vector<1x1x1xf32>
    %17 = vector.extract %16[0, 0, 0] : f32 from vector<1x1x1xf32>
    %cst_8 = arith.constant 1.000000e+00 : f32
    %18 = arith.maximumf %17, %cst_8 : f32
    %cst_9 = arith.constant 1.000000e+00 : f32
    %19 = arith.divf %cst_9, %18 : f32
    %cst_10 = arith.constant dense<0.000000e+00> : vector<64xf32>
    %20 = vector.multi_reduction <add>, %5, %cst_10 [0] : vector<32x64xf32> to vector<64xf32>
    %21 = vector.shape_cast %20 : vector<64xf32> to vector<1x64xf32>
    %22 = vector.broadcast %19 : f32 to vector<1x64xf32>
    %23 = arith.mulf %21, %22 : vector<1x64xf32>
    %24 = tpu.concatenate %13, %23 in 1 : vector<1x64xf32>, vector<1x64xf32> -> vector<1x128xf32>
    %c0_11 = arith.constant 0 : index
    %c0_12 = arith.constant 0 : index
    %c0_13 = arith.constant 0 : index
    %25 = vector.load %arg3[%c0_11, %c0_12, %c0_13] : memref<1x1x128xf32, #tpu.memory_space<vmem>>, vector<1x1x128xf32>
    %26 = vector.shape_cast %25 : vector<1x1x128xf32> to vector<1x128xf32>
    %c0_14 = arith.constant 0 : index
    %c0_15 = arith.constant 0 : index
    %c0_16 = arith.constant 0 : index
    %27 = vector.load %arg4[%c0_14, %c0_15, %c0_16] : memref<1x1x128xf32, #tpu.memory_space<vmem>>, vector<1x1x128xf32>
    %28 = vector.shape_cast %27 : vector<1x1x128xf32> to vector<1x128xf32>
    %29 = arith.addf %26, %28 : vector<1x128xf32>
    %c0_17 = arith.constant 0 : index
    %c0_18 = arith.constant 0 : index
    %c0_19 = arith.constant 0 : index
    %30 = vector.load %arg5[%c0_17, %c0_18, %c0_19] : memref<1x1x128xf32, #tpu.memory_space<vmem>>, vector<1x1x128xf32>
    %31 = vector.shape_cast %30 : vector<1x1x128xf32> to vector<1x128xf32>
    %32 = arith.addf %29, %31 : vector<1x128xf32>
    %33 = arith.addf %32, %24 : vector<1x128xf32>
    %c0_20 = arith.constant 0 : index
    %c0_21 = arith.constant 0 : index
    %34 = vector.load %arg6[%c0_20, %c0_21] : memref<128x64xf32, #tpu.memory_space<vmem>>, vector<128x64xf32>
    %cst_22 = arith.constant dense<0.000000e+00> : vector<1x64xf32>
    %35 = tpu.matmul %33, %34, %cst_22 {dimension_numbers = #tpu.dot_dimension_numbers<[1], [0], [0], [1], [0, 0, 1, 1], [], []>} : vector<1x128xf32>, vector<128x64xf32>, vector<1x64xf32> -> vector<1x64xf32>
    %c0_23 = arith.constant 0 : index
    %c0_24 = arith.constant 0 : index
    %36 = vector.load %arg7[%c0_23, %c0_24] : memref<1x64xf32, #tpu.memory_space<vmem>>, vector<1x64xf32>
    %37 = arith.addf %35, %36 : vector<1x64xf32>
    %cst_25 = arith.constant 5.000000e-01 : f32
    %38 = vector.broadcast %cst_25 : f32 to vector<1x64xf32>
    %39 = arith.mulf %38, %37 : vector<1x64xf32>
    %cst_26 = arith.constant 4.471500e-02 : f32
    %40 = vector.broadcast %cst_26 : f32 to vector<1x64xf32>
    %41 = arith.mulf %40, %37 : vector<1x64xf32>
    %42 = arith.mulf %41, %37 : vector<1x64xf32>
    %43 = arith.mulf %42, %37 : vector<1x64xf32>
    %44 = arith.addf %37, %43 : vector<1x64xf32>
    %cst_27 = arith.constant 0.797884583 : f32
    %45 = vector.broadcast %cst_27 : f32 to vector<1x64xf32>
    %46 = arith.mulf %45, %44 : vector<1x64xf32>
    %47 = math.tanh %46 : vector<1x64xf32>
    %cst_28 = arith.constant 1.000000e+00 : f32
    %48 = vector.broadcast %cst_28 : f32 to vector<1x64xf32>
    %49 = arith.addf %48, %47 : vector<1x64xf32>
    %50 = arith.mulf %39, %49 : vector<1x64xf32>
    %c0_29 = arith.constant 0 : index
    %c0_30 = arith.constant 0 : index
    %51 = vector.load %arg8[%c0_29, %c0_30] : memref<64x64xf32, #tpu.memory_space<vmem>>, vector<64x64xf32>
    %cst_31 = arith.constant dense<0.000000e+00> : vector<1x64xf32>
    %52 = tpu.matmul %50, %51, %cst_31 {dimension_numbers = #tpu.dot_dimension_numbers<[1], [0], [0], [1], [0, 0, 1, 1], [], []>} : vector<1x64xf32>, vector<64x64xf32>, vector<1x64xf32> -> vector<1x64xf32>
    %c0_32 = arith.constant 0 : index
    %c0_33 = arith.constant 0 : index
    %53 = vector.load %arg9[%c0_32, %c0_33] : memref<1x64xf32, #tpu.memory_space<vmem>>, vector<1x64xf32>
    %54 = arith.addf %52, %53 : vector<1x64xf32>
    %cst_34 = arith.constant 5.000000e-01 : f32
    %55 = vector.broadcast %cst_34 : f32 to vector<1x64xf32>
    %56 = arith.mulf %55, %54 : vector<1x64xf32>
    %cst_35 = arith.constant 4.471500e-02 : f32
    %57 = vector.broadcast %cst_35 : f32 to vector<1x64xf32>
    %58 = arith.mulf %57, %54 : vector<1x64xf32>
    %59 = arith.mulf %58, %54 : vector<1x64xf32>
    %60 = arith.mulf %59, %54 : vector<1x64xf32>
    %61 = arith.addf %54, %60 : vector<1x64xf32>
    %cst_36 = arith.constant 0.797884583 : f32
    %62 = vector.broadcast %cst_36 : f32 to vector<1x64xf32>
    %63 = arith.mulf %62, %61 : vector<1x64xf32>
    %64 = math.tanh %63 : vector<1x64xf32>
    %cst_37 = arith.constant 1.000000e+00 : f32
    %65 = vector.broadcast %cst_37 : f32 to vector<1x64xf32>
    %66 = arith.addf %65, %64 : vector<1x64xf32>
    %67 = arith.mulf %56, %66 : vector<1x64xf32>
    %c0_38 = arith.constant 0 : index
    %c0_39 = arith.constant 0 : index
    %68 = vector.load %arg10[%c0_38, %c0_39] : memref<64x3xf32, #tpu.memory_space<vmem>>, vector<64x3xf32>
    %cst_40 = arith.constant dense<0.000000e+00> : vector<1x3xf32>
    %69 = tpu.matmul %67, %68, %cst_40 {dimension_numbers = #tpu.dot_dimension_numbers<[1], [0], [0], [1], [0, 0, 1, 1], [], []>} : vector<1x64xf32>, vector<64x3xf32>, vector<1x3xf32> -> vector<1x3xf32>
    %c0_41 = arith.constant 0 : index
    %c0_42 = arith.constant 0 : index
    %70 = vector.load %arg11[%c0_41, %c0_42] : memref<1x3xf32, #tpu.memory_space<vmem>>, vector<1x3xf32>
    %71 = arith.addf %69, %70 : vector<1x3xf32>
    %c0_43 = arith.constant 0 : index
    %c0_44 = arith.constant 0 : index
    %c0_45 = arith.constant 0 : index
    %72 = vector.load %arg12[%c0_43, %c0_44, %c0_45] : memref<1x1x3xf32, #tpu.memory_space<vmem>>, vector<1x1x3xf32>
    %73 = vector.shape_cast %72 : vector<1x1x3xf32> to vector<1x3xf32>
    %74 = vector.shape_cast %71 : vector<1x3xf32> to vector<1x1x3xf32>
    tpu.vector_store %arg12[%c0_43, %c0_44, %c0_45], %74 {strides = array<i32>} : memref<1x1x3xf32, #tpu.memory_space<vmem>>, vector<1x1x3xf32>,
    return
  }
  func.func @transform_0(%arg0: i32) -> (i32, i32, i32) {
    %c0_i32 = arith.constant 0 : i32
    %c0_i32_0 = arith.constant 0 : i32
    %c0_i32_1 = arith.constant 0 : i32
    return %arg0, %c0_i32, %c0_i32_0 : i32, i32, i32
  }
  func.func @transform_1(%arg0: i32) -> (i32, i32, i32) {
    %c0_i32 = arith.constant 0 : i32
    %c0_i32_0 = arith.constant 0 : i32
    %c0_i32_1 = arith.constant 0 : i32
    return %arg0, %c0_i32, %c0_i32_0 : i32, i32, i32
  }
  func.func @transform_2(%arg0: i32) -> (i32, i32, i32) {
    %c0_i32 = arith.constant 0 : i32
    %c0_i32_0 = arith.constant 0 : i32
    %c0_i32_1 = arith.constant 0 : i32
    return %arg0, %c0_i32, %c0_i32_0 : i32, i32, i32
  }
  func.func @transform_3(%arg0: i32) -> (i32, i32, i32) {
    %c0_i32 = arith.constant 0 : i32
    %c0_i32_0 = arith.constant 0 : i32
    %c0_i32_1 = arith.constant 0 : i32
    return %arg0, %c0_i32, %c0_i32_0 : i32, i32, i32
  }
  func.func @transform_4(%arg0: i32) -> (i32, i32, i32) {
    %c0_i32 = arith.constant 0 : i32
    %c0_i32_0 = arith.constant 0 : i32
    %c0_i32_1 = arith.constant 0 : i32
    return %arg0, %c0_i32, %c0_i32_0 : i32, i32, i32
  }
  func.func @transform_5(%arg0: i32) -> (i32, i32) {
    %c0_i32 = arith.constant 0 : i32
    %c0_i32_0 = arith.constant 0 : i32
    %c0_i32_1 = arith.constant 0 : i32
    return %c0_i32, %c0_i32_0 : i32, i32
  }
  func.func @transform_6(%arg0: i32) -> (i32, i32) {
    %c0_i32 = arith.constant 0 : i32
    %c0_i32_0 = arith.constant 0 : i32
    %c0_i32_1 = arith.constant 0 : i32
    return %c0_i32, %c0_i32_0 : i32, i32
  }
  func.func @transform_7(%arg0: i32) -> (i32, i32) {
    %c0_i32 = arith.constant 0 : i32
    %c0_i32_0 = arith.constant 0 : i32
    %c0_i32_1 = arith.constant 0 : i32
    return %c0_i32, %c0_i32_0 : i32, i32
  }
  func.func @transform_8(%arg0: i32) -> (i32, i32) {
    %c0_i32 = arith.constant 0 : i32
    %c0_i32_0 = arith.constant 0 : i32
    %c0_i32_1 = arith.constant 0 : i32
    return %c0_i32, %c0_i32_0 : i32, i32
  }
  func.func @transform_9(%arg0: i32) -> (i32, i32) {
    %c0_i32 = arith.constant 0 : i32
    %c0_i32_0 = arith.constant 0 : i32
    %c0_i32_1 = arith.constant 0 : i32
    return %c0_i32, %c0_i32_0 : i32, i32
  }
  func.func @transform_10(%arg0: i32) -> (i32, i32) {
    %c0_i32 = arith.constant 0 : i32
    %c0_i32_0 = arith.constant 0 : i32
    %c0_i32_1 = arith.constant 0 : i32
    return %c0_i32, %c0_i32_0 : i32, i32
  }
  func.func @transform_11(%arg0: i32) -> (i32, i32, i32) {
    %c0_i32 = arith.constant 0 : i32
    %c0_i32_0 = arith.constant 0 : i32
    %c0_i32_1 = arith.constant 0 : i32
    return %arg0, %c0_i32, %c0_i32_0 : i32, i32, i32
  }
}

</mosaic_0001>

<llo_original>
// kernel: recognizer_sage_forward.6
$region0: #{recognizer_sage_forward.6}
  #allocation0 [shape = 'u32[]', space=smem, size = 0x4, offset = 0x4, fixed_abs, tag = 'smem constant byte address 0x4 - core index']
  #allocation1 [shape = 'u32[72,128]{1,0:T(1,128)}', space=vmem, size = 0x9000, scoped, tag = 'internal scratch']
  %s0 = inlined_call_operand.vmem [shape: f32[2,32,64], index: 0, kind: input, shape index: {}]
  %s1 = inlined_call_operand.vmem [shape: f32[2,32,1], index: 1, kind: input, shape index: {}]
  %s2 = inlined_call_operand.vmem [shape: f32[2,32,32], index: 2, kind: input, shape index: {}]
  %s3 = inlined_call_operand.vmem [shape: f32[128,64], index: 3, kind: input, shape index: {}]
  %s4 = inlined_call_operand.vmem [shape: f32[1,64], index: 4, kind: input, shape index: {}]
  %s5 = inlined_call_operand.vmem [shape: f32[64,1], index: 5, kind: input, shape index: {}]
  %s6 = inlined_call_operand.vmem [shape: f32[1,64], index: 6, kind: input, shape index: {}]
  %s7 = inlined_call_operand.vmem [shape: f32[2,32,64], index: 7, kind: output, shape index: {0}]
  %s8 = inlined_call_operand.vmem [shape: f32[2,1,32], index: 8, kind: output, shape index: {1}]
  %s9 = inlined_call_operand.vmem [shape: f32[2,1,128], index: 9, kind: output, shape index: {2}]
  %10 = xla_tuple %s7, %s8, %s9
  %s11 = sld [smem:[#allocation0]]
  $region77: #{recognizer_sage_forward.6} parent=0
    _
  %s13 = ssub.s32 1, %s11
  %s14 = scalar_select 0, %s13, %s11
  loop: start=0, step=1, limit=4
  $region2: #{recognizer_sage_forward.6} parent=0 // loop_pre_header
    _
  $region3: #{recognizer_sage_forward.6} parent=0 // loop_header
    %s16 = sphi 0, %s20
    %p17 = scmp.ge.s32.totalorder %s16, 4
    %s26 = sphi 0, %s28
    %s29 = sphi 0, %s26
    %s30 = sphi 0, %s29
    %s46 = sphi 0, %s30
    %s52 = sphi 0, %s54
    %s55 = sphi 0, %s52
    %s56 = sphi 0, %s55
    %s72 = sphi 0, %s56
    %s78 = sphi 0, %s80
    %s81 = sphi 0, %s78
    %s82 = sphi 0, %s81
    %s98 = sphi 0, %s82
    %s102 = sphi 0, %s102
    %s104 = sphi 0, %s102
    %s105 = sphi 0, %s104
    %s119 = sphi 0, %s105
    %s123 = sphi 0, %s123
    %s125 = sphi 0, %s123
    %s126 = sphi 0, %s125
    %s140 = sphi 0, %s126
    %s144 = sphi 0, %s144
    %s146 = sphi 0, %s144
    %s147 = sphi 0, %s146
    %s161 = sphi 0, %s147
    %s165 = sphi 0, %s165
    %s167 = sphi 0, %s165
    %s168 = sphi 0, %s167
    %s182 = sphi 0, %s168
    %s188 = sphi 0, %s190
    %s191 = sphi 0, %s188
    %s192 = sphi 0, %s191
    %s208 = sphi 0, %s192
    %s214 = sphi 0, %s216
    %s217 = sphi 0, %s214
    %s218 = sphi 0, %s217
    %s234 = sphi 0, %s218
    %s240 = sphi 0, %s242
    %s243 = sphi 0, %s240
    %s244 = sphi 0, %s243
    %s260 = sphi 0, %s244
  $region4: #{recognizer_sage_forward.6} parent=0 // loop_header_branch
    %19 = sbr.rel (%p17) target = $region8
  $region5: #{recognizer_sage_forward.6} parent=0 // loop_body
    %s21 = ssub.s32 %s16, 1
    %s22 = ssub.s32 %s16, 2
    %s23 = sadd.s32 %s16, 1
    %s24 = ssub.s32 %s16, %s23
    %p25 = scmp.eq.s32.totalorder %s24, 0
    %s27 = sadd.s32 %s26, 1
    %s28 = scalar_select %p25, %s26, %s27
    %p31 = pneg %p25
    %p32 = scmp.eq.s32.totalorder %s16, 1
    %p33 = por %p31, %p32
    %p34 = scmp.ne.s32.totalorder %s26, %s29
    %p35 = scmp.eq.s32.totalorder %s16, 0
    %p36 = por %p34, %p35
    %p37 = scmp.ne.s32.totalorder %s26, %s29
    %p38 = scmp.eq.s32.totalorder %s21, 1
    %p39 = por %p37, %p38
    %p40 = scmp.ne.s32.totalorder %s29, %s30
    %p41 = scmp.eq.s32.totalorder %s21, 0
    %p42 = por %p40, %p41
    %p43 = scmp.ne.s32.totalorder %s29, %s30
    %p44 = scmp.eq.s32.totalorder %s22, 1
    %p45 = por %p43, %p44
    %p47 = scmp.ne.s32.totalorder %s30, %s46
    %p48 = scmp.eq.s32.totalorder %s22, 0
    %p49 = por %p47, %p48
    %s50 = ssub.s32 %s16, %s23
    %p51 = scmp.eq.s32.totalorder %s50, 0
    %s53 = sadd.s32 %s52, 1
    %s54 = scalar_select %p51, %s52, %s53
    %p57 = pneg %p51
    %p58 = scmp.eq.s32.totalorder %s16, 1
    %p59 = por %p57, %p58
    %p60 = scmp.ne.s32.totalorder %s52, %s55
    %p61 = scmp.eq.s32.totalorder %s16, 0
    %p62 = por %p60, %p61
    %p63 = scmp.ne.s32.totalorder %s52, %s55
    %p64 = scmp.eq.s32.totalorder %s21, 1
    %p65 = por %p63, %p64
    %p66 = scmp.ne.s32.totalorder %s55, %s56
    %p67 = scmp.eq.s32.totalorder %s21, 0
    %p68 = por %p66, %p67
    %p69 = scmp.ne.s32.totalorder %s55, %s56
    %p70 = scmp.eq.s32.totalorder %s22, 1
    %p71 = por %p69, %p70
    %p73 = scmp.ne.s32.totalorder %s56, %s72
    %p74 = scmp.eq.s32.totalorder %s22, 0
    %p75 = por %p73, %p74
    %s76 = ssub.s32 %s16, %s23
    %p77 = scmp.eq.s32.totalorder %s76, 0
    %s79 = sadd.s32 %s78, 1
    %s80 = scalar_select %p77, %s78, %s79
    %p83 = pneg %p77
    %p84 = scmp.eq.s32.totalorder %s16, 1
    %p85 = por %p83, %p84
    %p86 = scmp.ne.s32.totalorder %s78, %s81
    %p87 = scmp.eq.s32.totalorder %s16, 0
    %p88 = por %p86, %p87
    %p89 = scmp.ne.s32.totalorder %s78, %s81
    %p90 = scmp.eq.s32.totalorder %s21, 1
    %p91 = por %p89, %p90
    %p92 = scmp.ne.s32.totalorder %s81, %s82
    %p93 = scmp.eq.s32.totalorder %s21, 0
    %p94 = por %p92, %p93
    %p95 = scmp.ne.s32.totalorder %s81, %s82
    %p96 = scmp.eq.s32.totalorder %s22, 1
    %p97 = por %p95, %p96
    %p99 = scmp.ne.s32.totalorder %s82, %s98
    %p100 = scmp.eq.s32.totalorder %s22, 0
    %p101 = por %p99, %p100
    %s103 = sadd.s32 %s102, 1
    %p106 = scmp.eq.s32.totalorder %s16, 1
    %p107 = scmp.ne.s32.totalorder %s102, %s104
    %p108 = scmp.eq.s32.totalorder %s16, 0
    %p109 = por %p107, %p108
    %p110 = scmp.ne.s32.totalorder %s102, %s104
    %p111 = scmp.eq.s32.totalorder %s21, 1
    %p112 = por %p110, %p111
    %p113 = scmp.ne.s32.totalorder %s104, %s105
    %p114 = scmp.eq.s32.totalorder %s21, 0
    %p115 = por %p113, %p114
    %p116 = scmp.ne.s32.totalorder %s104, %s105
    %p117 = scmp.eq.s32.totalorder %s22, 1
    %p118 = por %p116, %p117
    %p120 = scmp.ne.s32.totalorder %s105, %s119
    %p121 = scmp.eq.s32.totalorder %s22, 0
    %p122 = por %p120, %p121
    %s124 = sadd.s32 %s123, 1
    %p127 = scmp.eq.s32.totalorder %s16, 1
    %p128 = scmp.ne.s32.totalorder %s123, %s125
    %p129 = scmp.eq.s32.totalorder %s16, 0
    %p130 = por %p128, %p129
    %p131 = scmp.ne.s32.totalorder %s123, %s125
    %p132 = scmp.eq.s32.totalorder %s21, 1
    %p133 = por %p131, %p132
    %p134 = scmp.ne.s32.totalorder %s125, %s126
    %p135 = scmp.eq.s32.totalorder %s21, 0
    %p136 = por %p134, %p135
    %p137 = scmp.ne.s32.totalorder %s125, %s126
    %p138 = scmp.eq.s32.totalorder %s22, 1
    %p139 = por %p137, %p138
    %p141 = scmp.ne.s32.totalorder %s126, %s140
    %p142 = scmp.eq.s32.totalorder %s22, 0
    %p143 = por %p141, %p142
    %s145 = sadd.s32 %s144, 1
    %p148 = scmp.eq.s32.totalorder %s16, 1
    %p149 = scmp.ne.s32.totalorder %s144, %s146
    %p150 = scmp.eq.s32.totalorder %s16, 0
    %p151 = por %p149, %p150
    %p152 = scmp.ne.s32.totalorder %s144, %s146
    %p153 = scmp.eq.s32.totalorder %s21, 1
    %p154 = por %p152, %p153
    %p155 = scmp.ne.s32.totalorder %s146, %s147
    %p156 = scmp.eq.s32.totalorder %s21, 0
    %p157 = por %p155, %p156
    %p158 = scmp.ne.s32.totalorder %s146, %s147
    %p159 = scmp.eq.s32.totalorder %s22, 1
    %p160 = por %p158, %p159
    %p162 = scmp.ne.s32.totalorder %s147, %s161
    %p163 = scmp.eq.s32.totalorder %s22, 0
    %p164 = por %p162, %p163
    %s166 = sadd.s32 %s165, 1
    %p169 = scmp.eq.s32.totalorder %s16, 1
    %p170 = scmp.ne.s32.totalorder %s165, %s167
    %p171 = scmp.eq.s32.totalorder %s16, 0
    %p172 = por %p170, %p171
    %p173 = scmp.ne.s32.totalorder %s165, %s167
    %p174 = scmp.eq.s32.totalorder %s21, 1
    %p175 = por %p173, %p174
    %p176 = scmp.ne.s32.totalorder %s167, %s168
    %p177 = scmp.eq.s32.totalorder %s21, 0
    %p178 = por %p176, %p177
    %p179 = scmp.ne.s32.totalorder %s167, %s168
    %p180 = scmp.eq.s32.totalorder %s22, 1
    %p181 = por %p179, %p180
    %p183 = scmp.ne.s32.totalorder %s168, %s182
    %p184 = scmp.eq.s32.totalorder %s22, 0
    %p185 = por %p183, %p184
    %s186 = ssub.s32 %s16, %s23
    %p187 = scmp.eq.s32.totalorder %s186, 0
    %s189 = sadd.s32 %s188, 1
    %s190 = scalar_select %p187, %s188, %s189
    %p193 = pneg %p187
    %p194 = scmp.eq.s32.totalorder %s16, 1
    %p195 = por %p193, %p194
    %p196 = scmp.ne.s32.totalorder %s188, %s191
    %p197 = scmp.eq.s32.totalorder %s16, 0
    %p198 = por %p196, %p197
    %p199 = scmp.ne.s32.totalorder %s188, %s191
    %p200 = scmp.eq.s32.totalorder %s21, 1
    %p201 = por %p199, %p200
    %p202 = scmp.ne.s32.totalorder %s191, %s192
    %p203 = scmp.eq.s32.totalorder %s21, 0
    %p204 = por %p202, %p203
    %p205 = scmp.ne.s32.totalorder %s191, %s192
    %p206 = scmp.eq.s32.totalorder %s22, 1
    %p207 = por %p205, %p206
    %p209 = scmp.ne.s32.totalorder %s192, %s208
    %p210 = scmp.eq.s32.totalorder %s22, 0
    %p211 = por %p209, %p210
    %s212 = ssub.s32 %s16, %s23
    %p213 = scmp.eq.s32.totalorder %s212, 0
    %s215 = sadd.s32 %s214, 1
    %s216 = scalar_select %p213, %s214, %s215
    %p219 = pneg %p213
    %p220 = scmp.eq.s32.totalorder %s16, 1
    %p221 = por %p219, %p220
    %p222 = scmp.ne.s32.totalorder %s214, %s217
    %p223 = scmp.eq.s32.totalorder %s16, 0
    %p224 = por %p222, %p223
    %p225 = scmp.ne.s32.totalorder %s214, %s217
    %p226 = scmp.eq.s32.totalorder %s21, 1
    %p227 = por %p225, %p226
    %p228 = scmp.ne.s32.totalorder %s217, %s218
    %p229 = scmp.eq.s32.totalorder %s21, 0
    %p230 = por %p228, %p229
    %p231 = scmp.ne.s32.totalorder %s217, %s218
    %p232 = scmp.eq.s32.totalorder %s22, 1
    %p233 = por %p231, %p232
    %p235 = scmp.ne.s32.totalorder %s218, %s234
    %p236 = scmp.eq.s32.totalorder %s22, 0
    %p237 = por %p235, %p236
    %s238 = ssub.s32 %s16, %s23
    %p239 = scmp.eq.s32.totalorder %s238, 0
    %s241 = sadd.s32 %s240, 1
    %s242 = scalar_select %p239, %s240, %s241
    %p245 = pneg %p239
    %p246 = scmp.eq.s32.totalorder %s16, 1
    %p247 = por %p245, %p246
    %p248 = scmp.ne.s32.totalorder %s240, %s243
    %p249 = scmp.eq.s32.totalorder %s16, 0
    %p250 = por %p248, %p249
    %p251 = scmp.ne.s32.totalorder %s240, %s243
    %p252 = scmp.eq.s32.totalorder %s21, 1
    %p253 = por %p251, %p252
    %p254 = scmp.ne.s32.totalorder %s243, %s244
    %p255 = scmp.eq.s32.totalorder %s21, 0
    %p256 = por %p254, %p255
    %p257 = scmp.ne.s32.totalorder %s243, %s244
    %p258 = scmp.eq.s32.totalorder %s22, 1
    %p259 = por %p257, %p258
    %p261 = scmp.ne.s32.totalorder %s244, %s260
    %p262 = scmp.eq.s32.totalorder %s22, 0
    %p263 = por %p261, %p262
    %p264 = scmp.le.s32.totalorder 1, %s16
    %p265 = scmp.lt.s32.totalorder %s16, 3
    %p266 = pnand %p264, %p265
    %p267 = pneg %p266
    // Predicated region
    $region9: #{recognizer_sage_forward.6} parent=5 // pred_check
      _
    $region10: #{recognizer_sage_forward.6} parent=5 // pred_check_branch
      %269 = sbr.rel (%p266) target = $region12
    $region11: #{recognizer_sage_forward.6} parent=5 // pred_region
      %s270 = ssub.s32 %s16, 1
      // Predicated region
      $region13: #{recognizer_sage_forward.6} parent=11 // pred_check
        %p271 = pneg %p115
      $region14: #{recognizer_sage_forward.6} parent=11 // pred_check_branch
        %273 = sbr.rel (%p271) target = $region16
      $region15: #{recognizer_sage_forward.6} parent=11 // pred_region
        _
      $region16: #{recognizer_sage_forward.6} parent=11 // pred_fallthru
        _
      // Predicated region
      $region17: #{recognizer_sage_forward.6} parent=11 // pred_check
        %p274 = pneg %p136
      $region18: #{recognizer_sage_forward.6} parent=11 // pred_check_branch
        %276 = sbr.rel (%p274) target = $region20
      $region19: #{recognizer_sage_forward.6} parent=11 // pred_region
        _
      $region20: #{recognizer_sage_forward.6} parent=11 // pred_fallthru
        _
      // Predicated region
      $region21: #{recognizer_sage_forward.6} parent=11 // pred_check
        %p277 = pneg %p157
      $region22: #{recognizer_sage_forward.6} parent=11 // pred_check_branch
        %279 = sbr.rel (%p277) target = $region24
      $region23: #{recognizer_sage_forward.6} parent=11 // pred_region
        _
      $region24: #{recognizer_sage_forward.6} parent=11 // pred_fallthru
        _
      // Predicated region
      $region25: #{recognizer_sage_forward.6} parent=11 // pred_check
        %p280 = pneg %p178
      $region26: #{recognizer_sage_forward.6} parent=11 // pred_check_branch
        %282 = sbr.rel (%p280) target = $region28
      $region27: #{recognizer_sage_forward.6} parent=11 // pred_region
        _
      $region28: #{recognizer_sage_forward.6} parent=11 // pred_fallthru
        _
    $region12: #{recognizer_sage_forward.6} parent=5 // pred_fallthru
      _
    %p283 = scmp.lt.s32.totalorder %s16, 2
    // Predicated region
    $region29: #{recognizer_sage_forward.6} parent=5 // pred_check
      %p284 = pneg %p283
    $region30: #{recognizer_sage_forward.6} parent=5 // pred_check_branch
      %286 = sbr.rel (%p284) target = $region32
    $region31: #{recognizer_sage_forward.6} parent=5 // pred_region
      // Predicated region
      $region33: #{recognizer_sage_forward.6} parent=31 // pred_check
        %p287 = pneg %p36
      $region34: #{recognizer_sage_forward.6} parent=31 // pred_check_branch
        %289 = sbr.rel (%p287) target = $region36
      $region35: #{recognizer_sage_forward.6} parent=31 // pred_region
        %p290 = scmp.lt.s32.totalorder %s16, 1
        %s291 = scalar_select %p290, %s16, 1
        %s292 = smul.addr %s291, 4
        %s293 = smul.addr %s292, 8
        %s294 = scalar_lea.vmem %s0, %s293
      $region36: #{recognizer_sage_forward.6} parent=31 // pred_fallthru
        _
      // Predicated region
      $region37: #{recognizer_sage_forward.6} parent=31 // pred_check
        %p295 = pneg %p62
      $region38: #{recognizer_sage_forward.6} parent=31 // pred_check_branch
        %297 = sbr.rel (%p295) target = $region40
      $region39: #{recognizer_sage_forward.6} parent=31 // pred_region
        %p298 = scmp.lt.s32.totalorder %s16, 1
        %s299 = scalar_select %p298, %s16, 1
        %s300 = smul.addr %s299, 4
        %s301 = smul.addr %s300, 8
        %s302 = scalar_lea.vmem %s1, %s301
      $region40: #{recognizer_sage_forward.6} parent=31 // pred_fallthru
        _
      // Predicated region
      $region41: #{recognizer_sage_forward.6} parent=31 // pred_check
        %p303 = pneg %p88
      $region42: #{recognizer_sage_forward.6} parent=31 // pred_check_branch
        %305 = sbr.rel (%p303) target = $region44
      $region43: #{recognizer_sage_forward.6} parent=31 // pred_region
        %p306 = scmp.lt.s32.totalorder %s16, 1
        %s307 = scalar_select %p306, %s16, 1
        %s308 = smul.addr %s307, 4
        %s309 = smul.addr %s308, 8
        %s310 = scalar_lea.vmem %s2, %s309
      $region44: #{recognizer_sage_forward.6} parent=31 // pred_fallthru
        _
    $region32: #{recognizer_sage_forward.6} parent=5 // pred_fallthru
      _
    %p311 = scmp.le.s32.totalorder 1, %s16
    %p312 = scmp.lt.s32.totalorder %s16, 3
    %p313 = pnand %p311, %p312
    %p314 = pneg %p313
    // Predicated region
    $region45: #{recognizer_sage_forward.6} parent=5 // pred_check
      _
    $region46: #{recognizer_sage_forward.6} parent=5 // pred_check_branch
      %316 = sbr.rel (%p313) target = $region48
    $region47: #{recognizer_sage_forward.6} parent=5 // pred_region
      %s317 = ssub.s32 %s16, 1
      %p318 = scmp.lt.s32.totalorder %s21, 1
      %s319 = scalar_select %p318, %s21, 1
      %s320 = smul.addr %s319, 4
      %s321 = smul.addr %s320, 8
      %s322 = scalar_lea.vmem %s0, %s321
      %p323 = pneg %p42
      %p324 = pneg %p39
      %p325 = scmp.lt.s32.totalorder %s21, 1
      %s326 = scalar_select %p325, %s21, 1
      %s327 = smul.addr %s326, 4
      %s328 = smul.addr %s327, 8
      %s329 = scalar_lea.vmem %s1, %s328
      %p330 = pneg %p68
      %p331 = pneg %p65
      %p332 = scmp.lt.s32.totalorder %s21, 1
      %s333 = scalar_select %p332, %s21, 1
      %s334 = smul.addr %s333, 4
      %s335 = smul.addr %s334, 8
      %s336 = scalar_lea.vmem %s2, %s335
      %p337 = pneg %p94
      %p338 = pneg %p91
      %p339 = pneg %p115
      %p340 = pneg %p112
      %p341 = pneg %p136
      %p342 = pneg %p133
      %p343 = pneg %p157
      %p344 = pneg %p154
      %p345 = pneg %p178
      %p346 = pneg %p175
      %p347 = pneg %p204
      %p348 = pneg %p201
      %p349 = scmp.lt.s32.totalorder %s21, 1
      %s350 = scalar_select %p349, %s21, 1
      %s351 = smul.addr %s350, 4
      %s352 = smul.addr %s351, 8
      %s353 = scalar_lea.vmem %s7, %s352
      %p354 = pneg %p230
      %p355 = pneg %p227
      %p356 = scmp.lt.s32.totalorder %s21, 1
      %s357 = scalar_select %p356, %s21, 1
      %s358 = scalar_lea.vmem %s8, %s357
      %p359 = pneg %p256
      %p360 = pneg %p253
      %p361 = scmp.lt.s32.totalorder %s21, 1
      %s362 = scalar_select %p361, %s21, 1
      %s363 = scalar_lea.vmem %s9, %s362
      %p364 = scmp.lt.s32.totalorder %s21, 1
      %s365 = scalar_select %p364, %s21, 1
      %s366 = smul.addr %s365, 4
      %s367 = smul.addr %s366, 8
      %s368 = scalar_lea.vmem %s0, %s367
      %p369 = scmp.lt.s32.totalorder %s21, 1
      %s370 = scalar_select %p369, %s21, 1
      %s371 = smul.addr %s370, 4
      %s372 = smul.addr %s371, 8
      %s373 = scalar_lea.vmem %s1, %s372
      %p374 = scmp.lt.s32.totalorder %s21, 1
      %s375 = scalar_select %p374, %s21, 1
      %s376 = smul.addr %s375, 4
      %s377 = smul.addr %s376, 8
      %s378 = scalar_lea.vmem %s2, %s377
      %p379 = scmp.lt.s32.totalorder %s21, 1
      %s380 = scalar_select %p379, %s21, 1
      %s381 = smul.addr %s380, 4
      %s382 = smul.addr %s381, 8
      %s383 = scalar_lea.vmem %s7, %s382
      %p384 = scmp.lt.s32.totalorder %s21, 1
      %s385 = scalar_select %p384, %s21, 1
      %s386 = scalar_lea.vmem %s8, %s385
      %p387 = scmp.lt.s32.totalorder %s21, 1
      %s388 = scalar_select %p387, %s21, 1
      %s389 = scalar_lea.vmem %s9, %s388
      %v390 = vld [vmem:[%s368] sm:$0xff]
      %v391 = vld [vmem:[%s368 + $0x8] sm:$0xff]
      %v392 = vld [vmem:[%s368 + $0x10] sm:$0xff]
      %v393 = vld [vmem:[%s368 + $0x18] sm:$0xff]
      %v394 = vld [vmem:[%s373] sm:$0xff]
      %v395 = vld [vmem:[%s373 + $0x8] sm:$0xff]
      %v396 = vld [vmem:[%s373 + $0x10] sm:$0xff]
      %v397 = vld [vmem:[%s373 + $0x18] sm:$0xff]
      %v398 = vld [vmem:[%s378] sm:$0xff]
      %v399 = vld [vmem:[%s378 + $0x8] sm:$0xff]
      %v400 = vld [vmem:[%s378 + $0x10] sm:$0xff]
      %v401 = vld [vmem:[%s378 + $0x18] sm:$0xff]
      %403 = vset.pattern.permute.xlu0 0
      %404 = vperm.xlu0 %403, %v394
      %v405 = vpop.permute.xlu0 %404
      %408 = vset.pattern.permute.xlu0 0
      %409 = vperm.xlu0 %408, %v395
      %v410 = vpop.permute.xlu0 %409
      %413 = vset.pattern.permute.xlu0 0
      %414 = vperm.xlu0 %413, %v396
      %v415 = vpop.permute.xlu0 %414
      %418 = vset.pattern.permute.xlu0 0
      %419 = vperm.xlu0 %418, %v397
      %v420 = vpop.permute.xlu0 %419
      %v422 = vmul.f32 %v390, %v405
      %v423 = vmul.f32 %v391, %v410
      %v424 = vmul.f32 %v392, %v415
      %v425 = vmul.f32 %v393, %v420
      %vm426 = vcmask 261120
      %v428 = vsel %vm426, %v398, 0
      %v431 = vsel %vm426, %v399, 0
      %v434 = vsel %vm426, %v400, 0
      %v437 = vsel %vm426, %v401, 0
      %439 = vmatpush.msra.mxu0 0.0
      %440 = vmatpush.msra.mxu0 0.0
      %441 = vmatpush.msra.mxu0 0.0
      %442 = vmatpush.msra.mxu0 0.0
      %443 = vmatpush.msra.mxu0 0.0
      %444 = vmatpush.msra.mxu0 0.0
      %445 = vmatpush.msra.mxu0 0.0
      %446 = vmatpush.msra.mxu0 0.0
      %447 = vmatpush.msra.mxu0 0.0
      %448 = vmatpush.msra.mxu0 0.0
      %449 = vmatpush.msra.mxu0 0.0
      %450 = vmatpush.msra.mxu0 0.0
      %451 = vmatpush.msra.mxu0 %v425
      %452 = vmatpush.msra.mxu0 %v424
      %453 = vmatpush.msra.mxu0 %v423
      %454 = vmatpush.msra.mxu0 %v422
      %455 = vmatmul.f32.gmra.mxu0 %v428
      %v456 = vpop.f32.mrf.mxu0
      %v457 = vadd.f32 0.0, %v456
      %458 = vmatmul.f32.gmra.mxu0 %v431
      %v459 = vpop.f32.mrf.mxu0
      %v460 = vadd.f32 0.0, %v459
      %461 = vmatmul.f32.gmra.mxu0 %v434
      %v462 = vpop.f32.mrf.mxu0
      %v463 = vadd.f32 0.0, %v462
      %464 = vmatmul.f32.gmra.mxu0 %v437
      %v465 = vpop.f32.mrf.mxu0
      %v466 = vadd.f32 0.0, %v465
      %467 = vdwg.mxu0
      %468 = vmatpush.msra.mxu0 0.0
      %469 = vmatpush.msra.mxu0 0.0
      %470 = vmatpush.msra.mxu0 0.0
      %471 = vmatpush.msra.mxu0 0.0
      %472 = vmatpush.msra.mxu0 0.0
      %473 = vmatpush.msra.mxu0 0.0
      %474 = vmatpush.msra.mxu0 0.0
      %475 = vmatpush.msra.mxu0 0.0
      %476 = vmatpush.msra.mxu0 0.0
      %477 = vmatpush.msra.mxu0 0.0
      %478 = vmatpush.msra.mxu0 0.0
      %479 = vmatpush.msra.mxu0 0.0
      %480 = vmatpush.msra.mxu0 %v397
      %481 = vmatpush.msra.mxu0 %v396
      %482 = vmatpush.msra.mxu0 %v395
      %483 = vmatpush.msra.mxu0 %v394
      %484 = vmatmul.f32.gmra.mxu0 %v428
      %v485 = vpop.f32.mrf.mxu0
      %v486 = vadd.f32 0.0, %v485
      %487 = vmatmul.f32.gmra.mxu0 %v431
      %v488 = vpop.f32.mrf.mxu0
      %v489 = vadd.f32 0.0, %v488
      %490 = vmatmul.f32.gmra.mxu0 %v434
      %v491 = vpop.f32.mrf.mxu0
      %v492 = vadd.f32 0.0, %v491
      %493 = vmatmul.f32.gmra.mxu0 %v437
      %v494 = vpop.f32.mrf.mxu0
      %v495 = vadd.f32 0.0, %v494
      %496 = vdwg.mxu0
      %v497 = vmax.f32 %v486, 1.0
      %v498 = vmax.f32 %v489, 1.0
      %v499 = vmax.f32 %v492, 1.0
      %v500 = vmax.f32 %v495, 1.0
      %v501 = vrcp.pop %v497
      %v502 = vrcp.pop %v498
      %v503 = vrcp.pop %v499
      %v504 = vrcp.pop %v500
      %506 = vset.pattern.permute.xlu0 0
      %507 = vperm.xlu0 %506, %v501
      %v508 = vpop.permute.xlu0 %507
      %511 = vset.pattern.permute.xlu0 0
      %512 = vperm.xlu0 %511, %v502
      %v513 = vpop.permute.xlu0 %512
      %516 = vset.pattern.permute.xlu0 0
      %517 = vperm.xlu0 %516, %v503
      %v518 = vpop.permute.xlu0 %517
      %521 = vset.pattern.permute.xlu0 0
      %522 = vperm.xlu0 %521, %v504
      %v523 = vpop.permute.xlu0 %522
      %v525 = vmul.f32 %v457, %v508
      %v526 = vmul.f32 %v460, %v513
      %v527 = vmul.f32 %v463, %v518
      %v528 = vmul.f32 %v466, %v523
      %vm529 = vcmp.gt.f32.partialorder %v394, 0.0
      %vm530 = vcmp.gt.f32.partialorder %v395, 0.0
      %vm531 = vcmp.gt.f32.partialorder %v396, 0.0
      %vm532 = vcmp.gt.f32.partialorder %v397, 0.0
      %v533 = vsel %vm529, 1, 0
      %v534 = vsel %vm530, 1, 0
      %v535 = vsel %vm531, 1, 0
      %v536 = vsel %vm532, 1, 0
      %537 = vset.pattern.permute.xlu0 0
      %538 = vperm.xlu0 %537, %v533
      %v539 = vpop.permute.xlu0 %538
      %540 = vset.pattern.permute.xlu0 0
      %541 = vperm.xlu0 %540, %v534
      %v542 = vpop.permute.xlu0 %541
      %543 = vset.pattern.permute.xlu0 0
      %544 = vperm.xlu0 %543, %v535
      %v545 = vpop.permute.xlu0 %544
      %546 = vset.pattern.permute.xlu0 0
      %547 = vperm.xlu0 %546, %v536
      %v548 = vpop.permute.xlu0 %547
      %vm549 = vcmp.eq.s32.totalorder %v539, 1
      %vm550 = vcmp.eq.s32.totalorder %v542, 1
      %vm551 = vcmp.eq.s32.totalorder %v545, 1
      %vm552 = vcmp.eq.s32.totalorder %v548, 1
      %v553 = vsel %vm549, %v390, -1e+30
      %v554 = vsel %vm550, %v391, -1e+30
      %v555 = vsel %vm551, %v392, -1e+30
      %v556 = vsel %vm552, %v393, -1e+30
      %vm557 = vcmask 523264
      %v558 = vsel %vm557, %v553, -inf
      %v559 = vsel %vm557, %v554, -inf
      %v560 = vsel %vm557, %v555, -inf
      %v561 = vsel %vm557, %v556, -inf
      %v562 = vmax.f32 %v558, %v559
      %v563 = vmax.f32 %v560, %v561
      %v564 = vmax.f32 %v562, %v563
      %v565 = vrot.slane %v564, 4
      %v566 = vmax.f32 %v564, %v565
      %v567 = vrot.slane %v566, 2
      %v568 = vmax.f32 %v566, %v567
      %v569 = vrot.slane %v568, 1
      %v570 = vmax.f32 %v568, %v569
      %vm571 = vcmask 7168
      %v572 = vsel %vm571, %v394, 0.0
      %v573 = vsel %vm571, %v395, 0.0
      %v574 = vadd.f32 %v572, %v573
      %v575 = vsel %vm571, %v396, 0.0
      %v576 = vadd.f32 %v574, %v575
      %v577 = vsel %vm571, %v397, 0.0
      %v578 = vadd.f32 %v576, %v577
      %579 = vadd.xlane.f32.xlu0 %v578
      %v580 = vpop.xlane.xlu0 %579
      %v581 = vrot.slane %v580, 4
      %v582 = vadd.f32 %v580, %v581
      %v583 = vrot.slane %v582, 2
      %v584 = vadd.f32 %v582, %v583
      %v585 = vrot.slane %v584, 1
      %v586 = vadd.f32 %v584, %v585
      %s587 = vtos %v586
      %s588 = smax.f32 %s587, 1.0
      %v589 = vstv %s588
      %v590 = vrcp.pop %v589
      %v591 = vmul.f32 %v589, %v590
      %v592 = vsub.f32 1.0, %v591
      %v593 = vmul.f32 %v590, %v592
      %v594 = vadd.f32 %v590, %v593
      %vm595 = vweird.f32 %v589
      %vm596 = vweird.f32 %v590
      %vm597 = vmor %vm595, %vm596
      %v598 = vsel %vm597, %v590, %v594
      %v599 = vand.u32 2147483647, %v589
      %vm600 = vcmp.eq.f32.partialorder %v599, 8.507059e+37
      %v601 = vand.u32 %v589, 2147483648
      %v602 = vor.u32 1.1754944e-38, %v601
      %v603 = vsel %vm600, %v602, %v598
      %s604 = vtos %v603
      %v605 = vsel %vm557, %v422, 0.0
      %v606 = vsel %vm557, %v423, 0.0
      %v607 = vadd.f32 %v605, %v606
      %v608 = vsel %vm557, %v424, 0.0
      %v609 = vadd.f32 %v607, %v608
      %v610 = vsel %vm557, %v425, 0.0
      %v611 = vadd.f32 %v609, %v610
      %v612 = vrot.slane %v611, 4
      %v613 = vadd.f32 %v611, %v612
      %v614 = vrot.slane %v613, 2
      %v615 = vadd.f32 %v613, %v614
      %v616 = vrot.slane %v615, 1
      %v617 = vadd.f32 %v615, %v616
      %v618 = vstv %s604
      %v619 = vmul.f32 %v617, %v618
      %621 = vrot.lane.b32.xlu0 %v619, 64
      %v622 = vpop.permute.xlu0 %621
      %v624 = vsel %vm557, %v570, %v622
      %625 = vst [vmem:[%s389] sm:$0x1] %v624
      %630 = vrot.lane.b32.xlu0 %v422, 64
      %v631 = vpop.permute.xlu0 %630
      %632 = vrot.lane.b32.xlu0 %v423, 64
      %v633 = vpop.permute.xlu0 %632
      %634 = vrot.lane.b32.xlu0 %v424, 64
      %v635 = vpop.permute.xlu0 %634
      %636 = vrot.lane.b32.xlu0 %v425, 64
      %v637 = vpop.permute.xlu0 %636
      %v642 = vsel %vm557, %v525, %v631
      %v643 = vsel %vm557, %v526, %v633
      %v644 = vsel %vm557, %v527, %v635
      %v645 = vsel %vm557, %v528, %v637
      %v646 = vld [vmem:[%s3] sm:$0xff]
      %v647 = vld [vmem:[%s3 + $0x8] sm:$0xff]
      %v648 = vld [vmem:[%s3 + $0x10] sm:$0xff]
      %v649 = vld [vmem:[%s3 + $0x18] sm:$0xff]
      %v650 = vld [vmem:[%s3 + $0x20] sm:$0xff]
      %v651 = vld [vmem:[%s3 + $0x28] sm:$0xff]
      %v652 = vld [vmem:[%s3 + $0x30] sm:$0xff]
      %v653 = vld [vmem:[%s3 + $0x38] sm:$0xff]
      %v654 = vld [vmem:[%s3 + $0x40] sm:$0xff]
      %v655 = vld [vmem:[%s3 + $0x48] sm:$0xff]
      %v656 = vld [vmem:[%s3 + $0x50] sm:$0xff]
      %v657 = vld [vmem:[%s3 + $0x58] sm:$0xff]
      %v658 = vld [vmem:[%s3 + $0x60] sm:$0xff]
      %v659 = vld [vmem:[%s3 + $0x68] sm:$0xff]
      %v660 = vld [vmem:[%s3 + $0x70] sm:$0xff]
      %v661 = vld [vmem:[%s3 + $0x78] sm:$0xff]
      %v662 = vld [vmem:[%s4] sm:$0x1]
      %v664 = vperm.slane %v662, 0
      %666 = vmatpush.msra.mxu0 %v661
      %667 = vmatpush.msra.mxu0 %v660
      %668 = vmatpush.msra.mxu0 %v659
      %669 = vmatpush.msra.mxu0 %v658
      %670 = vmatpush.msra.mxu0 %v657
      %671 = vmatpush.msra.mxu0 %v656
      %672 = vmatpush.msra.mxu0 %v655
      %673 = vmatpush.msra.mxu0 %v654
      %674 = vmatpush.msra.mxu0 %v653
      %675 = vmatpush.msra.mxu0 %v652
      %676 = vmatpush.msra.mxu0 %v651
      %677 = vmatpush.msra.mxu0 %v650
      %678 = vmatpush.msra.mxu0 %v649
      %679 = vmatpush.msra.mxu0 %v648
      %680 = vmatpush.msra.mxu0 %v647
      %681 = vmatpush.msra.mxu0 %v646
      %682 = vmatmul.f32.gmra.mxu0 %v642
      %v683 = vpop.f32.mrf.mxu0
      %v684 = vadd.f32 %v664, %v683
      %685 = vmatmul.f32.gmra.mxu0 %v643
      %v686 = vpop.f32.mrf.mxu0
      %v687 = vadd.f32 %v664, %v686
      %688 = vmatmul.f32.gmra.mxu0 %v644
      %v689 = vpop.f32.mrf.mxu0
      %v690 = vadd.f32 %v664, %v689
      %691 = vmatmul.f32.gmra.mxu0 %v645
      %v692 = vpop.f32.mrf.mxu0
      %v693 = vadd.f32 %v664, %v692
      %694 = vdwg.mxu0
      %v695 = vmul.f32 %v684, 0.5
      %v696 = vmul.f32 %v687, 0.5
      %v697 = vmul.f32 %v690, 0.5
      %v698 = vmul.f32 %v693, 0.5
      %v699 = vmul.f32 %v684, 0.044715
      %v700 = vmul.f32 %v687, 0.044715
      %v701 = vmul.f32 %v690, 0.044715
      %v702 = vmul.f32 %v693, 0.044715
      %v703 = vmul.f32 %v699, %v684
      %v704 = vmul.f32 %v700, %v687
      %v705 = vmul.f32 %v701, %v690
      %v706 = vmul.f32 %v702, %v693
      %v707 = vmul.f32 %v703, %v684
      %v708 = vmul.f32 %v704, %v687
      %v709 = vmul.f32 %v705, %v690
      %v710 = vmul.f32 %v706, %v693
      %v711 = vadd.f32 %v684, %v707
      %v712 = vadd.f32 %v687, %v708
      %v713 = vadd.f32 %v690, %v709
      %v714 = vadd.f32 %v693, %v710
      %v715 = vmul.f32 %v711, 0.7978846
      %v716 = vmul.f32 %v712, 0.7978846
      %v717 = vmul.f32 %v713, 0.7978846
      %v718 = vmul.f32 %v714, 0.7978846
      %v719 = vtanh.pop %v715
      %v720 = vtanh.pop %v716
      %v721 = vtanh.pop %v717
      %v722 = vtanh.pop %v718
      %v723 = vadd.f32 %v719, 1.0
      %v724 = vadd.f32 %v720, 1.0
      %v725 = vadd.f32 %v721, 1.0
      %v726 = vadd.f32 %v722, 1.0
      %v727 = vmul.f32 %v695, %v723
      %v728 = vmul.f32 %v696, %v724
      %v729 = vmul.f32 %v697, %v725
      %v730 = vmul.f32 %v698, %v726
      %v731 = vld [vmem:[%s5] sm:$0xff]
      %v732 = vld [vmem:[%s5 + $0x8] sm:$0xff]
      %v733 = vld [vmem:[%s5 + $0x10] sm:$0xff]
      %v734 = vld [vmem:[%s5 + $0x18] sm:$0xff]
      %v735 = vld [vmem:[%s5 + $0x20] sm:$0xff]
      %v736 = vld [vmem:[%s5 + $0x28] sm:$0xff]
      %v737 = vld [vmem:[%s5 + $0x30] sm:$0xff]
      %v738 = vld [vmem:[%s5 + $0x38] sm:$0xff]
      %v740 = vsel %vm557, %v727, 0
      %v743 = vsel %vm557, %v728, 0
      %v746 = vsel %vm557, %v729, 0
      %v749 = vsel %vm557, %v730, 0
      %751 = vmatpush.msra.mxu0 0.0
      %752 = vmatpush.msra.mxu0 0.0
      %753 = vmatpush.msra.mxu0 0.0
      %754 = vmatpush.msra.mxu0 0.0
      %755 = vmatpush.msra.mxu0 0.0
      %756 = vmatpush.msra.mxu0 0.0
      %757 = vmatpush.msra.mxu0 0.0
      %758 = vmatpush.msra.mxu0 0.0
      %759 = vmatpush.msra.mxu0 %v738
      %760 = vmatpush.msra.mxu0 %v737
      %761 = vmatpush.msra.mxu0 %v736
      %762 = vmatpush.msra.mxu0 %v735
      %763 = vmatpush.msra.mxu0 %v734
      %764 = vmatpush.msra.mxu0 %v733
      %765 = vmatpush.msra.mxu0 %v732
      %766 = vmatpush.msra.mxu0 %v731
      %767 = vmatmul.f32.gmra.mxu0 %v740
      %v768 = vpop.f32.mrf.mxu0
      %v769 = vadd.f32 0.0, %v768
      %770 = vmatmul.f32.gmra.mxu0 %v743
      %v771 = vpop.f32.mrf.mxu0
      %v772 = vadd.f32 0.0, %v771
      %773 = vmatmul.f32.gmra.mxu0 %v746
      %v774 = vpop.f32.mrf.mxu0
      %v775 = vadd.f32 0.0, %v774
      %776 = vmatmul.f32.gmra.mxu0 %v749
      %v777 = vpop.f32.mrf.mxu0
      %v778 = vadd.f32 0.0, %v777
      %779 = vdwg.mxu0
      %v780 = vtanh.pop %v769
      %v781 = vtanh.pop %v772
      %v782 = vtanh.pop %v775
      %v783 = vtanh.pop %v778
      %785 = vset.pattern.permute.xlu0 0
      %786 = vperm.xlu0 %785, %v780
      %v787 = vpop.permute.xlu0 %786
      %790 = vset.pattern.permute.xlu0 0
      %791 = vperm.xlu0 %790, %v781
      %v792 = vpop.permute.xlu0 %791
      %795 = vset.pattern.permute.xlu0 0
      %796 = vperm.xlu0 %795, %v782
      %v797 = vpop.permute.xlu0 %796
      %800 = vset.pattern.permute.xlu0 0
      %801 = vperm.xlu0 %800, %v783
      %v802 = vpop.permute.xlu0 %801
      %v804 = vmul.f32 %v727, %v787
      %v805 = vmul.f32 %v728, %v792
      %v806 = vmul.f32 %v729, %v797
      %v807 = vmul.f32 %v730, %v802
      %808 = vst.msk [vmem:[%s383] sm:$0xff] %vm557, %v804
      %809 = vst.msk [vmem:[%s383 + $0x8] sm:$0xff] %vm557, %v805
      %810 = vst.msk [vmem:[%s383 + $0x10] sm:$0xff] %vm557, %v806
      %811 = vst.msk [vmem:[%s383 + $0x18] sm:$0xff] %vm557, %v807
      %v812 = vld [vmem:[%s6] sm:$0x1]
      %v814 = vsel %vm557, %v812, 0
      %816 = vmatpush.xpose.msra.mxu0 0.0
      %817 = vmatpush.xpose.msra.mxu0 0.0
      %818 = vmatpush.xpose.msra.mxu0 0.0
      %819 = vmatpush.xpose.msra.mxu0 0.0
      %820 = vmatpush.xpose.msra.mxu0 0.0
      %821 = vmatpush.xpose.msra.mxu0 0.0
      %822 = vmatpush.xpose.msra.mxu0 0.0
      %823 = vmatpush.xpose.msra.mxu0 0.0
      %824 = vmatpush.xpose.msra.mxu0 0.0
      %825 = vmatpush.xpose.msra.mxu0 0.0
      %826 = vmatpush.xpose.msra.mxu0 0.0
      %827 = vmatpush.xpose.msra.mxu0 0.0
      %828 = vmatpush.xpose.msra.mxu0 %v749
      %829 = vmatpush.xpose.msra.mxu0 %v746
      %830 = vmatpush.xpose.msra.mxu0 %v743
      %831 = vmatpush.xpose.msra.mxu0 %v740
      %832 = vmatmul.f32.gmra.mxu0 %v814
      %v833 = vpop.f32.mrf.mxu0
      %v834 = vadd.f32 0.0, %v833
      %835 = vdwg.mxu0
      %v836 = vtanh.pop %v834
      %vm837 = vcmask 253952
      %838 = vst.msk [vmem:[%s386] sm:$0x1] %vm837, %v836
      %p839 = scmp.lt.s32.totalorder %s21, 1
      %s840 = scalar_select %p839, %s21, 1
      %s841 = smul.addr %s840, 4
      %s842 = smul.addr %s841, 8
      %s843 = scalar_lea.vmem %s7, %s842
      %p844 = scmp.lt.s32.totalorder %s21, 1
      %s845 = scalar_select %p844, %s21, 1
      %s846 = scalar_lea.vmem %s8, %s845
      %p847 = scmp.lt.s32.totalorder %s21, 1
      %s848 = scalar_select %p847, %s21, 1
      %s849 = scalar_lea.vmem %s9, %s848
      // Predicated region
      $region49: #{recognizer_sage_forward.6} parent=47 // pred_check
        %p850 = pneg %p201
      $region50: #{recognizer_sage_forward.6} parent=47 // pred_check_branch
        %852 = sbr.rel (%p850) target = $region52
      $region51: #{recognizer_sage_forward.6} parent=47 // pred_region
        _
      $region52: #{recognizer_sage_forward.6} parent=47 // pred_fallthru
        _
      // Predicated region
      $region53: #{recognizer_sage_forward.6} parent=47 // pred_check
        %p853 = pneg %p227
      $region54: #{recognizer_sage_forward.6} parent=47 // pred_check_branch
        %855 = sbr.rel (%p853) target = $region56
      $region55: #{recognizer_sage_forward.6} parent=47 // pred_region
        _
      $region56: #{recognizer_sage_forward.6} parent=47 // pred_fallthru
        _
      // Predicated region
      $region57: #{recognizer_sage_forward.6} parent=47 // pred_check
        %p856 = pneg %p253
      $region58: #{recognizer_sage_forward.6} parent=47 // pred_check_branch
        %858 = sbr.rel (%p856) target = $region60
      $region59: #{recognizer_sage_forward.6} parent=47 // pred_region
        _
      $region60: #{recognizer_sage_forward.6} parent=47 // pred_fallthru
        _
    $region48: #{recognizer_sage_forward.6} parent=5 // pred_fallthru
      _
    %p859 = scmp.le.s32.totalorder 2, %s16
    // Predicated region
    $region61: #{recognizer_sage_forward.6} parent=5 // pred_check
      %p860 = pneg %p859
    $region62: #{recognizer_sage_forward.6} parent=5 // pred_check_branch
      %862 = sbr.rel (%p860) target = $region64
    $region63: #{recognizer_sage_forward.6} parent=5 // pred_region
      %s863 = ssub.s32 %s16, 2
      // Predicated region
      $region65: #{recognizer_sage_forward.6} parent=63 // pred_check
        %p864 = pneg %p207
      $region66: #{recognizer_sage_forward.6} parent=63 // pred_check_branch
        %866 = sbr.rel (%p864) target = $region68
      $region67: #{recognizer_sage_forward.6} parent=63 // pred_region
        %p867 = scmp.lt.s32.totalorder %s22, 1
        %s868 = scalar_select %p867, %s22, 1
        %s869 = smul.addr %s868, 4
        %s870 = smul.addr %s869, 8
        %s871 = scalar_lea.vmem %s7, %s870
      $region68: #{recognizer_sage_forward.6} parent=63 // pred_fallthru
        _
      // Predicated region
      $region69: #{recognizer_sage_forward.6} parent=63 // pred_check
        %p872 = pneg %p233
      $region70: #{recognizer_sage_forward.6} parent=63 // pred_check_branch
        %874 = sbr.rel (%p872) target = $region72
      $region71: #{recognizer_sage_forward.6} parent=63 // pred_region
        %p875 = scmp.lt.s32.totalorder %s22, 1
        %s876 = scalar_select %p875, %s22, 1
        %s877 = scalar_lea.vmem %s8, %s876
      $region72: #{recognizer_sage_forward.6} parent=63 // pred_fallthru
        _
      // Predicated region
      $region73: #{recognizer_sage_forward.6} parent=63 // pred_check
        %p878 = pneg %p259
      $region74: #{recognizer_sage_forward.6} parent=63 // pred_check_branch
        %880 = sbr.rel (%p878) target = $region76
      $region75: #{recognizer_sage_forward.6} parent=63 // pred_region
        %p881 = scmp.lt.s32.totalorder %s22, 1
        %s882 = scalar_select %p881, %s22, 1
        %s883 = scalar_lea.vmem %s9, %s882
      $region76: #{recognizer_sage_forward.6} parent=63 // pred_fallthru
        _
    $region64: #{recognizer_sage_forward.6} parent=5 // pred_fallthru
      _
  $region6: #{recognizer_sage_forward.6} parent=0 // loop_footer
    %s20 = sadd.s32 1, %s16
  $region7: #{recognizer_sage_forward.6} parent=0 // loop_footer_branch
    %15 = sbr.rel target = $region3
  $region8: #{recognizer_sage_forward.6} parent=0 // loop_exit
    _

// kernel: recognizer_sage_forward.5
$region0: #{recognizer_sage_forward.5}
  #allocation0 [shape = 'u32[]', space=smem, size = 0x4, offset = 0x4, fixed_abs, tag = 'smem constant byte address 0x4 - core index']
  #allocation1 [shape = 'u32[72,128]{1,0:T(1,128)}', space=vmem, size = 0x9000, scoped, tag = 'internal scratch']
  %s0 = inlined_call_operand.vmem [shape: f32[2,32,6], index: 0, kind: input, shape index: {}]
  %s1 = inlined_call_operand.vmem [shape: f32[2,32,1], index: 1, kind: input, shape index: {}]
  %s2 = inlined_call_operand.vmem [shape: f32[2,32,32], index: 2, kind: input, shape index: {}]
  %s3 = inlined_call_operand.vmem [shape: f32[6,64], index: 3, kind: input, shape index: {}]
  %s4 = inlined_call_operand.vmem [shape: f32[6,64], index: 4, kind: input, shape index: {}]
  %s5 = inlined_call_operand.vmem [shape: f32[1,64], index: 5, kind: input, shape index: {}]
  %s6 = inlined_call_operand.vmem [shape: f32[64,1], index: 6, kind: input, shape index: {}]
  %s7 = inlined_call_operand.vmem [shape: f32[1,64], index: 7, kind: input, shape index: {}]
  %s8 = inlined_call_operand.vmem [shape: f32[2,32,64], index: 8, kind: output, shape index: {0}]
  %s9 = inlined_call_operand.vmem [shape: f32[2,1,32], index: 9, kind: output, shape index: {1}]
  %10 = xla_tuple %s8, %s9
  %s11 = sld [smem:[#allocation0]]
  $region73: #{recognizer_sage_forward.5} parent=0
    _
  %s13 = ssub.s32 1, %s11
  %s14 = scalar_select 0, %s13, %s11
  loop: start=0, step=1, limit=4
  $region2: #{recognizer_sage_forward.5} parent=0 // loop_pre_header
    _
  $region3: #{recognizer_sage_forward.5} parent=0 // loop_header
    %s16 = sphi 0, %s20
    %p17 = scmp.ge.s32.totalorder %s16, 4
    %s26 = sphi 0, %s28
    %s29 = sphi 0, %s26
    %s30 = sphi 0, %s29
    %s46 = sphi 0, %s30
    %s52 = sphi 0, %s54
    %s55 = sphi 0, %s52
    %s56 = sphi 0, %s55
    %s72 = sphi 0, %s56
    %s78 = sphi 0, %s80
    %s81 = sphi 0, %s78
    %s82 = sphi 0, %s81
    %s98 = sphi 0, %s82
    %s102 = sphi 0, %s102
    %s104 = sphi 0, %s102
    %s105 = sphi 0, %s104
    %s119 = sphi 0, %s105
    %s123 = sphi 0, %s123
    %s125 = sphi 0, %s123
    %s126 = sphi 0, %s125
    %s140 = sphi 0, %s126
    %s144 = sphi 0, %s144
    %s146 = sphi 0, %s144
    %s147 = sphi 0, %s146
    %s161 = sphi 0, %s147
    %s165 = sphi 0, %s165
    %s167 = sphi 0, %s165
    %s168 = sphi 0, %s167
    %s182 = sphi 0, %s168
    %s186 = sphi 0, %s186
    %s188 = sphi 0, %s186
    %s189 = sphi 0, %s188
    %s203 = sphi 0, %s189
    %s209 = sphi 0, %s211
    %s212 = sphi 0, %s209
    %s213 = sphi 0, %s212
    %s229 = sphi 0, %s213
    %s235 = sphi 0, %s237
    %s238 = sphi 0, %s235
    %s239 = sphi 0, %s238
    %s255 = sphi 0, %s239
  $region4: #{recognizer_sage_forward.5} parent=0 // loop_header_branch
    %19 = sbr.rel (%p17) target = $region8
  $region5: #{recognizer_sage_forward.5} parent=0 // loop_body
    %s21 = ssub.s32 %s16, 1
    %s22 = ssub.s32 %s16, 2
    %s23 = sadd.s32 %s16, 1
    %s24 = ssub.s32 %s16, %s23
    %p25 = scmp.eq.s32.totalorder %s24, 0
    %s27 = sadd.s32 %s26, 1
    %s28 = scalar_select %p25, %s26, %s27
    %p31 = pneg %p25
    %p32 = scmp.eq.s32.totalorder %s16, 1
    %p33 = por %p31, %p32
    %p34 = scmp.ne.s32.totalorder %s26, %s29
    %p35 = scmp.eq.s32.totalorder %s16, 0
    %p36 = por %p34, %p35
    %p37 = scmp.ne.s32.totalorder %s26, %s29
    %p38 = scmp.eq.s32.totalorder %s21, 1
    %p39 = por %p37, %p38
    %p40 = scmp.ne.s32.totalorder %s29, %s30
    %p41 = scmp.eq.s32.totalorder %s21, 0
    %p42 = por %p40, %p41
    %p43 = scmp.ne.s32.totalorder %s29, %s30
    %p44 = scmp.eq.s32.totalorder %s22, 1
    %p45 = por %p43, %p44
    %p47 = scmp.ne.s32.totalorder %s30, %s46
    %p48 = scmp.eq.s32.totalorder %s22, 0
    %p49 = por %p47, %p48
    %s50 = ssub.s32 %s16, %s23
    %p51 = scmp.eq.s32.totalorder %s50, 0
    %s53 = sadd.s32 %s52, 1
    %s54 = scalar_select %p51, %s52, %s53
    %p57 = pneg %p51
    %p58 = scmp.eq.s32.totalorder %s16, 1
    %p59 = por %p57, %p58
    %p60 = scmp.ne.s32.totalorder %s52, %s55
    %p61 = scmp.eq.s32.totalorder %s16, 0
    %p62 = por %p60, %p61
    %p63 = scmp.ne.s32.totalorder %s52, %s55
    %p64 = scmp.eq.s32.totalorder %s21, 1
    %p65 = por %p63, %p64
    %p66 = scmp.ne.s32.totalorder %s55, %s56
    %p67 = scmp.eq.s32.totalorder %s21, 0
    %p68 = por %p66, %p67
    %p69 = scmp.ne.s32.totalorder %s55, %s56
    %p70 = scmp.eq.s32.totalorder %s22, 1
    %p71 = por %p69, %p70
    %p73 = scmp.ne.s32.totalorder %s56, %s72
    %p74 = scmp.eq.s32.totalorder %s22, 0
    %p75 = por %p73, %p74
    %s76 = ssub.s32 %s16, %s23
    %p77 = scmp.eq.s32.totalorder %s76, 0
    %s79 = sadd.s32 %s78, 1
    %s80 = scalar_select %p77, %s78, %s79
    %p83 = pneg %p77
    %p84 = scmp.eq.s32.totalorder %s16, 1
    %p85 = por %p83, %p84
    %p86 = scmp.ne.s32.totalorder %s78, %s81
    %p87 = scmp.eq.s32.totalorder %s16, 0
    %p88 = por %p86, %p87
    %p89 = scmp.ne.s32.totalorder %s78, %s81
    %p90 = scmp.eq.s32.totalorder %s21, 1
    %p91 = por %p89, %p90
    %p92 = scmp.ne.s32.totalorder %s81, %s82
    %p93 = scmp.eq.s32.totalorder %s21, 0
    %p94 = por %p92, %p93
    %p95 = scmp.ne.s32.totalorder %s81, %s82
    %p96 = scmp.eq.s32.totalorder %s22, 1
    %p97 = por %p95, %p96
    %p99 = scmp.ne.s32.totalorder %s82, %s98
    %p100 = scmp.eq.s32.totalorder %s22, 0
    %p101 = por %p99, %p100
    %s103 = sadd.s32 %s102, 1
    %p106 = scmp.eq.s32.totalorder %s16, 1
    %p107 = scmp.ne.s32.totalorder %s102, %s104
    %p108 = scmp.eq.s32.totalorder %s16, 0
    %p109 = por %p107, %p108
    %p110 = scmp.ne.s32.totalorder %s102, %s104
    %p111 = scmp.eq.s32.totalorder %s21, 1
    %p112 = por %p110, %p111
    %p113 = scmp.ne.s32.totalorder %s104, %s105
    %p114 = scmp.eq.s32.totalorder %s21, 0
    %p115 = por %p113, %p114
    %p116 = scmp.ne.s32.totalorder %s104, %s105
    %p117 = scmp.eq.s32.totalorder %s22, 1
    %p118 = por %p116, %p117
    %p120 = scmp.ne.s32.totalorder %s105, %s119
    %p121 = scmp.eq.s32.totalorder %s22, 0
    %p122 = por %p120, %p121
    %s124 = sadd.s32 %s123, 1
    %p127 = scmp.eq.s32.totalorder %s16, 1
    %p128 = scmp.ne.s32.totalorder %s123, %s125
    %p129 = scmp.eq.s32.totalorder %s16, 0
    %p130 = por %p128, %p129
    %p131 = scmp.ne.s32.totalorder %s123, %s125
    %p132 = scmp.eq.s32.totalorder %s21, 1
    %p133 = por %p131, %p132
    %p134 = scmp.ne.s32.totalorder %s125, %s126
    %p135 = scmp.eq.s32.totalorder %s21, 0
    %p136 = por %p134, %p135
    %p137 = scmp.ne.s32.totalorder %s125, %s126
    %p138 = scmp.eq.s32.totalorder %s22, 1
    %p139 = por %p137, %p138
    %p141 = scmp.ne.s32.totalorder %s126, %s140
    %p142 = scmp.eq.s32.totalorder %s22, 0
    %p143 = por %p141, %p142
    %s145 = sadd.s32 %s144, 1
    %p148 = scmp.eq.s32.totalorder %s16, 1
    %p149 = scmp.ne.s32.totalorder %s144, %s146
    %p150 = scmp.eq.s32.totalorder %s16, 0
    %p151 = por %p149, %p150
    %p152 = scmp.ne.s32.totalorder %s144, %s146
    %p153 = scmp.eq.s32.totalorder %s21, 1
    %p154 = por %p152, %p153
    %p155 = scmp.ne.s32.totalorder %s146, %s147
    %p156 = scmp.eq.s32.totalorder %s21, 0
    %p157 = por %p155, %p156
    %p158 = scmp.ne.s32.totalorder %s146, %s147
    %p159 = scmp.eq.s32.totalorder %s22, 1
    %p160 = por %p158, %p159
    %p162 = scmp.ne.s32.totalorder %s147, %s161
    %p163 = scmp.eq.s32.totalorder %s22, 0
    %p164 = por %p162, %p163
    %s166 = sadd.s32 %s165, 1
    %p169 = scmp.eq.s32.totalorder %s16, 1
    %p170 = scmp.ne.s32.totalorder %s165, %s167
    %p171 = scmp.eq.s32.totalorder %s16, 0
    %p172 = por %p170, %p171
    %p173 = scmp.ne.s32.totalorder %s165, %s167
    %p174 = scmp.eq.s32.totalorder %s21, 1
    %p175 = por %p173, %p174
    %p176 = scmp.ne.s32.totalorder %s167, %s168
    %p177 = scmp.eq.s32.totalorder %s21, 0
    %p178 = por %p176, %p177
    %p179 = scmp.ne.s32.totalorder %s167, %s168
    %p180 = scmp.eq.s32.totalorder %s22, 1
    %p181 = por %p179, %p180
    %p183 = scmp.ne.s32.totalorder %s168, %s182
    %p184 = scmp.eq.s32.totalorder %s22, 0
    %p185 = por %p183, %p184
    %s187 = sadd.s32 %s186, 1
    %p190 = scmp.eq.s32.totalorder %s16, 1
    %p191 = scmp.ne.s32.totalorder %s186, %s188
    %p192 = scmp.eq.s32.totalorder %s16, 0
    %p193 = por %p191, %p192
    %p194 = scmp.ne.s32.totalorder %s186, %s188
    %p195 = scmp.eq.s32.totalorder %s21, 1
    %p196 = por %p194, %p195
    %p197 = scmp.ne.s32.totalorder %s188, %s189
    %p198 = scmp.eq.s32.totalorder %s21, 0
    %p199 = por %p197, %p198
    %p200 = scmp.ne.s32.totalorder %s188, %s189
    %p201 = scmp.eq.s32.totalorder %s22, 1
    %p202 = por %p200, %p201
    %p204 = scmp.ne.s32.totalorder %s189, %s203
    %p205 = scmp.eq.s32.totalorder %s22, 0
    %p206 = por %p204, %p205
    %s207 = ssub.s32 %s16, %s23
    %p208 = scmp.eq.s32.totalorder %s207, 0
    %s210 = sadd.s32 %s209, 1
    %s211 = scalar_select %p208, %s209, %s210
    %p214 = pneg %p208
    %p215 = scmp.eq.s32.totalorder %s16, 1
    %p216 = por %p214, %p215
    %p217 = scmp.ne.s32.totalorder %s209, %s212
    %p218 = scmp.eq.s32.totalorder %s16, 0
    %p219 = por %p217, %p218
    %p220 = scmp.ne.s32.totalorder %s209, %s212
    %p221 = scmp.eq.s32.totalorder %s21, 1
    %p222 = por %p220, %p221
    %p223 = scmp.ne.s32.totalorder %s212, %s213
    %p224 = scmp.eq.s32.totalorder %s21, 0
    %p225 = por %p223, %p224
    %p226 = scmp.ne.s32.totalorder %s212, %s213
    %p227 = scmp.eq.s32.totalorder %s22, 1
    %p228 = por %p226, %p227
    %p230 = scmp.ne.s32.totalorder %s213, %s229
    %p231 = scmp.eq.s32.totalorder %s22, 0
    %p232 = por %p230, %p231
    %s233 = ssub.s32 %s16, %s23
    %p234 = scmp.eq.s32.totalorder %s233, 0
    %s236 = sadd.s32 %s235, 1
    %s237 = scalar_select %p234, %s235, %s236
    %p240 = pneg %p234
    %p241 = scmp.eq.s32.totalorder %s16, 1
    %p242 = por %p240, %p241
    %p243 = scmp.ne.s32.totalorder %s235, %s238
    %p244 = scmp.eq.s32.totalorder %s16, 0
    %p245 = por %p243, %p244
    %p246 = scmp.ne.s32.totalorder %s235, %s238
    %p247 = scmp.eq.s32.totalorder %s21, 1
    %p248 = por %p246, %p247
    %p249 = scmp.ne.s32.totalorder %s238, %s239
    %p250 = scmp.eq.s32.totalorder %s21, 0
    %p251 = por %p249, %p250
    %p252 = scmp.ne.s32.totalorder %s238, %s239
    %p253 = scmp.eq.s32.totalorder %s22, 1
    %p254 = por %p252, %p253
    %p256 = scmp.ne.s32.totalorder %s239, %s255
    %p257 = scmp.eq.s32.totalorder %s22, 0
    %p258 = por %p256, %p257
    %p259 = scmp.le.s32.totalorder 1, %s16
    %p260 = scmp.lt.s32.totalorder %s16, 3
    %p261 = pnand %p259, %p260
    %p262 = pneg %p261
    // Predicated region
    $region9: #{recognizer_sage_forward.5} parent=5 // pred_check
      _
    $region10: #{recognizer_sage_forward.5} parent=5 // pred_check_branch
      %264 = sbr.rel (%p261) target = $region12
    $region11: #{recognizer_sage_forward.5} parent=5 // pred_region
      %s265 = ssub.s32 %s16, 1
      // Predicated region
      $region13: #{recognizer_sage_forward.5} parent=11 // pred_check
        %p266 = pneg %p115
      $region14: #{recognizer_sage_forward.5} parent=11 // pred_check_branch
        %268 = sbr.rel (%p266) target = $region16
      $region15: #{recognizer_sage_forward.5} parent=11 // pred_region
        _
      $region16: #{recognizer_sage_forward.5} parent=11 // pred_fallthru
        _
      // Predicated region
      $region17: #{recognizer_sage_forward.5} parent=11 // pred_check
        %p269 = pneg %p136
      $region18: #{recognizer_sage_forward.5} parent=11 // pred_check_branch
        %271 = sbr.rel (%p269) target = $region20
      $region19: #{recognizer_sage_forward.5} parent=11 // pred_region
        _
      $region20: #{recognizer_sage_forward.5} parent=11 // pred_fallthru
        _
      // Predicated region
      $region21: #{recognizer_sage_forward.5} parent=11 // pred_check
        %p272 = pneg %p157
      $region22: #{recognizer_sage_forward.5} parent=11 // pred_check_branch
        %274 = sbr.rel (%p272) target = $region24
      $region23: #{recognizer_sage_forward.5} parent=11 // pred_region
        _
      $region24: #{recognizer_sage_forward.5} parent=11 // pred_fallthru
        _
      // Predicated region
      $region25: #{recognizer_sage_forward.5} parent=11 // pred_check
        %p275 = pneg %p178
      $region26: #{recognizer_sage_forward.5} parent=11 // pred_check_branch
        %277 = sbr.rel (%p275) target = $region28
      $region27: #{recognizer_sage_forward.5} parent=11 // pred_region
        _
      $region28: #{recognizer_sage_forward.5} parent=11 // pred_fallthru
        _
      // Predicated region
      $region29: #{recognizer_sage_forward.5} parent=11 // pred_check
        %p278 = pneg %p199
      $region30: #{recognizer_sage_forward.5} parent=11 // pred_check_branch
        %280 = sbr.rel (%p278) target = $region32
      $region31: #{recognizer_sage_forward.5} parent=11 // pred_region
        _
      $region32: #{recognizer_sage_forward.5} parent=11 // pred_fallthru
        _
    $region12: #{recognizer_sage_forward.5} parent=5 // pred_fallthru
      _
    %p281 = scmp.lt.s32.totalorder %s16, 2
    // Predicated region
    $region33: #{recognizer_sage_forward.5} parent=5 // pred_check
      %p282 = pneg %p281
    $region34: #{recognizer_sage_forward.5} parent=5 // pred_check_branch
      %284 = sbr.rel (%p282) target = $region36
    $region35: #{recognizer_sage_forward.5} parent=5 // pred_region
      // Predicated region
      $region37: #{recognizer_sage_forward.5} parent=35 // pred_check
        %p285 = pneg %p36
      $region38: #{recognizer_sage_forward.5} parent=35 // pred_check_branch
        %287 = sbr.rel (%p285) target = $region40
      $region39: #{recognizer_sage_forward.5} parent=35 // pred_region
        %p288 = scmp.lt.s32.totalorder %s16, 1
        %s289 = scalar_select %p288, %s16, 1
        %s290 = smul.addr %s289, 4
        %s291 = smul.addr %s290, 8
        %s292 = scalar_lea.vmem %s0, %s291
      $region40: #{recognizer_sage_forward.5} parent=35 // pred_fallthru
        _
      // Predicated region
      $region41: #{recognizer_sage_forward.5} parent=35 // pred_check
        %p293 = pneg %p62
      $region42: #{recognizer_sage_forward.5} parent=35 // pred_check_branch
        %295 = sbr.rel (%p293) target = $region44
      $region43: #{recognizer_sage_forward.5} parent=35 // pred_region
        %p296 = scmp.lt.s32.totalorder %s16, 1
        %s297 = scalar_select %p296, %s16, 1
        %s298 = smul.addr %s297, 4
        %s299 = smul.addr %s298, 8
        %s300 = scalar_lea.vmem %s1, %s299
      $region44: #{recognizer_sage_forward.5} parent=35 // pred_fallthru
        _
      // Predicated region
      $region45: #{recognizer_sage_forward.5} parent=35 // pred_check
        %p301 = pneg %p88
      $region46: #{recognizer_sage_forward.5} parent=35 // pred_check_branch
        %303 = sbr.rel (%p301) target = $region48
      $region47: #{recognizer_sage_forward.5} parent=35 // pred_region
        %p304 = scmp.lt.s32.totalorder %s16, 1
        %s305 = scalar_select %p304, %s16, 1
        %s306 = smul.addr %s305, 4
        %s307 = smul.addr %s306, 8
        %s308 = scalar_lea.vmem %s2, %s307
      $region48: #{recognizer_sage_forward.5} parent=35 // pred_fallthru
        _
    $region36: #{recognizer_sage_forward.5} parent=5 // pred_fallthru
      _
    %p309 = scmp.le.s32.totalorder 1, %s16
    %p310 = scmp.lt.s32.totalorder %s16, 3
    %p311 = pnand %p309, %p310
    %p312 = pneg %p311
    // Predicated region
    $region49: #{recognizer_sage_forward.5} parent=5 // pred_check
      _
    $region50: #{recognizer_sage_forward.5} parent=5 // pred_check_branch
      %314 = sbr.rel (%p311) target = $region52
    $region51: #{recognizer_sage_forward.5} parent=5 // pred_region
      %s315 = ssub.s32 %s16, 1
      %p316 = scmp.lt.s32.totalorder %s21, 1
      %s317 = scalar_select %p316, %s21, 1
      %s318 = smul.addr %s317, 4
      %s319 = smul.addr %s318, 8
      %s320 = scalar_lea.vmem %s0, %s319
      %p321 = pneg %p42
      %p322 = pneg %p39
      %p323 = scmp.lt.s32.totalorder %s21, 1
      %s324 = scalar_select %p323, %s21, 1
      %s325 = smul.addr %s324, 4
      %s326 = smul.addr %s325, 8
      %s327 = scalar_lea.vmem %s1, %s326
      %p328 = pneg %p68
      %p329 = pneg %p65
      %p330 = scmp.lt.s32.totalorder %s21, 1
      %s331 = scalar_select %p330, %s21, 1
      %s332 = smul.addr %s331, 4
      %s333 = smul.addr %s332, 8
      %s334 = scalar_lea.vmem %s2, %s333
      %p335 = pneg %p94
      %p336 = pneg %p91
      %p337 = pneg %p115
      %p338 = pneg %p112
      %p339 = pneg %p136
      %p340 = pneg %p133
      %p341 = pneg %p157
      %p342 = pneg %p154
      %p343 = pneg %p178
      %p344 = pneg %p175
      %p345 = pneg %p199
      %p346 = pneg %p196
      %p347 = pneg %p225
      %p348 = pneg %p222
      %p349 = scmp.lt.s32.totalorder %s21, 1
      %s350 = scalar_select %p349, %s21, 1
      %s351 = smul.addr %s350, 4
      %s352 = smul.addr %s351, 8
      %s353 = scalar_lea.vmem %s8, %s352
      %p354 = pneg %p251
      %p355 = pneg %p248
      %p356 = scmp.lt.s32.totalorder %s21, 1
      %s357 = scalar_select %p356, %s21, 1
      %s358 = scalar_lea.vmem %s9, %s357
      %p359 = scmp.lt.s32.totalorder %s21, 1
      %s360 = scalar_select %p359, %s21, 1
      %s361 = smul.addr %s360, 4
      %s362 = smul.addr %s361, 8
      %s363 = scalar_lea.vmem %s0, %s362
      %p364 = scmp.lt.s32.totalorder %s21, 1
      %s365 = scalar_select %p364, %s21, 1
      %s366 = smul.addr %s365, 4
      %s367 = smul.addr %s366, 8
      %s368 = scalar_lea.vmem %s1, %s367
      %p369 = scmp.lt.s32.totalorder %s21, 1
      %s370 = scalar_select %p369, %s21, 1
      %s371 = smul.addr %s370, 4
      %s372 = smul.addr %s371, 8
      %s373 = scalar_lea.vmem %s2, %s372
      %p374 = scmp.lt.s32.totalorder %s21, 1
      %s375 = scalar_select %p374, %s21, 1
      %s376 = smul.addr %s375, 4
      %s377 = smul.addr %s376, 8
      %s378 = scalar_lea.vmem %s8, %s377
      %p379 = scmp.lt.s32.totalorder %s21, 1
      %s380 = scalar_select %p379, %s21, 1
      %s381 = scalar_lea.vmem %s9, %s380
      %v382 = vld [vmem:[%s363] sm:$0xff]
      %v383 = vld [vmem:[%s363 + $0x8] sm:$0xff]
      %v384 = vld [vmem:[%s363 + $0x10] sm:$0xff]
      %v385 = vld [vmem:[%s363 + $0x18] sm:$0xff]
      %v386 = vld [vmem:[%s368] sm:$0xff]
      %v387 = vld [vmem:[%s368 + $0x8] sm:$0xff]
      %v388 = vld [vmem:[%s368 + $0x10] sm:$0xff]
      %v389 = vld [vmem:[%s368 + $0x18] sm:$0xff]
      %v390 = vld [vmem:[%s373] sm:$0xff]
      %v391 = vld [vmem:[%s373 + $0x8] sm:$0xff]
      %v392 = vld [vmem:[%s373 + $0x10] sm:$0xff]
      %v393 = vld [vmem:[%s373 + $0x18] sm:$0xff]
      %395 = vset.pattern.permute.xlu0 0
      %396 = vperm.xlu0 %395, %v386
      %v397 = vpop.permute.xlu0 %396
      %400 = vset.pattern.permute.xlu0 0
      %401 = vperm.xlu0 %400, %v387
      %v402 = vpop.permute.xlu0 %401
      %405 = vset.pattern.permute.xlu0 0
      %406 = vperm.xlu0 %405, %v388
      %v407 = vpop.permute.xlu0 %406
      %410 = vset.pattern.permute.xlu0 0
      %411 = vperm.xlu0 %410, %v389
      %v412 = vpop.permute.xlu0 %411
      %v414 = vmul.f32 %v382, %v397
      %v415 = vmul.f32 %v383, %v402
      %v416 = vmul.f32 %v384, %v407
      %v417 = vmul.f32 %v385, %v412
      %vm418 = vcmask 261120
      %v420 = vsel %vm418, %v390, 0
      %v423 = vsel %vm418, %v391, 0
      %v426 = vsel %vm418, %v392, 0
      %v429 = vsel %vm418, %v393, 0
      %431 = vmatpush.msra.mxu0 0.0
      %432 = vmatpush.msra.mxu0 0.0
      %433 = vmatpush.msra.mxu0 0.0
      %434 = vmatpush.msra.mxu0 0.0
      %435 = vmatpush.msra.mxu0 0.0
      %436 = vmatpush.msra.mxu0 0.0
      %437 = vmatpush.msra.mxu0 0.0
      %438 = vmatpush.msra.mxu0 0.0
      %439 = vmatpush.msra.mxu0 0.0
      %440 = vmatpush.msra.mxu0 0.0
      %441 = vmatpush.msra.mxu0 0.0
      %442 = vmatpush.msra.mxu0 0.0
      %443 = vmatpush.msra.mxu0 %v417
      %444 = vmatpush.msra.mxu0 %v416
      %445 = vmatpush.msra.mxu0 %v415
      %446 = vmatpush.msra.mxu0 %v414
      %447 = vmatmul.f32.gmra.mxu0 %v420
      %v448 = vpop.f32.mrf.mxu0
      %v449 = vadd.f32 0.0, %v448
      %450 = vmatmul.f32.gmra.mxu0 %v423
      %v451 = vpop.f32.mrf.mxu0
      %v452 = vadd.f32 0.0, %v451
      %453 = vmatmul.f32.gmra.mxu0 %v426
      %v454 = vpop.f32.mrf.mxu0
      %v455 = vadd.f32 0.0, %v454
      %456 = vmatmul.f32.gmra.mxu0 %v429
      %v457 = vpop.f32.mrf.mxu0
      %v458 = vadd.f32 0.0, %v457
      %459 = vdwg.mxu0
      %460 = vmatpush.msra.mxu0 0.0
      %461 = vmatpush.msra.mxu0 0.0
      %462 = vmatpush.msra.mxu0 0.0
      %463 = vmatpush.msra.mxu0 0.0
      %464 = vmatpush.msra.mxu0 0.0
      %465 = vmatpush.msra.mxu0 0.0
      %466 = vmatpush.msra.mxu0 0.0
      %467 = vmatpush.msra.mxu0 0.0
      %468 = vmatpush.msra.mxu0 0.0
      %469 = vmatpush.msra.mxu0 0.0
      %470 = vmatpush.msra.mxu0 0.0
      %471 = vmatpush.msra.mxu0 0.0
      %472 = vmatpush.msra.mxu0 %v389
      %473 = vmatpush.msra.mxu0 %v388
      %474 = vmatpush.msra.mxu0 %v387
      %475 = vmatpush.msra.mxu0 %v386
      %476 = vmatmul.f32.gmra.mxu0 %v420
      %v477 = vpop.f32.mrf.mxu0
      %v478 = vadd.f32 0.0, %v477
      %479 = vmatmul.f32.gmra.mxu0 %v423
      %v480 = vpop.f32.mrf.mxu0
      %v481 = vadd.f32 0.0, %v480
      %482 = vmatmul.f32.gmra.mxu0 %v426
      %v483 = vpop.f32.mrf.mxu0
      %v484 = vadd.f32 0.0, %v483
      %485 = vmatmul.f32.gmra.mxu0 %v429
      %v486 = vpop.f32.mrf.mxu0
      %v487 = vadd.f32 0.0, %v486
      %488 = vdwg.mxu0
      %v489 = vmax.f32 %v478, 1.0
      %v490 = vmax.f32 %v481, 1.0
      %v491 = vmax.f32 %v484, 1.0
      %v492 = vmax.f32 %v487, 1.0
      %v493 = vrcp.pop %v489
      %v494 = vrcp.pop %v490
      %v495 = vrcp.pop %v491
      %v496 = vrcp.pop %v492
      %498 = vset.pattern.permute.xlu0 0
      %499 = vperm.xlu0 %498, %v493
      %v500 = vpop.permute.xlu0 %499
      %503 = vset.pattern.permute.xlu0 0
      %504 = vperm.xlu0 %503, %v494
      %v505 = vpop.permute.xlu0 %504
      %508 = vset.pattern.permute.xlu0 0
      %509 = vperm.xlu0 %508, %v495
      %v510 = vpop.permute.xlu0 %509
      %513 = vset.pattern.permute.xlu0 0
      %514 = vperm.xlu0 %513, %v496
      %v515 = vpop.permute.xlu0 %514
      %v517 = vmul.f32 %v449, %v500
      %v518 = vmul.f32 %v452, %v505
      %v519 = vmul.f32 %v455, %v510
      %v520 = vmul.f32 %v458, %v515
      %v521 = vld [vmem:[%s3] sm:$0x3f]
      %v522 = vld [vmem:[%s4] sm:$0x3f]
      %vm523 = vcmask 48128
      %v525 = vsel %vm523, %v414, 0
      %v528 = vsel %vm523, %v415, 0
      %v531 = vsel %vm523, %v416, 0
      %v534 = vsel %vm523, %v417, 0
      %vm536 = vcmask 1045504
      %v538 = vsel %vm536, %v522, 0
      %540 = vmatpush.msra.mxu0 0.0
      %541 = vmatpush.msra.mxu0 0.0
      %542 = vmatpush.msra.mxu0 0.0
      %543 = vmatpush.msra.mxu0 0.0
      %544 = vmatpush.msra.mxu0 0.0
      %545 = vmatpush.msra.mxu0 0.0
      %546 = vmatpush.msra.mxu0 0.0
      %547 = vmatpush.msra.mxu0 0.0
      %548 = vmatpush.msra.mxu0 0.0
      %549 = vmatpush.msra.mxu0 0.0
      %550 = vmatpush.msra.mxu0 0.0
      %551 = vmatpush.msra.mxu0 0.0
      %552 = vmatpush.msra.mxu0 0.0
      %553 = vmatpush.msra.mxu0 0.0
      %554 = vmatpush.msra.mxu0 0.0
      %555 = vmatpush.msra.mxu0 %v538
      %556 = vmatmul.f32.gmra.mxu0 %v525
      %v557 = vpop.f32.mrf.mxu0
      %v558 = vadd.f32 0.0, %v557
      %559 = vmatmul.f32.gmra.mxu0 %v528
      %v560 = vpop.f32.mrf.mxu0
      %v561 = vadd.f32 0.0, %v560
      %562 = vmatmul.f32.gmra.mxu0 %v531
      %v563 = vpop.f32.mrf.mxu0
      %v564 = vadd.f32 0.0, %v563
      %565 = vmatmul.f32.gmra.mxu0 %v534
      %v566 = vpop.f32.mrf.mxu0
      %v567 = vadd.f32 0.0, %v566
      %568 = vdwg.mxu0
      %v570 = vsel %vm523, %v517, 0
      %v573 = vsel %vm523, %v518, 0
      %v576 = vsel %vm523, %v519, 0
      %v579 = vsel %vm523, %v520, 0
      %v582 = vsel %vm536, %v521, 0
      %584 = vmatpush.msra.mxu0 0.0
      %585 = vmatpush.msra.mxu0 0.0
      %586 = vmatpush.msra.mxu0 0.0
      %587 = vmatpush.msra.mxu0 0.0
      %588 = vmatpush.msra.mxu0 0.0
      %589 = vmatpush.msra.mxu0 0.0
      %590 = vmatpush.msra.mxu0 0.0
      %591 = vmatpush.msra.mxu0 0.0
      %592 = vmatpush.msra.mxu0 0.0
      %593 = vmatpush.msra.mxu0 0.0
      %594 = vmatpush.msra.mxu0 0.0
      %595 = vmatpush.msra.mxu0 0.0
      %596 = vmatpush.msra.mxu0 0.0
      %597 = vmatpush.msra.mxu0 0.0
      %598 = vmatpush.msra.mxu0 0.0
      %599 = vmatpush.msra.mxu0 %v582
      %600 = vmatmul.f32.gmra.mxu0 %v570
      %v601 = vpop.f32.mrf.mxu0
      %v602 = vadd.f32 %v558, %v601
      %603 = vmatmul.f32.gmra.mxu0 %v573
      %v604 = vpop.f32.mrf.mxu0
      %v605 = vadd.f32 %v561, %v604
      %606 = vmatmul.f32.gmra.mxu0 %v576
      %v607 = vpop.f32.mrf.mxu0
      %v608 = vadd.f32 %v564, %v607
      %609 = vmatmul.f32.gmra.mxu0 %v579
      %v610 = vpop.f32.mrf.mxu0
      %v611 = vadd.f32 %v567, %v610
      %612 = vdwg.mxu0
      %v613 = vld [vmem:[%s5] sm:$0x1]
      %v615 = vperm.slane %v613, 0
      %v617 = vadd.f32 %v602, %v615
      %v618 = vadd.f32 %v605, %v615
      %v619 = vadd.f32 %v608, %v615
      %v620 = vadd.f32 %v611, %v615
      %v621 = vmul.f32 %v617, 0.5
      %v622 = vmul.f32 %v618, 0.5
      %v623 = vmul.f32 %v619, 0.5
      %v624 = vmul.f32 %v620, 0.5
      %v625 = vmul.f32 %v617, 0.044715
      %v626 = vmul.f32 %v618, 0.044715
      %v627 = vmul.f32 %v619, 0.044715
      %v628 = vmul.f32 %v620, 0.044715
      %v629 = vmul.f32 %v625, %v617
      %v630 = vmul.f32 %v626, %v618
      %v631 = vmul.f32 %v627, %v619
      %v632 = vmul.f32 %v628, %v620
      %v633 = vmul.f32 %v629, %v617
      %v634 = vmul.f32 %v630, %v618
      %v635 = vmul.f32 %v631, %v619
      %v636 = vmul.f32 %v632, %v620
      %v637 = vadd.f32 %v617, %v633
      %v638 = vadd.f32 %v618, %v634
      %v639 = vadd.f32 %v619, %v635
      %v640 = vadd.f32 %v620, %v636
      %v641 = vmul.f32 %v637, 0.7978846
      %v642 = vmul.f32 %v638, 0.7978846
      %v643 = vmul.f32 %v639, 0.7978846
      %v644 = vmul.f32 %v640, 0.7978846
      %v645 = vtanh.pop %v641
      %v646 = vtanh.pop %v642
      %v647 = vtanh.pop %v643
      %v648 = vtanh.pop %v644
      %v649 = vadd.f32 %v645, 1.0
      %v650 = vadd.f32 %v646, 1.0
      %v651 = vadd.f32 %v647, 1.0
      %v652 = vadd.f32 %v648, 1.0
      %v653 = vmul.f32 %v621, %v649
      %v654 = vmul.f32 %v622, %v650
      %v655 = vmul.f32 %v623, %v651
      %v656 = vmul.f32 %v624, %v652
      %v657 = vld [vmem:[%s6] sm:$0xff]
      %v658 = vld [vmem:[%s6 + $0x8] sm:$0xff]
      %v659 = vld [vmem:[%s6 + $0x10] sm:$0xff]
      %v660 = vld [vmem:[%s6 + $0x18] sm:$0xff]
      %v661 = vld [vmem:[%s6 + $0x20] sm:$0xff]
      %v662 = vld [vmem:[%s6 + $0x28] sm:$0xff]
      %v663 = vld [vmem:[%s6 + $0x30] sm:$0xff]
      %v664 = vld [vmem:[%s6 + $0x38] sm:$0xff]
      %vm665 = vcmask 523264
      %v667 = vsel %vm665, %v653, 0
      %v670 = vsel %vm665, %v654, 0
      %v673 = vsel %vm665, %v655, 0
      %v676 = vsel %vm665, %v656, 0
      %678 = vmatpush.msra.mxu0 0.0
      %679 = vmatpush.msra.mxu0 0.0
      %680 = vmatpush.msra.mxu0 0.0
      %681 = vmatpush.msra.mxu0 0.0
      %682 = vmatpush.msra.mxu0 0.0
      %683 = vmatpush.msra.mxu0 0.0
      %684 = vmatpush.msra.mxu0 0.0
      %685 = vmatpush.msra.mxu0 0.0
      %686 = vmatpush.msra.mxu0 %v664
      %687 = vmatpush.msra.mxu0 %v663
      %688 = vmatpush.msra.mxu0 %v662
      %689 = vmatpush.msra.mxu0 %v661
      %690 = vmatpush.msra.mxu0 %v660
      %691 = vmatpush.msra.mxu0 %v659
      %692 = vmatpush.msra.mxu0 %v658
      %693 = vmatpush.msra.mxu0 %v657
      %694 = vmatmul.f32.gmra.mxu0 %v667
      %v695 = vpop.f32.mrf.mxu0
      %v696 = vadd.f32 0.0, %v695
      %697 = vmatmul.f32.gmra.mxu0 %v670
      %v698 = vpop.f32.mrf.mxu0
      %v699 = vadd.f32 0.0, %v698
      %700 = vmatmul.f32.gmra.mxu0 %v673
      %v701 = vpop.f32.mrf.mxu0
      %v702 = vadd.f32 0.0, %v701
      %703 = vmatmul.f32.gmra.mxu0 %v676
      %v704 = vpop.f32.mrf.mxu0
      %v705 = vadd.f32 0.0, %v704
      %706 = vdwg.mxu0
      %v707 = vtanh.pop %v696
      %v708 = vtanh.pop %v699
      %v709 = vtanh.pop %v702
      %v710 = vtanh.pop %v705
      %712 = vset.pattern.permute.xlu0 0
      %713 = vperm.xlu0 %712, %v707
      %v714 = vpop.permute.xlu0 %713
      %717 = vset.pattern.permute.xlu0 0
      %718 = vperm.xlu0 %717, %v708
      %v719 = vpop.permute.xlu0 %718
      %722 = vset.pattern.permute.xlu0 0
      %723 = vperm.xlu0 %722, %v709
      %v724 = vpop.permute.xlu0 %723
      %727 = vset.pattern.permute.xlu0 0
      %728 = vperm.xlu0 %727, %v710
      %v729 = vpop.permute.xlu0 %728
      %v731 = vmul.f32 %v653, %v714
      %v732 = vmul.f32 %v654, %v719
      %v733 = vmul.f32 %v655, %v724
      %v734 = vmul.f32 %v656, %v729
      %735 = vst.msk [vmem:[%s378] sm:$0xff] %vm665, %v731
      %736 = vst.msk [vmem:[%s378 + $0x8] sm:$0xff] %vm665, %v732
      %737 = vst.msk [vmem:[%s378 + $0x10] sm:$0xff] %vm665, %v733
      %738 = vst.msk [vmem:[%s378 + $0x18] sm:$0xff] %vm665, %v734
      %v739 = vld [vmem:[%s7] sm:$0x1]
      %v741 = vsel %vm665, %v739, 0
      %743 = vmatpush.xpose.msra.mxu0 0.0
      %744 = vmatpush.xpose.msra.mxu0 0.0
      %745 = vmatpush.xpose.msra.mxu0 0.0
      %746 = vmatpush.xpose.msra.mxu0 0.0
      %747 = vmatpush.xpose.msra.mxu0 0.0
      %748 = vmatpush.xpose.msra.mxu0 0.0
      %749 = vmatpush.xpose.msra.mxu0 0.0
      %750 = vmatpush.xpose.msra.mxu0 0.0
      %751 = vmatpush.xpose.msra.mxu0 0.0
      %752 = vmatpush.xpose.msra.mxu0 0.0
      %753 = vmatpush.xpose.msra.mxu0 0.0
      %754 = vmatpush.xpose.msra.mxu0 0.0
      %755 = vmatpush.xpose.msra.mxu0 %v676
      %756 = vmatpush.xpose.msra.mxu0 %v673
      %757 = vmatpush.xpose.msra.mxu0 %v670
      %758 = vmatpush.xpose.msra.mxu0 %v667
      %759 = vmatmul.f32.gmra.mxu0 %v741
      %v760 = vpop.f32.mrf.mxu0
      %v761 = vadd.f32 0.0, %v760
      %762 = vdwg.mxu0
      %v763 = vtanh.pop %v761
      %vm764 = vcmask 253952
      %765 = vst.msk [vmem:[%s381] sm:$0x1] %vm764, %v763
      %p766 = scmp.lt.s32.totalorder %s21, 1
      %s767 = scalar_select %p766, %s21, 1
      %s768 = smul.addr %s767, 4
      %s769 = smul.addr %s768, 8
      %s770 = scalar_lea.vmem %s8, %s769
      %p771 = scmp.lt.s32.totalorder %s21, 1
      %s772 = scalar_select %p771, %s21, 1
      %s773 = scalar_lea.vmem %s9, %s772
      // Predicated region
      $region53: #{recognizer_sage_forward.5} parent=51 // pred_check
        %p774 = pneg %p222
      $region54: #{recognizer_sage_forward.5} parent=51 // pred_check_branch
        %776 = sbr.rel (%p774) target = $region56
      $region55: #{recognizer_sage_forward.5} parent=51 // pred_region
        _
      $region56: #{recognizer_sage_forward.5} parent=51 // pred_fallthru
        _
      // Predicated region
      $region57: #{recognizer_sage_forward.5} parent=51 // pred_check
        %p777 = pneg %p248
      $region58: #{recognizer_sage_forward.5} parent=51 // pred_check_branch
        %779 = sbr.rel (%p777) target = $region60
      $region59: #{recognizer_sage_forward.5} parent=51 // pred_region
        _
      $region60: #{recognizer_sage_forward.5} parent=51 // pred_fallthru
        _
    $region52: #{recognizer_sage_forward.5} parent=5 // pred_fallthru
      _
    %p780 = scmp.le.s32.totalorder 2, %s16
    // Predicated region
    $region61: #{recognizer_sage_forward.5} parent=5 // pred_check
      %p781 = pneg %p780
    $region62: #{recognizer_sage_forward.5} parent=5 // pred_check_branch
      %783 = sbr.rel (%p781) target = $region64
    $region63: #{recognizer_sage_forward.5} parent=5 // pred_region
      %s784 = ssub.s32 %s16, 2
      // Predicated region
      $region65: #{recognizer_sage_forward.5} parent=63 // pred_check
        %p785 = pneg %p228
      $region66: #{recognizer_sage_forward.5} parent=63 // pred_check_branch
        %787 = sbr.rel (%p785) target = $region68
      $region67: #{recognizer_sage_forward.5} parent=63 // pred_region
        %p788 = scmp.lt.s32.totalorder %s22, 1
        %s789 = scalar_select %p788, %s22, 1
        %s790 = smul.addr %s789, 4
        %s791 = smul.addr %s790, 8
        %s792 = scalar_lea.vmem %s8, %s791
      $region68: #{recognizer_sage_forward.5} parent=63 // pred_fallthru
        _
      // Predicated region
      $region69: #{recognizer_sage_forward.5} parent=63 // pred_check
        %p793 = pneg %p254
      $region70: #{recognizer_sage_forward.5} parent=63 // pred_check_branch
        %795 = sbr.rel (%p793) target = $region72
      $region71: #{recognizer_sage_forward.5} parent=63 // pred_region
        %p796 = scmp.lt.s32.totalorder %s22, 1
        %s797 = scalar_select %p796, %s22, 1
        %s798 = scalar_lea.vmem %s9, %s797
      $region72: #{recognizer_sage_forward.5} parent=63 // pred_fallthru
        _
    $region64: #{recognizer_sage_forward.5} parent=5 // pred_fallthru
      _
  $region6: #{recognizer_sage_forward.5} parent=0 // loop_footer
    %s20 = sadd.s32 1, %s16
  $region7: #{recognizer_sage_forward.5} parent=0 // loop_footer_branch
    %15 = sbr.rel target = $region3
  $region8: #{recognizer_sage_forward.5} parent=0 // loop_exit
    _

// kernel: recognizer_sage_forward.9
$region0: #{recognizer_sage_forward.9}
  #allocation0 [shape = 'u32[]', space=smem, size = 0x4, offset = 0x4, fixed_abs, tag = 'smem constant byte address 0x4 - core index']
  #allocation1 [shape = 'u32[72,128]{1,0:T(1,128)}', space=vmem, size = 0x9000, scoped, tag = 'internal scratch']
  %s0 = inlined_call_operand.vmem [shape: f32[2,32,64], index: 0, kind: input, shape index: {}]
  %s1 = inlined_call_operand.vmem [shape: f32[2,32,1], index: 1, kind: input, shape index: {}]
  %s2 = inlined_call_operand.vmem [shape: f32[2,1,128], index: 2, kind: input, shape index: {}]
  %s3 = inlined_call_operand.vmem [shape: f32[2,1,128], index: 3, kind: input, shape index: {}]
  %s4 = inlined_call_operand.vmem [shape: f32[2,1,128], index: 4, kind: input, shape index: {}]
  %s5 = inlined_call_operand.vmem [shape: f32[128,64], index: 5, kind: input, shape index: {}]
  %s6 = inlined_call_operand.vmem [shape: f32[1,64], index: 6, kind: input, shape index: {}]
  %s7 = inlined_call_operand.vmem [shape: f32[64,64], index: 7, kind: input, shape index: {}]
  %s8 = inlined_call_operand.vmem [shape: f32[1,64], index: 8, kind: input, shape index: {}]
  %s9 = inlined_call_operand.vmem [shape: f32[64,3], index: 9, kind: input, shape index: {}]
  %s10 = inlined_call_operand.vmem [shape: f32[1,3], index: 10, kind: input, shape index: {}]
  %s11 = inlined_call_operand.hbm [shape: f32[2,1,3], index: 11, kind: output, shape index: {}]
  %s12 = sld [smem:[#allocation0]]
  $region77: #{recognizer_sage_forward.9} parent=0
    _
  %s14 = ssub.s32 1, %s12
  %s15 = scalar_select 0, %s14, %s12
  $region1: #{recognizer_sage_forward.9} parent=0
    #allocation2 [shape = 'u8[1024]{0}', space=vmem, size = 0x400, scoped, tag = 'output window, operand 0']
    #allocation3 [shape = 's32[2]{0}', space=sflag, size = 0x8, scoped, tag = 'scoped memory for recognizer_sage_forward.9']
    %16 = vsyncpa [#allocation3], 0
    %s17 = scalar_lea.sflag [#allocation3], 1
    %18 = vsyncpa %s17, 0
    loop: start=0, step=1, limit=4
    $region2: #{recognizer_sage_forward.9} parent=1 // loop_pre_header
      _
    $region3: #{recognizer_sage_forward.9} parent=1 // loop_header
      %s20 = sphi 0, %s24
      %p21 = scmp.ge.s32.totalorder %s20, 4
      %s30 = sphi 0, %s32
      %s33 = sphi 0, %s30
      %s34 = sphi 0, %s33
      %s50 = sphi 0, %s34
      %s56 = sphi 0, %s58
      %s59 = sphi 0, %s56
      %s60 = sphi 0, %s59
      %s76 = sphi 0, %s60
      %s82 = sphi 0, %s84
      %s85 = sphi 0, %s82
      %s86 = sphi 0, %s85
      %s102 = sphi 0, %s86
      %s108 = sphi 0, %s110
      %s111 = sphi 0, %s108
      %s112 = sphi 0, %s111
      %s128 = sphi 0, %s112
      %s134 = sphi 0, %s136
      %s137 = sphi 0, %s134
      %s138 = sphi 0, %s137
      %s154 = sphi 0, %s138
      %s158 = sphi 0, %s158
      %s160 = sphi 0, %s158
      %s161 = sphi 0, %s160
      %s175 = sphi 0, %s161
      %s179 = sphi 0, %s179
      %s181 = sphi 0, %s179
      %s182 = sphi 0, %s181
      %s196 = sphi 0, %s182
      %s200 = sphi 0, %s200
      %s202 = sphi 0, %s200
      %s203 = sphi 0, %s202
      %s217 = sphi 0, %s203
      %s221 = sphi 0, %s221
      %s223 = sphi 0, %s221
      %s224 = sphi 0, %s223
      %s238 = sphi 0, %s224
      %s242 = sphi 0, %s242
      %s244 = sphi 0, %s242
      %s245 = sphi 0, %s244
      %s259 = sphi 0, %s245
      %s263 = sphi 0, %s263
      %s265 = sphi 0, %s263
      %s266 = sphi 0, %s265
      %s280 = sphi 0, %s266
      %s286 = sphi 0, %s288
      %s289 = sphi 0, %s286
      %s290 = sphi 0, %s289
      %s306 = sphi 0, %s290
    $region4: #{recognizer_sage_forward.9} parent=1 // loop_header_branch
      %23 = sbr.rel (%p21) target = $region8
    $region5: #{recognizer_sage_forward.9} parent=1 // loop_body
      %s25 = ssub.s32 %s20, 1
      %s26 = ssub.s32 %s20, 2
      %s27 = sadd.s32 %s20, 1
      %s28 = ssub.s32 %s20, %s27
      %p29 = scmp.eq.s32.totalorder %s28, 0
      %s31 = sadd.s32 %s30, 1
      %s32 = scalar_select %p29, %s30, %s31
      %p35 = pneg %p29
      %p36 = scmp.eq.s32.totalorder %s20, 1
      %p37 = por %p35, %p36
      %p38 = scmp.ne.s32.totalorder %s30, %s33
      %p39 = scmp.eq.s32.totalorder %s20, 0
      %p40 = por %p38, %p39
      %p41 = scmp.ne.s32.totalorder %s30, %s33
      %p42 = scmp.eq.s32.totalorder %s25, 1
      %p43 = por %p41, %p42
      %p44 = scmp.ne.s32.totalorder %s33, %s34
      %p45 = scmp.eq.s32.totalorder %s25, 0
      %p46 = por %p44, %p45
      %p47 = scmp.ne.s32.totalorder %s33, %s34
      %p48 = scmp.eq.s32.totalorder %s26, 1
      %p49 = por %p47, %p48
      %p51 = scmp.ne.s32.totalorder %s34, %s50
      %p52 = scmp.eq.s32.totalorder %s26, 0
      %p53 = por %p51, %p52
      %s54 = ssub.s32 %s20, %s27
      %p55 = scmp.eq.s32.totalorder %s54, 0
      %s57 = sadd.s32 %s56, 1
      %s58 = scalar_select %p55, %s56, %s57
      %p61 = pneg %p55
      %p62 = scmp.eq.s32.totalorder %s20, 1
      %p63 = por %p61, %p62
      %p64 = scmp.ne.s32.totalorder %s56, %s59
      %p65 = scmp.eq.s32.totalorder %s20, 0
      %p66 = por %p64, %p65
      %p67 = scmp.ne.s32.totalorder %s56, %s59
      %p68 = scmp.eq.s32.totalorder %s25, 1
      %p69 = por %p67, %p68
      %p70 = scmp.ne.s32.totalorder %s59, %s60
      %p71 = scmp.eq.s32.totalorder %s25, 0
      %p72 = por %p70, %p71
      %p73 = scmp.ne.s32.totalorder %s59, %s60
      %p74 = scmp.eq.s32.totalorder %s26, 1
      %p75 = por %p73, %p74
      %p77 = scmp.ne.s32.totalorder %s60, %s76
      %p78 = scmp.eq.s32.totalorder %s26, 0
      %p79 = por %p77, %p78
      %s80 = ssub.s32 %s20, %s27
      %p81 = scmp.eq.s32.totalorder %s80, 0
      %s83 = sadd.s32 %s82, 1
      %s84 = scalar_select %p81, %s82, %s83
      %p87 = pneg %p81
      %p88 = scmp.eq.s32.totalorder %s20, 1
      %p89 = por %p87, %p88
      %p90 = scmp.ne.s32.totalorder %s82, %s85
      %p91 = scmp.eq.s32.totalorder %s20, 0
      %p92 = por %p90, %p91
      %p93 = scmp.ne.s32.totalorder %s82, %s85
      %p94 = scmp.eq.s32.totalorder %s25, 1
      %p95 = por %p93, %p94
      %p96 = scmp.ne.s32.totalorder %s85, %s86
      %p97 = scmp.eq.s32.totalorder %s25, 0
      %p98 = por %p96, %p97
      %p99 = scmp.ne.s32.totalorder %s85, %s86
      %p100 = scmp.eq.s32.totalorder %s26, 1
      %p101 = por %p99, %p100
      %p103 = scmp.ne.s32.totalorder %s86, %s102
      %p104 = scmp.eq.s32.totalorder %s26, 0
      %p105 = por %p103, %p104
      %s106 = ssub.s32 %s20, %s27
      %p107 = scmp.eq.s32.totalorder %s106, 0
      %s109 = sadd.s32 %s108, 1
      %s110 = scalar_select %p107, %s108, %s109
      %p113 = pneg %p107
      %p114 = scmp.eq.s32.totalorder %s20, 1
      %p115 = por %p113, %p114
      %p116 = scmp.ne.s32.totalorder %s108, %s111
      %p117 = scmp.eq.s32.totalorder %s20, 0
      %p118 = por %p116, %p117
      %p119 = scmp.ne.s32.totalorder %s108, %s111
      %p120 = scmp.eq.s32.totalorder %s25, 1
      %p121 = por %p119, %p120
      %p122 = scmp.ne.s32.totalorder %s111, %s112
      %p123 = scmp.eq.s32.totalorder %s25, 0
      %p124 = por %p122, %p123
      %p125 = scmp.ne.s32.totalorder %s111, %s112
      %p126 = scmp.eq.s32.totalorder %s26, 1
      %p127 = por %p125, %p126
      %p129 = scmp.ne.s32.totalorder %s112, %s128
      %p130 = scmp.eq.s32.totalorder %s26, 0
      %p131 = por %p129, %p130
      %s132 = ssub.s32 %s20, %s27
      %p133 = scmp.eq.s32.totalorder %s132, 0
      %s135 = sadd.s32 %s134, 1
      %s136 = scalar_select %p133, %s134, %s135
      %p139 = pneg %p133
      %p140 = scmp.eq.s32.totalorder %s20, 1
      %p141 = por %p139, %p140
      %p142 = scmp.ne.s32.totalorder %s134, %s137
      %p143 = scmp.eq.s32.totalorder %s20, 0
      %p144 = por %p142, %p143
      %p145 = scmp.ne.s32.totalorder %s134, %s137
      %p146 = scmp.eq.s32.totalorder %s25, 1
      %p147 = por %p145, %p146
      %p148 = scmp.ne.s32.totalorder %s137, %s138
      %p149 = scmp.eq.s32.totalorder %s25, 0
      %p150 = por %p148, %p149
      %p151 = scmp.ne.s32.totalorder %s137, %s138
      %p152 = scmp.eq.s32.totalorder %s26, 1
      %p153 = por %p151, %p152
      %p155 = scmp.ne.s32.totalorder %s138, %s154
      %p156 = scmp.eq.s32.totalorder %s26, 0
      %p157 = por %p155, %p156
      %s159 = sadd.s32 %s158, 1
      %p162 = scmp.eq.s32.totalorder %s20, 1
      %p163 = scmp.ne.s32.totalorder %s158, %s160
      %p164 = scmp.eq.s32.totalorder %s20, 0
      %p165 = por %p163, %p164
      %p166 = scmp.ne.s32.totalorder %s158, %s160
      %p167 = scmp.eq.s32.totalorder %s25, 1
      %p168 = por %p166, %p167
      %p169 = scmp.ne.s32.totalorder %s160, %s161
      %p170 = scmp.eq.s32.totalorder %s25, 0
      %p171 = por %p169, %p170
      %p172 = scmp.ne.s32.totalorder %s160, %s161
      %p173 = scmp.eq.s32.totalorder %s26, 1
      %p174 = por %p172, %p173
      %p176 = scmp.ne.s32.totalorder %s161, %s175
      %p177 = scmp.eq.s32.totalorder %s26, 0
      %p178 = por %p176, %p177
      %s180 = sadd.s32 %s179, 1
      %p183 = scmp.eq.s32.totalorder %s20, 1
      %p184 = scmp.ne.s32.totalorder %s179, %s181
      %p185 = scmp.eq.s32.totalorder %s20, 0
      %p186 = por %p184, %p185
      %p187 = scmp.ne.s32.totalorder %s179, %s181
      %p188 = scmp.eq.s32.totalorder %s25, 1
      %p189 = por %p187, %p188
      %p190 = scmp.ne.s32.totalorder %s181, %s182
      %p191 = scmp.eq.s32.totalorder %s25, 0
      %p192 = por %p190, %p191
      %p193 = scmp.ne.s32.totalorder %s181, %s182
      %p194 = scmp.eq.s32.totalorder %s26, 1
      %p195 = por %p193, %p194
      %p197 = scmp.ne.s32.totalorder %s182, %s196
      %p198 = scmp.eq.s32.totalorder %s26, 0
      %p199 = por %p197, %p198
      %s201 = sadd.s32 %s200, 1
      %p204 = scmp.eq.s32.totalorder %s20, 1
      %p205 = scmp.ne.s32.totalorder %s200, %s202
      %p206 = scmp.eq.s32.totalorder %s20, 0
      %p207 = por %p205, %p206
      %p208 = scmp.ne.s32.totalorder %s200, %s202
      %p209 = scmp.eq.s32.totalorder %s25, 1
      %p210 = por %p208, %p209
      %p211 = scmp.ne.s32.totalorder %s202, %s203
      %p212 = scmp.eq.s32.totalorder %s25, 0
      %p213 = por %p211, %p212
      %p214 = scmp.ne.s32.totalorder %s202, %s203
      %p215 = scmp.eq.s32.totalorder %s26, 1
      %p216 = por %p214, %p215
      %p218 = scmp.ne.s32.totalorder %s203, %s217
      %p219 = scmp.eq.s32.totalorder %s26, 0
      %p220 = por %p218, %p219
      %s222 = sadd.s32 %s221, 1
      %p225 = scmp.eq.s32.totalorder %s20, 1
      %p226 = scmp.ne.s32.totalorder %s221, %s223
      %p227 = scmp.eq.s32.totalorder %s20, 0
      %p228 = por %p226, %p227
      %p229 = scmp.ne.s32.totalorder %s221, %s223
      %p230 = scmp.eq.s32.totalorder %s25, 1
      %p231 = por %p229, %p230
      %p232 = scmp.ne.s32.totalorder %s223, %s224
      %p233 = scmp.eq.s32.totalorder %s25, 0
      %p234 = por %p232, %p233
      %p235 = scmp.ne.s32.totalorder %s223, %s224
      %p236 = scmp.eq.s32.totalorder %s26, 1
      %p237 = por %p235, %p236
      %p239 = scmp.ne.s32.totalorder %s224, %s238
      %p240 = scmp.eq.s32.totalorder %s26, 0
      %p241 = por %p239, %p240
      %s243 = sadd.s32 %s242, 1
      %p246 = scmp.eq.s32.totalorder %s20, 1
      %p247 = scmp.ne.s32.totalorder %s242, %s244
      %p248 = scmp.eq.s32.totalorder %s20, 0
      %p249 = por %p247, %p248
      %p250 = scmp.ne.s32.totalorder %s242, %s244
      %p251 = scmp.eq.s32.totalorder %s25, 1
      %p252 = por %p250, %p251
      %p253 = scmp.ne.s32.totalorder %s244, %s245
      %p254 = scmp.eq.s32.totalorder %s25, 0
      %p255 = por %p253, %p254
      %p256 = scmp.ne.s32.totalorder %s244, %s245
      %p257 = scmp.eq.s32.totalorder %s26, 1
      %p258 = por %p256, %p257
      %p260 = scmp.ne.s32.totalorder %s245, %s259
      %p261 = scmp.eq.s32.totalorder %s26, 0
      %p262 = por %p260, %p261
      %s264 = sadd.s32 %s263, 1
      %p267 = scmp.eq.s32.totalorder %s20, 1
      %p268 = scmp.ne.s32.totalorder %s263, %s265
      %p269 = scmp.eq.s32.totalorder %s20, 0
      %p270 = por %p268, %p269
      %p271 = scmp.ne.s32.totalorder %s263, %s265
      %p272 = scmp.eq.s32.totalorder %s25, 1
      %p273 = por %p271, %p272
      %p274 = scmp.ne.s32.totalorder %s265, %s266
      %p275 = scmp.eq.s32.totalorder %s25, 0
      %p276 = por %p274, %p275
      %p277 = scmp.ne.s32.totalorder %s265, %s266
      %p278 = scmp.eq.s32.totalorder %s26, 1
      %p279 = por %p277, %p278
      %p281 = scmp.ne.s32.totalorder %s266, %s280
      %p282 = scmp.eq.s32.totalorder %s26, 0
      %p283 = por %p281, %p282
      %s284 = ssub.s32 %s20, %s27
      %p285 = scmp.eq.s32.totalorder %s284, 0
      %s287 = sadd.s32 %s286, 1
      %s288 = scalar_select %p285, %s286, %s287
      %p291 = pneg %p285
      %p292 = scmp.eq.s32.totalorder %s20, 1
      %p293 = por %p291, %p292
      %p294 = scmp.ne.s32.totalorder %s286, %s289
      %p295 = scmp.eq.s32.totalorder %s20, 0
      %p296 = por %p294, %p295
      %p297 = scmp.ne.s32.totalorder %s286, %s289
      %p298 = scmp.eq.s32.totalorder %s25, 1
      %p299 = por %p297, %p298
      %p300 = scmp.ne.s32.totalorder %s289, %s290
      %p301 = scmp.eq.s32.totalorder %s25, 0
      %p302 = por %p300, %p301
      %p303 = scmp.ne.s32.totalorder %s289, %s290
      %p304 = scmp.eq.s32.totalorder %s26, 1
      %p305 = por %p303, %p304
      %p307 = scmp.ne.s32.totalorder %s290, %s306
      %p308 = scmp.eq.s32.totalorder %s26, 0
      %p309 = por %p307, %p308
      %p310 = scmp.le.s32.totalorder 1, %s20
      %p311 = scmp.lt.s32.totalorder %s20, 3
      %p312 = pnand %p310, %p311
      %p313 = pneg %p312
      // Predicated region
      $region9: #{recognizer_sage_forward.9} parent=5 // pred_check
        _
      $region10: #{recognizer_sage_forward.9} parent=5 // pred_check_branch
        %315 = sbr.rel (%p312) target = $region12
      $region11: #{recognizer_sage_forward.9} parent=5 // pred_region
        %s316 = ssub.s32 %s20, 1
        // Predicated region
        $region13: #{recognizer_sage_forward.9} parent=11 // pred_check
          %p317 = pneg %p171
        $region14: #{recognizer_sage_forward.9} parent=11 // pred_check_branch
          %319 = sbr.rel (%p317) target = $region16
        $region15: #{recognizer_sage_forward.9} parent=11 // pred_region
          _
        $region16: #{recognizer_sage_forward.9} parent=11 // pred_fallthru
          _
        // Predicated region
        $region17: #{recognizer_sage_forward.9} parent=11 // pred_check
          %p320 = pneg %p192
        $region18: #{recognizer_sage_forward.9} parent=11 // pred_check_branch
          %322 = sbr.rel (%p320) target = $region20
        $region19: #{recognizer_sage_forward.9} parent=11 // pred_region
          _
        $region20: #{recognizer_sage_forward.9} parent=11 // pred_fallthru
          _
        // Predicated region
        $region21: #{recognizer_sage_forward.9} parent=11 // pred_check
          %p323 = pneg %p213
        $region22: #{recognizer_sage_forward.9} parent=11 // pred_check_branch
          %325 = sbr.rel (%p323) target = $region24
        $region23: #{recognizer_sage_forward.9} parent=11 // pred_region
          _
        $region24: #{recognizer_sage_forward.9} parent=11 // pred_fallthru
          _
        // Predicated region
        $region25: #{recognizer_sage_forward.9} parent=11 // pred_check
          %p326 = pneg %p234
        $region26: #{recognizer_sage_forward.9} parent=11 // pred_check_branch
          %328 = sbr.rel (%p326) target = $region28
        $region27: #{recognizer_sage_forward.9} parent=11 // pred_region
          _
        $region28: #{recognizer_sage_forward.9} parent=11 // pred_fallthru
          _
        // Predicated region
        $region29: #{recognizer_sage_forward.9} parent=11 // pred_check
          %p329 = pneg %p255
        $region30: #{recognizer_sage_forward.9} parent=11 // pred_check_branch
          %331 = sbr.rel (%p329) target = $region32
        $region31: #{recognizer_sage_forward.9} parent=11 // pred_region
          _
        $region32: #{recognizer_sage_forward.9} parent=11 // pred_fallthru
          _
        // Predicated region
        $region33: #{recognizer_sage_forward.9} parent=11 // pred_check
          %p332 = pneg %p276
        $region34: #{recognizer_sage_forward.9} parent=11 // pred_check_branch
          %334 = sbr.rel (%p332) target = $region36
        $region35: #{recognizer_sage_forward.9} parent=11 // pred_region
          _
        $region36: #{recognizer_sage_forward.9} parent=11 // pred_fallthru
          _
      $region12: #{recognizer_sage_forward.9} parent=5 // pred_fallthru
        _
      %p335 = scmp.lt.s32.totalorder %s20, 2
      // Predicated region
      $region37: #{recognizer_sage_forward.9} parent=5 // pred_check
        %p336 = pneg %p335
      $region38: #{recognizer_sage_forward.9} parent=5 // pred_check_branch
        %338 = sbr.rel (%p336) target = $region40
      $region39: #{recognizer_sage_forward.9} parent=5 // pred_region
        // Predicated region
        $region41: #{recognizer_sage_forward.9} parent=39 // pred_check
          %p339 = pneg %p40
        $region42: #{recognizer_sage_forward.9} parent=39 // pred_check_branch
          %341 = sbr.rel (%p339) target = $region44
        $region43: #{recognizer_sage_forward.9} parent=39 // pred_region
          %p342 = scmp.lt.s32.totalorder %s20, 1
          %s343 = scalar_select %p342, %s20, 1
          %s344 = smul.addr %s343, 4
          %s345 = smul.addr %s344, 8
          %s346 = scalar_lea.vmem %s0, %s345
        $region44: #{recognizer_sage_forward.9} parent=39 // pred_fallthru
          _
        // Predicated region
        $region45: #{recognizer_sage_forward.9} parent=39 // pred_check
          %p347 = pneg %p66
        $region46: #{recognizer_sage_forward.9} parent=39 // pred_check_branch
          %349 = sbr.rel (%p347) target = $region48
        $region47: #{recognizer_sage_forward.9} parent=39 // pred_region
          %p350 = scmp.lt.s32.totalorder %s20, 1
          %s351 = scalar_select %p350, %s20, 1
          %s352 = smul.addr %s351, 4
          %s353 = smul.addr %s352, 8
          %s354 = scalar_lea.vmem %s1, %s353
        $region48: #{recognizer_sage_forward.9} parent=39 // pred_fallthru
          _
        // Predicated region
        $region49: #{recognizer_sage_forward.9} parent=39 // pred_check
          %p355 = pneg %p92
        $region50: #{recognizer_sage_forward.9} parent=39 // pred_check_branch
          %357 = sbr.rel (%p355) target = $region52
        $region51: #{recognizer_sage_forward.9} parent=39 // pred_region
          %p358 = scmp.lt.s32.totalorder %s20, 1
          %s359 = scalar_select %p358, %s20, 1
          %s360 = scalar_lea.vmem %s2, %s359
        $region52: #{recognizer_sage_forward.9} parent=39 // pred_fallthru
          _
        // Predicated region
        $region53: #{recognizer_sage_forward.9} parent=39 // pred_check
          %p361 = pneg %p118
        $region54: #{recognizer_sage_forward.9} parent=39 // pred_check_branch
          %363 = sbr.rel (%p361) target = $region56
        $region55: #{recognizer_sage_forward.9} parent=39 // pred_region
          %p364 = scmp.lt.s32.totalorder %s20, 1
          %s365 = scalar_select %p364, %s20, 1
          %s366 = scalar_lea.vmem %s3, %s365
        $region56: #{recognizer_sage_forward.9} parent=39 // pred_fallthru
          _
        // Predicated region
        $region57: #{recognizer_sage_forward.9} parent=39 // pred_check
          %p367 = pneg %p144
        $region58: #{recognizer_sage_forward.9} parent=39 // pred_check_branch
          %369 = sbr.rel (%p367) target = $region60
        $region59: #{recognizer_sage_forward.9} parent=39 // pred_region
          %p370 = scmp.lt.s32.totalorder %s20, 1
          %s371 = scalar_select %p370, %s20, 1
          %s372 = scalar_lea.vmem %s4, %s371
        $region60: #{recognizer_sage_forward.9} parent=39 // pred_fallthru
          _
      $region40: #{recognizer_sage_forward.9} parent=5 // pred_fallthru
        _
      %p373 = scmp.le.s32.totalorder 1, %s20
      %p374 = scmp.lt.s32.totalorder %s20, 3
      %p375 = pnand %p373, %p374
      %p376 = pneg %p375
      // Predicated region
      $region61: #{recognizer_sage_forward.9} parent=5 // pred_check
        _
      $region62: #{recognizer_sage_forward.9} parent=5 // pred_check_branch
        %378 = sbr.rel (%p375) target = $region64
      $region63: #{recognizer_sage_forward.9} parent=5 // pred_region
        %s379 = ssub.s32 %s20, 1
        %p380 = scmp.lt.s32.totalorder %s25, 1
        %s381 = scalar_select %p380, %s25, 1
        %s382 = smul.addr %s381, 4
        %s383 = smul.addr %s382, 8
        %s384 = scalar_lea.vmem %s0, %s383
        %p385 = pneg %p46
        %p386 = pneg %p43
        %p387 = scmp.lt.s32.totalorder %s25, 1
        %s388 = scalar_select %p387, %s25, 1
        %s389 = smul.addr %s388, 4
        %s390 = smul.addr %s389, 8
        %s391 = scalar_lea.vmem %s1, %s390
        %p392 = pneg %p72
        %p393 = pneg %p69
        %p394 = scmp.lt.s32.totalorder %s25, 1
        %s395 = scalar_select %p394, %s25, 1
        %s396 = scalar_lea.vmem %s2, %s395
        %p397 = pneg %p98
        %p398 = pneg %p95
        %p399 = scmp.lt.s32.totalorder %s25, 1
        %s400 = scalar_select %p399, %s25, 1
        %s401 = scalar_lea.vmem %s3, %s400
        %p402 = pneg %p124
        %p403 = pneg %p121
        %p404 = scmp.lt.s32.totalorder %s25, 1
        %s405 = scalar_select %p404, %s25, 1
        %s406 = scalar_lea.vmem %s4, %s405
        %p407 = pneg %p150
        %p408 = pneg %p147
        %p409 = pneg %p171
        %p410 = pneg %p168
        %p411 = pneg %p192
        %p412 = pneg %p189
        %p413 = pneg %p213
        %p414 = pneg %p210
        %p415 = pneg %p234
        %p416 = pneg %p231
        %p417 = pneg %p255
        %p418 = pneg %p252
        %p419 = pneg %p276
        %p420 = pneg %p273
        %p421 = pneg %p302
        %p422 = pneg %p299
        %s423 = sand.u32 %s289, 1
        %s424 = scalar_lea.sflag [#allocation3], %s423
        %s425 = sand.u32 %s289, 1
        %s426 = scalar_lea.vmem [#allocation2], %s425
        %p427 = scmp.lt.s32.totalorder %s25, 1
        %s428 = scalar_select %p427, %s25, 1
        %s429 = smul.addr %s428, 4
        %s430 = smul.addr %s429, 8
        %s431 = scalar_lea.vmem %s0, %s430
        %p432 = scmp.lt.s32.totalorder %s25, 1
        %s433 = scalar_select %p432, %s25, 1
        %s434 = smul.addr %s433, 4
        %s435 = smul.addr %s434, 8
        %s436 = scalar_lea.vmem %s1, %s435
        %p437 = scmp.lt.s32.totalorder %s25, 1
        %s438 = scalar_select %p437, %s25, 1
        %s439 = scalar_lea.vmem %s2, %s438
        %p440 = scmp.lt.s32.totalorder %s25, 1
        %s441 = scalar_select %p440, %s25, 1
        %s442 = scalar_lea.vmem %s3, %s441
        %p443 = scmp.lt.s32.totalorder %s25, 1
        %s444 = scalar_select %p443, %s25, 1
        %s445 = scalar_lea.vmem %s4, %s444
        %v446 = vld [vmem:[%s431] sm:$0xff]
        %v447 = vld [vmem:[%s431 + $0x8] sm:$0xff]
        %v448 = vld [vmem:[%s431 + $0x10] sm:$0xff]
        %v449 = vld [vmem:[%s431 + $0x18] sm:$0xff]
        %v450 = vld [vmem:[%s436] sm:$0xff]
        %v451 = vld [vmem:[%s436 + $0x8] sm:$0xff]
        %v452 = vld [vmem:[%s436 + $0x10] sm:$0xff]
        %v453 = vld [vmem:[%s436 + $0x18] sm:$0xff]
        %455 = vset.pattern.permute.xlu0 0
        %456 = vperm.xlu0 %455, %v450
        %v457 = vpop.permute.xlu0 %456
        %460 = vset.pattern.permute.xlu0 0
        %461 = vperm.xlu0 %460, %v451
        %v462 = vpop.permute.xlu0 %461
        %465 = vset.pattern.permute.xlu0 0
        %466 = vperm.xlu0 %465, %v452
        %v467 = vpop.permute.xlu0 %466
        %470 = vset.pattern.permute.xlu0 0
        %471 = vperm.xlu0 %470, %v453
        %v472 = vpop.permute.xlu0 %471
        %v474 = vmul.f32 %v446, %v457
        %v475 = vmul.f32 %v447, %v462
        %v476 = vmul.f32 %v448, %v467
        %v477 = vmul.f32 %v449, %v472
        %vm478 = vcmp.gt.f32.partialorder %v450, 0.0
        %vm479 = vcmp.gt.f32.partialorder %v451, 0.0
        %vm480 = vcmp.gt.f32.partialorder %v452, 0.0
        %vm481 = vcmp.gt.f32.partialorder %v453, 0.0
        %v482 = vsel %vm478, 1, 0
        %v483 = vsel %vm479, 1, 0
        %v484 = vsel %vm480, 1, 0
        %v485 = vsel %vm481, 1, 0
        %486 = vset.pattern.permute.xlu0 0
        %487 = vperm.xlu0 %486, %v482
        %v488 = vpop.permute.xlu0 %487
        %489 = vset.pattern.permute.xlu0 0
        %490 = vperm.xlu0 %489, %v483
        %v491 = vpop.permute.xlu0 %490
        %492 = vset.pattern.permute.xlu0 0
        %493 = vperm.xlu0 %492, %v484
        %v494 = vpop.permute.xlu0 %493
        %495 = vset.pattern.permute.xlu0 0
        %496 = vperm.xlu0 %495, %v485
        %v497 = vpop.permute.xlu0 %496
        %vm498 = vcmp.eq.s32.totalorder %v488, 1
        %vm499 = vcmp.eq.s32.totalorder %v491, 1
        %vm500 = vcmp.eq.s32.totalorder %v494, 1
        %vm501 = vcmp.eq.s32.totalorder %v497, 1
        %v502 = vsel %vm498, %v446, -1e+30
        %v503 = vsel %vm499, %v447, -1e+30
        %v504 = vsel %vm500, %v448, -1e+30
        %v505 = vsel %vm501, %v449, -1e+30
        %vm506 = vcmask 523264
        %v507 = vsel %vm506, %v502, -inf
        %v508 = vsel %vm506, %v503, -inf
        %v509 = vsel %vm506, %v504, -inf
        %v510 = vsel %vm506, %v505, -inf
        %v511 = vmax.f32 %v507, %v508
        %v512 = vmax.f32 %v509, %v510
        %v513 = vmax.f32 %v511, %v512
        %v514 = vrot.slane %v513, 4
        %v515 = vmax.f32 %v513, %v514
        %v516 = vrot.slane %v515, 2
        %v517 = vmax.f32 %v515, %v516
        %v518 = vrot.slane %v517, 1
        %v519 = vmax.f32 %v517, %v518
        %vm520 = vcmask 7168
        %v521 = vsel %vm520, %v450, 0.0
        %v522 = vsel %vm520, %v451, 0.0
        %v523 = vadd.f32 %v521, %v522
        %v524 = vsel %vm520, %v452, 0.0
        %v525 = vadd.f32 %v523, %v524
        %v526 = vsel %vm520, %v453, 0.0
        %v527 = vadd.f32 %v525, %v526
        %528 = vadd.xlane.f32.xlu0 %v527
        %v529 = vpop.xlane.xlu0 %528
        %v530 = vrot.slane %v529, 4
        %v531 = vadd.f32 %v529, %v530
        %v532 = vrot.slane %v531, 2
        %v533 = vadd.f32 %v531, %v532
        %v534 = vrot.slane %v533, 1
        %v535 = vadd.f32 %v533, %v534
        %s536 = vtos %v535
        %s537 = smax.f32 %s536, 1.0
        %v538 = vstv %s537
        %v539 = vrcp.pop %v538
        %v540 = vmul.f32 %v538, %v539
        %v541 = vsub.f32 1.0, %v540
        %v542 = vmul.f32 %v539, %v541
        %v543 = vadd.f32 %v539, %v542
        %vm544 = vweird.f32 %v538
        %vm545 = vweird.f32 %v539
        %vm546 = vmor %vm544, %vm545
        %v547 = vsel %vm546, %v539, %v543
        %v548 = vand.u32 2147483647, %v538
        %vm549 = vcmp.eq.f32.partialorder %v548, 8.507059e+37
        %v550 = vand.u32 %v538, 2147483648
        %v551 = vor.u32 1.1754944e-38, %v550
        %v552 = vsel %vm549, %v551, %v547
        %s553 = vtos %v552
        %v554 = vsel %vm506, %v474, 0.0
        %v555 = vsel %vm506, %v475, 0.0
        %v556 = vadd.f32 %v554, %v555
        %v557 = vsel %vm506, %v476, 0.0
        %v558 = vadd.f32 %v556, %v557
        %v559 = vsel %vm506, %v477, 0.0
        %v560 = vadd.f32 %v558, %v559
        %v561 = vrot.slane %v560, 4
        %v562 = vadd.f32 %v560, %v561
        %v563 = vrot.slane %v562, 2
        %v564 = vadd.f32 %v562, %v563
        %v565 = vrot.slane %v564, 1
        %v566 = vadd.f32 %v564, %v565
        %v567 = vstv %s553
        %v568 = vmul.f32 %v566, %v567
        %570 = vrot.lane.b32.xlu0 %v568, 64
        %v571 = vpop.permute.xlu0 %570
        %v573 = vsel %vm506, %v519, %v571
        %v574 = vld [vmem:[%s439] sm:$0x1]
        %v575 = vld [vmem:[%s442] sm:$0x1]
        %v576 = vadd.f32 %v574, %v575
        %v577 = vld [vmem:[%s445] sm:$0x1]
        %v578 = vadd.f32 %v576, %v577
        %v579 = vadd.f32 %v578, %v573
        %v580 = vld [vmem:[%s5] sm:$0xff]
        %v581 = vld [vmem:[%s5 + $0x8] sm:$0xff]
        %v582 = vld [vmem:[%s5 + $0x10] sm:$0xff]
        %v583 = vld [vmem:[%s5 + $0x18] sm:$0xff]
        %v584 = vld [vmem:[%s5 + $0x20] sm:$0xff]
        %v585 = vld [vmem:[%s5 + $0x28] sm:$0xff]
        %v586 = vld [vmem:[%s5 + $0x30] sm:$0xff]
        %v587 = vld [vmem:[%s5 + $0x38] sm:$0xff]
        %v588 = vld [vmem:[%s5 + $0x40] sm:$0xff]
        %v589 = vld [vmem:[%s5 + $0x48] sm:$0xff]
        %v590 = vld [vmem:[%s5 + $0x50] sm:$0xff]
        %v591 = vld [vmem:[%s5 + $0x58] sm:$0xff]
        %v592 = vld [vmem:[%s5 + $0x60] sm:$0xff]
        %v593 = vld [vmem:[%s5 + $0x68] sm:$0xff]
        %v594 = vld [vmem:[%s5 + $0x70] sm:$0xff]
        %v595 = vld [vmem:[%s5 + $0x78] sm:$0xff]
        %v596 = vld [vmem:[%s6] sm:$0x1]
        %597 = vmatpush.msra.mxu0 %v595
        %598 = vmatpush.msra.mxu0 %v594
        %599 = vmatpush.msra.mxu0 %v593
        %600 = vmatpush.msra.mxu0 %v592
        %601 = vmatpush.msra.mxu0 %v591
        %602 = vmatpush.msra.mxu0 %v590
        %603 = vmatpush.msra.mxu0 %v589
        %604 = vmatpush.msra.mxu0 %v588
        %605 = vmatpush.msra.mxu0 %v587
        %606 = vmatpush.msra.mxu0 %v586
        %607 = vmatpush.msra.mxu0 %v585
        %608 = vmatpush.msra.mxu0 %v584
        %609 = vmatpush.msra.mxu0 %v583
        %610 = vmatpush.msra.mxu0 %v582
        %611 = vmatpush.msra.mxu0 %v581
        %612 = vmatpush.msra.mxu0 %v580
        %613 = vmatmul.f32.gmra.mxu0 %v579
        %v614 = vpop.f32.mrf.mxu0
        %v615 = vadd.f32 %v596, %v614
        %616 = vdwg.mxu0
        %v617 = vmul.f32 %v615, 0.5
        %v618 = vmul.f32 %v615, 0.044715
        %v619 = vmul.f32 %v618, %v615
        %v620 = vmul.f32 %v619, %v615
        %v621 = vadd.f32 %v615, %v620
        %v622 = vmul.f32 %v621, 0.7978846
        %v623 = vtanh.pop %v622
        %v624 = vadd.f32 %v623, 1.0
        %v625 = vmul.f32 %v617, %v624
        %v626 = vld [vmem:[%s7] sm:$0xff]
        %v627 = vld [vmem:[%s7 + $0x8] sm:$0xff]
        %v628 = vld [vmem:[%s7 + $0x10] sm:$0xff]
        %v629 = vld [vmem:[%s7 + $0x18] sm:$0xff]
        %v630 = vld [vmem:[%s7 + $0x20] sm:$0xff]
        %v631 = vld [vmem:[%s7 + $0x28] sm:$0xff]
        %v632 = vld [vmem:[%s7 + $0x30] sm:$0xff]
        %v633 = vld [vmem:[%s7 + $0x38] sm:$0xff]
        %v634 = vld [vmem:[%s8] sm:$0x1]
        %v636 = vsel %vm506, %v625, 0
        %638 = vmatpush.msra.mxu0 0.0
        %639 = vmatpush.msra.mxu0 0.0
        %640 = vmatpush.msra.mxu0 0.0
        %641 = vmatpush.msra.mxu0 0.0
        %642 = vmatpush.msra.mxu0 0.0
        %643 = vmatpush.msra.mxu0 0.0
        %644 = vmatpush.msra.mxu0 0.0
        %645 = vmatpush.msra.mxu0 0.0
        %646 = vmatpush.msra.mxu0 %v633
        %647 = vmatpush.msra.mxu0 %v632
        %648 = vmatpush.msra.mxu0 %v631
        %649 = vmatpush.msra.mxu0 %v630
        %650 = vmatpush.msra.mxu0 %v629
        %651 = vmatpush.msra.mxu0 %v628
        %652 = vmatpush.msra.mxu0 %v627
        %653 = vmatpush.msra.mxu0 %v626
        %654 = vmatmul.f32.gmra.mxu0 %v636
        %v655 = vpop.f32.mrf.mxu0
        %v656 = vadd.f32 %v634, %v655
        %657 = vdwg.mxu0
        %v658 = vmul.f32 %v656, 0.5
        %v659 = vmul.f32 %v656, 0.044715
        %v660 = vmul.f32 %v659, %v656
        %v661 = vmul.f32 %v660, %v656
        %v662 = vadd.f32 %v656, %v661
        %v663 = vmul.f32 %v662, 0.7978846
        %v664 = vtanh.pop %v663
        %v665 = vadd.f32 %v664, 1.0
        %v666 = vmul.f32 %v658, %v665
        %v667 = vld [vmem:[%s9] sm:$0xff]
        %v668 = vld [vmem:[%s9 + $0x8] sm:$0xff]
        %v669 = vld [vmem:[%s9 + $0x10] sm:$0xff]
        %v670 = vld [vmem:[%s9 + $0x18] sm:$0xff]
        %v671 = vld [vmem:[%s9 + $0x20] sm:$0xff]
        %v672 = vld [vmem:[%s9 + $0x28] sm:$0xff]
        %v673 = vld [vmem:[%s9 + $0x30] sm:$0xff]
        %v674 = vld [vmem:[%s9 + $0x38] sm:$0xff]
        %v675 = vld [vmem:[%s10] sm:$0x1]
        %v677 = vsel %vm506, %v666, 0
        %679 = vmatpush.msra.mxu0 0.0
        %680 = vmatpush.msra.mxu0 0.0
        %681 = vmatpush.msra.mxu0 0.0
        %682 = vmatpush.msra.mxu0 0.0
        %683 = vmatpush.msra.mxu0 0.0
        %684 = vmatpush.msra.mxu0 0.0
        %685 = vmatpush.msra.mxu0 0.0
        %686 = vmatpush.msra.mxu0 0.0
        %687 = vmatpush.msra.mxu0 %v674
        %688 = vmatpush.msra.mxu0 %v673
        %689 = vmatpush.msra.mxu0 %v672
        %690 = vmatpush.msra.mxu0 %v671
        %691 = vmatpush.msra.mxu0 %v670
        %692 = vmatpush.msra.mxu0 %v669
        %693 = vmatpush.msra.mxu0 %v668
        %694 = vmatpush.msra.mxu0 %v667
        %695 = vmatmul.f32.gmra.mxu0 %v677
        %v696 = vpop.f32.mrf.mxu0
        %v697 = vadd.f32 %v675, %v696
        %698 = vdwg.mxu0
        %vm699 = vcmask 16384
        %700 = vst.msk [vmem:[%s426] sm:$0x1] %vm699, %v697
        %s701 = sand.u32 %s289, 1
        %s702 = scalar_lea.sflag [#allocation3], %s701
        %s703 = sand.u32 %s289, 1
        %s704 = scalar_lea.vmem [#allocation2], %s703
        // Predicated region
        $region65: #{recognizer_sage_forward.9} parent=63 // pred_check
          %p705 = pneg %p299
        $region66: #{recognizer_sage_forward.9} parent=63 // pred_check_branch
          %707 = sbr.rel (%p705) target = $region68
        $region67: #{recognizer_sage_forward.9} parent=63 // pred_region
          %709 = vsyncadd %s702, 0
          %s710 = scalar_lea.hbm %s11, %s25
          %s712 = sshll.u32 %s704, 4
          %s713 = int_to_ptr.vmem [resolvable:$true] %s712
          %s714 = sshll.u32 %s710, 4
          %s715 = int_to_ptr.hbm [resolvable:$true] %s714
          %717 = dma.vmem_to_hbm [thread:$0]  %s713, 16, %s715, %s702
        $region68: #{recognizer_sage_forward.9} parent=63 // pred_fallthru
          _
      $region64: #{recognizer_sage_forward.9} parent=5 // pred_fallthru
        _
      %p718 = scmp.le.s32.totalorder 2, %s20
      // Predicated region
      $region69: #{recognizer_sage_forward.9} parent=5 // pred_check
        %p719 = pneg %p718
      $region70: #{recognizer_sage_forward.9} parent=5 // pred_check_branch
        %721 = sbr.rel (%p719) target = $region72
      $region71: #{recognizer_sage_forward.9} parent=5 // pred_region
        %s722 = ssub.s32 %s20, 2
        // Predicated region
        $region73: #{recognizer_sage_forward.9} parent=71 // pred_check
          %p723 = pneg %p305
        $region74: #{recognizer_sage_forward.9} parent=71 // pred_check_branch
          %725 = sbr.rel (%p723) target = $region76
        $region75: #{recognizer_sage_forward.9} parent=71 // pred_region
          %s726 = sand.u32 %s290, 1
          %s727 = scalar_lea.sflag [#allocation3], %s726
          %s728 = sand.u32 %s290, 1
          %s729 = scalar_lea.vmem [#allocation2], %s728
          %731 = dma.done %s727, 16
        $region76: #{recognizer_sage_forward.9} parent=71 // pred_fallthru
          _
      $region72: #{recognizer_sage_forward.9} parent=5 // pred_fallthru
        _
    $region6: #{recognizer_sage_forward.9} parent=1 // loop_footer
      %s24 = sadd.s32 1, %s20
    $region7: #{recognizer_sage_forward.9} parent=1 // loop_footer_branch
      %19 = sbr.rel target = $region3
    $region8: #{recognizer_sage_forward.9} parent=1 // loop_exit
      _
    %732 = vsyncpa [#allocation3], 1
    %s733 = scalar_lea.sflag [#allocation3], 1
    %734 = vsyncpa %s733, 1

</llo_original>
